<compile_context>
chip_gen: v6e
topology: v6e:2x2x1
jax: 0.10.0
libtpu: 0.0.40
codegen_flags: <defaults>
</compile_context>

<pallas_src>
import jax
import jax.numpy as jnp
from jax import lax
from jax.experimental import pallas as pl
from jax.experimental.pallas import tpu as pltpu

EPS = 1e-5


# ---------------------------------------------------------------------------
# in-kernel helpers
# ---------------------------------------------------------------------------
def _store_padded(pad_scr, y):
    """Write y into the interior of pad_scr; zero ONLY the 1-px halo."""
    b, Hp, Wp, C = pad_scr.shape
    H, W = Hp - 2, Wp - 2
    zrow = jnp.zeros((b, 1, Wp, C), jnp.float32)
    zcol = jnp.zeros((b, H, 1, C), jnp.float32)
    pad_scr[:, 0:1, :, :] = zrow
    pad_scr[:, H + 1:H + 2, :, :] = zrow
    pad_scr[:, 1:H + 1, 0:1, :] = zcol
    pad_scr[:, 1:H + 1, W + 1:W + 2, :] = zcol
    pad_scr[:, 1:H + 1, 1:W + 1, :] = y


def _conv3x3_wide(pad_scr, w_ref):
    """3x3 / stride-1 conv as ONE wide MXU matmul (im2col, K = 9*Cin)."""
    b, Hp, Wp, Cin = pad_scr.shape
    H, W = Hp - 2, Wp - 2
    patches = jnp.concatenate(
        [pad_scr[:, kh:kh + H, kw:kw + W, :]
         for kh in range(3) for kw in range(3)],
        axis=-1).reshape(b * H * W, 9 * Cin)
    return jnp.dot(patches, w_ref[...], preferred_element_type=jnp.float32)


def _partial_stats(acc):
    """Per-channel (sum, sum-of-squares) over this tile -> (1, 2, C)."""
    s = jnp.sum(acc, axis=0, keepdims=True)
    ss = jnp.sum(acc * acc, axis=0, keepdims=True)
    return jnp.concatenate([s, ss], axis=0)[None]


# ---------------------------------------------------------------------------
# kernels (one grid step == one batch tile)
# ---------------------------------------------------------------------------
def conv1_stats_kernel(x_ref, w_ref, pre_ref, stat_ref, pad_scr):
    b, H, W, _ = x_ref.shape
    Cout = pre_ref.shape[-1]
    _store_padded(pad_scr, x_ref[...])
    acc = _conv3x3_wide(pad_scr, w_ref)
    pre_ref[...] = acc.reshape(b, H, W, Cout)
    stat_ref[...] = _partial_stats(acc)


def bn_relu_conv2_stats_kernel(pre1_ref, scale_ref, shift_ref, w_ref,
                               pre2_ref, stat_ref, pad_scr):
    b, H, W, _ = pre1_ref.shape
    Cout = pre2_ref.shape[-1]
    y = jnp.maximum(pre1_ref[...] * scale_ref[...] + shift_ref[...], 0.0)
    _store_padded(pad_scr, y)
    acc = _conv3x3_wide(pad_scr, w_ref)
    pre2_ref[...] = acc.reshape(b, H, W, Cout)
    stat_ref[...] = _partial_stats(acc)


def bn_add_relu_kernel(pre2_ref, res_ref, scale_ref, shift_ref, out_ref):
    out_ref[...] = jnp.maximum(
        pre2_ref[...] * scale_ref[...] + shift_ref[...] + res_ref[...], 0.0)


# ---------------------------------------------------------------------------
# host-side glue
# ---------------------------------------------------------------------------
def _bn_fold(partials, gamma, beta, count):
    """Reduce per-tile (sum, sumsq) partials -> folded per-channel scale/shift."""
    s = jnp.sum(partials, axis=0)                       # (2, C)
    mu = s[0] / count
    # TODO(synk): E[x^2]-mu^2 can cancel at very large N*H*W; use a centered
    # second reduction pass if that regime matters.
    var = jnp.maximum(s[1] / count - mu * mu, 0.0)
    scale = gamma.astype(jnp.float32) * lax.rsqrt(var + EPS)
    shift = beta.astype(jnp.float32) - mu * scale
    C = scale.shape[0]
    return scale.reshape(1, C), shift.reshape(1, C)


def basic_block_nhwc(x, params, *, batch_tile=1):
    """x: (N, H, W, C) float32.  stride=1 / downsample=None BasicBlock."""
    w1, w2, g1, b1, g2, b2 = params
    N, H, W, C = x.shape
    Cout = w1.shape[-1]
    assert C == w1.shape[2] and Cout == C, \
        "stride=1 / downsample=None path requires Cin == Cout"
    bt = batch_tile
    assert N % bt == 0
    n_tiles = N // bt
    NHW = float(N * H * W)

    x = x.astype(jnp.float32)
    # im2col weight layout: (kh, kw, Cin) flattened -> contraction axis.
    w1r = w1.reshape(9 * C, Cout).astype(jnp.float32)
    w2r = w2.reshape(9 * Cout, Cout).astype(jnp.float32)

    cparams = pltpu.CompilerParams(
        dimension_semantics=("parallel",),          # v7x megacore sharding
        vmem_limit_bytes=48 * 1024 * 1024)          # > 16/32 MiB defaults,
                                                    # < v7x 64 MiB physical

    act_in = pl.BlockSpec((bt, H, W, C), lambda i: (i, 0, 0, 0))
    act_out = pl.BlockSpec((bt, H, W, Cout), lambda i: (i, 0, 0, 0))
    stat_spec = pl.BlockSpec((1, 2, Cout), lambda i: (i, 0, 0))
    vec_spec = pl.BlockSpec((1, Cout), lambda i: (0, 0))

    # -------- pass 1: conv1 + per-tile BN1 partial stats --------
    pre1, st1 = pl.pallas_call(
        conv1_stats_kernel,
        out_shape=(jax.ShapeDtypeStruct((N, H, W, Cout), jnp.float32),
                   jax.ShapeDtypeStruct((n_tiles, 2, Cout), jnp.float32)),
        grid=(n_tiles,),
        in_specs=[act_in, pl.BlockSpec((9 * C, Cout), lambda i: (0, 0))],
        out_specs=(act_out, stat_spec),
        scratch_shapes=[pltpu.VMEM((bt, H + 2, W + 2, C), jnp.float32)],
        compiler_params=cparams,
    )(x, w1r)

    scale1, shift1 = _bn_fold(st1, g1, b1, NHW)

    # -------- pass 2: BN1 + ReLU + conv2 + per-tile BN2 partial stats --------
    pre2, st2 = pl.pallas_call(
        bn_relu_conv2_stats_kernel,
        out_shape=(jax.ShapeDtypeStruct((N, H, W, Cout), jnp.float32),
                   jax.ShapeDtypeStruct((n_tiles, 2, Cout), jnp.float32)),
        grid=(n_tiles,),
        in_specs=[act_out, vec_spec, vec_spec,
                  pl.BlockSpec((9 * Cout, Cout), lambda i: (0, 0))],
        out_specs=(act_out, stat_spec),
        scratch_shapes=[pltpu.VMEM((bt, H + 2, W + 2, Cout), jnp.float32)],
        compiler_params=cparams,
    )(pre1, scale1, shift1, w2r)

    scale2, shift2 = _bn_fold(st2, g2, b2, NHW)

    # -------- pass 3: BN2 + residual + ReLU --------
    out = pl.pallas_call(
        bn_add_relu_kernel,
        out_shape=jax.ShapeDtypeStruct((N, H, W, Cout), jnp.float32),
        grid=(n_tiles,),
        in_specs=[act_out, act_in, vec_spec, vec_spec],
        out_specs=act_out,
        compiler_params=cparams,
    )(pre2, x, scale2, shift2)

    return out


def basic_block(x_nchw, params, *, batch_tile=1):
    """PyTorch-layout entry point: (N, C, H, W) -> (N, C, H, W).

    For chained BasicBlocks keep the whole network in NHWC and call
    basic_block_nhwc directly to avoid the per-block transposes."""
    x = jnp.transpose(x_nchw, (0, 2, 3, 1))
    out = basic_block_nhwc(x, params, batch_tile=batch_tile)
    return jnp.transpose(out, (0, 3, 1, 2))


# ---------------------------------------------------------------------------
# pure-JAX reference (lax.conv) for correctness check
# ---------------------------------------------------------------------------
def ref_basic_block(x_nchw, params):
    w1, w2, g1, b1, g2, b2 = params
    x = jnp.transpose(x_nchw, (0, 2, 3, 1))
    dn = lax.conv_dimension_numbers(x.shape, w1.shape, ('NHWC', 'HWIO', 'NHWC'))

    def bn(z, g, b):
        mu = jnp.mean(z, axis=(0, 1, 2), keepdims=True)
        var = jnp.mean((z - mu) ** 2, axis=(0, 1, 2), keepdims=True)
        return g * (z - mu) * lax.rsqrt(var + EPS) + b

    o = lax.conv_general_dilated(x, w1, (1, 1), 'SAME', dimension_numbers=dn)
    o = jnp.maximum(bn(o, g1, b1), 0.0)
    o = lax.conv_general_dilated(o, w2, (1, 1), 'SAME', dimension_numbers=dn)
    o = jnp.maximum(bn(o, g2, b2) + x, 0.0)
    return jnp.transpose(o, (0, 3, 1, 2))


if __name__ == "__main__":
    key = jax.random.PRNGKey(0)
    ks = jax.random.split(key, 7)

    N, C, H, W = 2, 4, 16, 16          # num_in_planes == num_out_planes == 4
    x = jax.random.normal(ks[0], (N, C, H, W), jnp.float32)

    # conv weights in HWIO layout (converted-from-OIHW); BN affine params.
    w1 = jax.random.normal(ks[1], (3, 3, C, C), jnp.float32) * 0.1
    w2 = jax.random.normal(ks[2], (3, 3, C, C), jnp.float32) * 0.1
    g1 = 1.0 + 0.1 * jax.random.normal(ks[3], (C,), jnp.float32)
    b1 = 0.1 * jax.random.normal(ks[4], (C,), jnp.float32)
    g2 = 1.0 + 0.1 * jax.random.normal(ks[5], (C,), jnp.float32)
    b2 = 0.1 * jax.random.normal(ks[6], (C,), jnp.float32)
    params = (w1, w2, g1, b1, g2, b2)

    fwd = jax.jit(basic_block)
    out = jax.block_until_ready(fwd(x, params))
    ref = jax.block_until_ready(ref_basic_block(x, params))

    assert out.shape == (N, C, H, W)
    err = float(jnp.max(jnp.abs(out - ref)))
    assert jnp.allclose(out, ref, atol=1e-4, rtol=1e-4), f"max abs err = {err}"
    print("KERNEL_OK")
</pallas_src>

<mosaic_0001>
module attributes {stable_mosaic.version = 11 : i64} {
  func.func @conv1_stats_kernel(%arg0: i32, %arg1: memref<1x16x16x4xf32, #tpu.memory_space<vmem>>, %arg2: memref<36x4xf32, #tpu.memory_space<vmem>>, %arg3: memref<1x16x16x4xf32, #tpu.memory_space<vmem>>, %arg4: memref<1x2x4xf32, #tpu.memory_space<vmem>>, %arg5: memref<1x18x18x4xf32, #tpu.memory_space<vmem>>) attributes {dimension_semantics = [#tpu.dimension_semantics<parallel>], iteration_bounds = array<i64: 2>, scalar_prefetch = 0 : i64, scratch_operands = 1 : i64, tpu.core_type = #tpu.core_type<tc>, window_params = [{transform_indices = @transform_0, window_bounds = array<i64: 1, 16, 16, 4>}, {pipeline_mode = #tpu.pipeline_mode<synchronous>, transform_indices = @transform_1, window_bounds = array<i64: 36, 4>}, {transform_indices = @transform_2, window_bounds = array<i64: 1, 16, 16, 4>}, {transform_indices = @transform_3, window_bounds = array<i64: 1, 2, 4>}]} {
    %c0 = arith.constant 0 : index
    %c0_0 = arith.constant 0 : index
    %c0_1 = arith.constant 0 : index
    %c0_2 = arith.constant 0 : index
    %0 = vector.load %arg1[%c0, %c0_0, %c0_1, %c0_2] : memref<1x16x16x4xf32, #tpu.memory_space<vmem>>, vector<1x16x16x4xf32>
    %cst = arith.constant 0.000000e+00 : f32
    %1 = vector.broadcast %cst : f32 to vector<1x1x18x4xf32>
    %cst_3 = arith.constant 0.000000e+00 : f32
    %2 = vector.broadcast %cst_3 : f32 to vector<1x16x1x4xf32>
    %c0_4 = arith.constant 0 : index
    %c0_5 = arith.constant 0 : index
    %c0_6 = arith.constant 0 : index
    %c0_7 = arith.constant 0 : index
    %3 = vector.load %arg5[%c0_4, %c0_5, %c0_6, %c0_7] : memref<1x18x18x4xf32, #tpu.memory_space<vmem>>, vector<1x1x18x4xf32>
    tpu.vector_store %arg5[%c0_4, %c0_5, %c0_6, %c0_7], %1 {strides = array<i32>} : memref<1x18x18x4xf32, #tpu.memory_space<vmem>>, vector<1x1x18x4xf32>,
    %c0_8 = arith.constant 0 : index
    %c17 = arith.constant 17 : index
    %c0_9 = arith.constant 0 : index
    %c0_10 = arith.constant 0 : index
    %4 = vector.load %arg5[%c0_8, %c17, %c0_9, %c0_10] : memref<1x18x18x4xf32, #tpu.memory_space<vmem>>, vector<1x1x18x4xf32>
    tpu.vector_store %arg5[%c0_8, %c17, %c0_9, %c0_10], %1 {strides = array<i32>} : memref<1x18x18x4xf32, #tpu.memory_space<vmem>>, vector<1x1x18x4xf32>,
    %c0_11 = arith.constant 0 : index
    %c1 = arith.constant 1 : index
    %c0_12 = arith.constant 0 : index
    %c0_13 = arith.constant 0 : index
    %5 = vector.load %arg5[%c0_11, %c1, %c0_12, %c0_13] : memref<1x18x18x4xf32, #tpu.memory_space<vmem>>, vector<1x16x1x4xf32>
    tpu.vector_store %arg5[%c0_11, %c1, %c0_12, %c0_13], %2 {strides = array<i32>} : memref<1x18x18x4xf32, #tpu.memory_space<vmem>>, vector<1x16x1x4xf32>,
    %c0_14 = arith.constant 0 : index
    %c1_15 = arith.constant 1 : index
    %c17_16 = arith.constant 17 : index
    %c0_17 = arith.constant 0 : index
    %6 = vector.load %arg5[%c0_14, %c1_15, %c17_16, %c0_17] : memref<1x18x18x4xf32, #tpu.memory_space<vmem>>, vector<1x16x1x4xf32>
    tpu.vector_store %arg5[%c0_14, %c1_15, %c17_16, %c0_17], %2 {strides = array<i32>} : memref<1x18x18x4xf32, #tpu.memory_space<vmem>>, vector<1x16x1x4xf32>,
    %c0_18 = arith.constant 0 : index
    %c1_19 = arith.constant 1 : index
    %c1_20 = arith.constant 1 : index
    %c0_21 = arith.constant 0 : index
    %7 = vector.load %arg5[%c0_18, %c1_19, %c1_20, %c0_21] : memref<1x18x18x4xf32, #tpu.memory_space<vmem>>, vector<1x16x16x4xf32>
    tpu.vector_store %arg5[%c0_18, %c1_19, %c1_20, %c0_21], %0 {strides = array<i32>} : memref<1x18x18x4xf32, #tpu.memory_space<vmem>>, vector<1x16x16x4xf32>,
    %c0_22 = arith.constant 0 : index
    %c0_23 = arith.constant 0 : index
    %c0_24 = arith.constant 0 : index
    %c0_25 = arith.constant 0 : index
    %8 = vector.load %arg5[%c0_22, %c0_23, %c0_24, %c0_25] : memref<1x18x18x4xf32, #tpu.memory_space<vmem>>, vector<1x16x16x4xf32>
    %c0_26 = arith.constant 0 : index
    %c0_27 = arith.constant 0 : index
    %c1_28 = arith.constant 1 : index
    %c0_29 = arith.constant 0 : index
    %9 = vector.load %arg5[%c0_26, %c0_27, %c1_28, %c0_29] : memref<1x18x18x4xf32, #tpu.memory_space<vmem>>, vector<1x16x16x4xf32>
    %c0_30 = arith.constant 0 : index
    %c0_31 = arith.constant 0 : index
    %c2 = arith.constant 2 : index
    %c0_32 = arith.constant 0 : index
    %10 = vector.load %arg5[%c0_30, %c0_31, %c2, %c0_32] : memref<1x18x18x4xf32, #tpu.memory_space<vmem>>, vector<1x16x16x4xf32>
    %c0_33 = arith.constant 0 : index
    %c1_34 = arith.constant 1 : index
    %c0_35 = arith.constant 0 : index
    %c0_36 = arith.constant 0 : index
    %11 = vector.load %arg5[%c0_33, %c1_34, %c0_35, %c0_36] : memref<1x18x18x4xf32, #tpu.memory_space<vmem>>, vector<1x16x16x4xf32>
    %c0_37 = arith.constant 0 : index
    %c1_38 = arith.constant 1 : index
    %c1_39 = arith.constant 1 : index
    %c0_40 = arith.constant 0 : index
    %12 = vector.load %arg5[%c0_37, %c1_38, %c1_39, %c0_40] : memref<1x18x18x4xf32, #tpu.memory_space<vmem>>, vector<1x16x16x4xf32>
    %c0_41 = arith.constant 0 : index
    %c1_42 = arith.constant 1 : index
    %c2_43 = arith.constant 2 : index
    %c0_44 = arith.constant 0 : index
    %13 = vector.load %arg5[%c0_41, %c1_42, %c2_43, %c0_44] : memref<1x18x18x4xf32, #tpu.memory_space<vmem>>, vector<1x16x16x4xf32>
    %c0_45 = arith.constant 0 : index
    %c2_46 = arith.constant 2 : index
    %c0_47 = arith.constant 0 : index
    %c0_48 = arith.constant 0 : index
    %14 = vector.load %arg5[%c0_45, %c2_46, %c0_47, %c0_48] : memref<1x18x18x4xf32, #tpu.memory_space<vmem>>, vector<1x16x16x4xf32>
    %c0_49 = arith.constant 0 : index
    %c2_50 = arith.constant 2 : index
    %c1_51 = arith.constant 1 : index
    %c0_52 = arith.constant 0 : index
    %15 = vector.load %arg5[%c0_49, %c2_50, %c1_51, %c0_52] : memref<1x18x18x4xf32, #tpu.memory_space<vmem>>, vector<1x16x16x4xf32>
    %c0_53 = arith.constant 0 : index
    %c2_54 = arith.constant 2 : index
    %c2_55 = arith.constant 2 : index
    %c0_56 = arith.constant 0 : index
    %16 = vector.load %arg5[%c0_53, %c2_54, %c2_55, %c0_56] : memref<1x18x18x4xf32, #tpu.memory_space<vmem>>, vector<1x16x16x4xf32>
    %17 = tpu.concatenate %8, %9, %10, %11, %12, %13, %14, %15, %16 in 3 : vector<1x16x16x4xf32>, vector<1x16x16x4xf32>, vector<1x16x16x4xf32>, vector<1x16x16x4xf32>, vector<1x16x16x4xf32>, vector<1x16x16x4xf32>, vector<1x16x16x4xf32>, vector<1x16x16x4xf32>, vector<1x16x16x4xf32> -> vector<1x16x16x36xf32>
    %18 = vector.shape_cast %17 : vector<1x16x16x36xf32> to vector<256x36xf32>
    %c0_57 = arith.constant 0 : index
    %c0_58 = arith.constant 0 : index
    %19 = vector.load %arg2[%c0_57, %c0_58] : memref<36x4xf32, #tpu.memory_space<vmem>>, vector<36x4xf32>
    %cst_59 = arith.constant dense<0.000000e+00> : vector<256x4xf32>
    %20 = tpu.matmul %18, %19, %cst_59 {dimension_numbers = #tpu.dot_dimension_numbers<[1], [0], [0], [1], [0, 0, 1, 1], [], []>} : vector<256x36xf32>, vector<36x4xf32>, vector<256x4xf32> -> vector<256x4xf32>
    %21 = vector.shape_cast %20 : vector<256x4xf32> to vector<1x16x16x4xf32>
    %c0_60 = arith.constant 0 : index
    %c0_61 = arith.constant 0 : index
    %c0_62 = arith.constant 0 : index
    %c0_63 = arith.constant 0 : index
    %22 = vector.load %arg3[%c0_60, %c0_61, %c0_62, %c0_63] : memref<1x16x16x4xf32, #tpu.memory_space<vmem>>, vector<1x16x16x4xf32>
    tpu.vector_store %arg3[%c0_60, %c0_61, %c0_62, %c0_63], %21 {strides = array<i32>} : memref<1x16x16x4xf32, #tpu.memory_space<vmem>>, vector<1x16x16x4xf32>,
    %cst_64 = arith.constant dense<0.000000e+00> : vector<4xf32>
    %23 = vector.multi_reduction <add>, %20, %cst_64 [0] : vector<256x4xf32> to vector<4xf32>
    %24 = vector.shape_cast %23 : vector<4xf32> to vector<1x4xf32>
    %25 = arith.mulf %20, %20 : vector<256x4xf32>
    %cst_65 = arith.constant dense<0.000000e+00> : vector<4xf32>
    %26 = vector.multi_reduction <add>, %25, %cst_65 [0] : vector<256x4xf32> to vector<4xf32>
    %27 = vector.shape_cast %26 : vector<4xf32> to vector<1x4xf32>
    %28 = tpu.concatenate %24, %27 in 0 : vector<1x4xf32>, vector<1x4xf32> -> vector<2x4xf32>
    %29 = vector.shape_cast %28 : vector<2x4xf32> to vector<1x2x4xf32>
    %c0_66 = arith.constant 0 : index
    %c0_67 = arith.constant 0 : index
    %c0_68 = arith.constant 0 : index
    %30 = vector.load %arg4[%c0_66, %c0_67, %c0_68] : memref<1x2x4xf32, #tpu.memory_space<vmem>>, vector<1x2x4xf32>
    tpu.vector_store %arg4[%c0_66, %c0_67, %c0_68], %29 {strides = array<i32>} : memref<1x2x4xf32, #tpu.memory_space<vmem>>, vector<1x2x4xf32>,
    return
  }
  func.func @transform_0(%arg0: i32) -> (i32, i32, i32, i32) {
    %c0_i32 = arith.constant 0 : i32
    %c0_i32_0 = arith.constant 0 : i32
    %c0_i32_1 = arith.constant 0 : i32
    %c0_i32_2 = arith.constant 0 : i32
    return %arg0, %c0_i32, %c0_i32_0, %c0_i32_1 : i32, i32, i32, i32
  }
  func.func @transform_1(%arg0: i32) -> (i32, i32) {
    %c0_i32 = arith.constant 0 : i32
    %c0_i32_0 = arith.constant 0 : i32
    %c0_i32_1 = arith.constant 0 : i32
    return %c0_i32, %c0_i32_0 : i32, i32
  }
  func.func @transform_2(%arg0: i32) -> (i32, i32, i32, i32) {
    %c0_i32 = arith.constant 0 : i32
    %c0_i32_0 = arith.constant 0 : i32
    %c0_i32_1 = arith.constant 0 : i32
    %c0_i32_2 = arith.constant 0 : i32
    return %arg0, %c0_i32, %c0_i32_0, %c0_i32_1 : i32, i32, i32, i32
  }
  func.func @transform_3(%arg0: i32) -> (i32, i32, i32) {
    %c0_i32 = arith.constant 0 : i32
    %c0_i32_0 = arith.constant 0 : i32
    %c0_i32_1 = arith.constant 0 : i32
    return %arg0, %c0_i32, %c0_i32_0 : i32, i32, i32
  }
}

module attributes {stable_mosaic.version = 11 : i64} {
  func.func @bn_add_relu_kernel(%arg0: i32, %arg1: memref<1x16x16x4xf32, #tpu.memory_space<vmem>>, %arg2: memref<1x16x16x4xf32, #tpu.memory_space<vmem>>, %arg3: memref<1x4xf32, #tpu.memory_space<vmem>>, %arg4: memref<1x4xf32, #tpu.memory_space<vmem>>, %arg5: memref<1x16x16x4xf32, #tpu.memory_space<vmem>>) attributes {dimension_semantics = [#tpu.dimension_semantics<parallel>], iteration_bounds = array<i64: 2>, scalar_prefetch = 0 : i64, scratch_operands = 0 : i64, tpu.core_type = #tpu.core_type<tc>, window_params = [{transform_indices = @transform_0, window_bounds = array<i64: 1, 16, 16, 4>}, {transform_indices = @transform_1, window_bounds = array<i64: 1, 16, 16, 4>}, {pipeline_mode = #tpu.pipeline_mode<synchronous>, transform_indices = @transform_2, window_bounds = array<i64: 1, 4>}, {pipeline_mode = #tpu.pipeline_mode<synchronous>, transform_indices = @transform_3, window_bounds = array<i64: 1, 4>}, {transform_indices = @transform_4, window_bounds = array<i64: 1, 16, 16, 4>}]} {
    %c0 = arith.constant 0 : index
    %c0_0 = arith.constant 0 : index
    %c0_1 = arith.constant 0 : index
    %c0_2 = arith.constant 0 : index
    %0 = vector.load %arg1[%c0, %c0_0, %c0_1, %c0_2] : memref<1x16x16x4xf32, #tpu.memory_space<vmem>>, vector<1x16x16x4xf32>
    %c0_3 = arith.constant 0 : index
    %c0_4 = arith.constant 0 : index
    %1 = vector.load %arg3[%c0_3, %c0_4] : memref<1x4xf32, #tpu.memory_space<vmem>>, vector<1x4xf32>
    %2 = vector.shape_cast %1 : vector<1x4xf32> to vector<1x1x1x4xf32>
    %3 = vector.broadcast %2 : vector<1x1x1x4xf32> to vector<1x16x16x4xf32>
    %4 = arith.mulf %0, %3 : vector<1x16x16x4xf32>
    %c0_5 = arith.constant 0 : index
    %c0_6 = arith.constant 0 : index
    %5 = vector.load %arg4[%c0_5, %c0_6] : memref<1x4xf32, #tpu.memory_space<vmem>>, vector<1x4xf32>
    %6 = vector.shape_cast %5 : vector<1x4xf32> to vector<1x1x1x4xf32>
    %7 = vector.broadcast %6 : vector<1x1x1x4xf32> to vector<1x16x16x4xf32>
    %8 = arith.addf %4, %7 : vector<1x16x16x4xf32>
    %c0_7 = arith.constant 0 : index
    %c0_8 = arith.constant 0 : index
    %c0_9 = arith.constant 0 : index
    %c0_10 = arith.constant 0 : index
    %9 = vector.load %arg2[%c0_7, %c0_8, %c0_9, %c0_10] : memref<1x16x16x4xf32, #tpu.memory_space<vmem>>, vector<1x16x16x4xf32>
    %10 = arith.addf %8, %9 : vector<1x16x16x4xf32>
    %cst = arith.constant 0.000000e+00 : f32
    %11 = vector.broadcast %cst : f32 to vector<1x16x16x4xf32>
    %12 = arith.maximumf %10, %11 : vector<1x16x16x4xf32>
    %c0_11 = arith.constant 0 : index
    %c0_12 = arith.constant 0 : index
    %c0_13 = arith.constant 0 : index
    %c0_14 = arith.constant 0 : index
    %13 = vector.load %arg5[%c0_11, %c0_12, %c0_13, %c0_14] : memref<1x16x16x4xf32, #tpu.memory_space<vmem>>, vector<1x16x16x4xf32>
    tpu.vector_store %arg5[%c0_11, %c0_12, %c0_13, %c0_14], %12 {strides = array<i32>} : memref<1x16x16x4xf32, #tpu.memory_space<vmem>>, vector<1x16x16x4xf32>,
    return
  }
  func.func @transform_0(%arg0: i32) -> (i32, i32, i32, i32) {
    %c0_i32 = arith.constant 0 : i32
    %c0_i32_0 = arith.constant 0 : i32
    %c0_i32_1 = arith.constant 0 : i32
    %c0_i32_2 = arith.constant 0 : i32
    return %arg0, %c0_i32, %c0_i32_0, %c0_i32_1 : i32, i32, i32, i32
  }
  func.func @transform_1(%arg0: i32) -> (i32, i32, i32, i32) {
    %c0_i32 = arith.constant 0 : i32
    %c0_i32_0 = arith.constant 0 : i32
    %c0_i32_1 = arith.constant 0 : i32
    %c0_i32_2 = arith.constant 0 : i32
    return %arg0, %c0_i32, %c0_i32_0, %c0_i32_1 : i32, i32, i32, i32
  }
  func.func @transform_2(%arg0: i32) -> (i32, i32) {
    %c0_i32 = arith.constant 0 : i32
    %c0_i32_0 = arith.constant 0 : i32
    %c0_i32_1 = arith.constant 0 : i32
    return %c0_i32, %c0_i32_0 : i32, i32
  }
  func.func @transform_3(%arg0: i32) -> (i32, i32) {
    %c0_i32 = arith.constant 0 : i32
    %c0_i32_0 = arith.constant 0 : i32
    %c0_i32_1 = arith.constant 0 : i32
    return %c0_i32, %c0_i32_0 : i32, i32
  }
  func.func @transform_4(%arg0: i32) -> (i32, i32, i32, i32) {
    %c0_i32 = arith.constant 0 : i32
    %c0_i32_0 = arith.constant 0 : i32
    %c0_i32_1 = arith.constant 0 : i32
    %c0_i32_2 = arith.constant 0 : i32
    return %arg0, %c0_i32, %c0_i32_0, %c0_i32_1 : i32, i32, i32, i32
  }
}

module attributes {stable_mosaic.version = 11 : i64} {
  func.func @bn_relu_conv2_stats_kernel(%arg0: i32, %arg1: memref<1x16x16x4xf32, #tpu.memory_space<vmem>>, %arg2: memref<1x4xf32, #tpu.memory_space<vmem>>, %arg3: memref<1x4xf32, #tpu.memory_space<vmem>>, %arg4: memref<36x4xf32, #tpu.memory_space<vmem>>, %arg5: memref<1x16x16x4xf32, #tpu.memory_space<vmem>>, %arg6: memref<1x2x4xf32, #tpu.memory_space<vmem>>, %arg7: memref<1x18x18x4xf32, #tpu.memory_space<vmem>>) attributes {dimension_semantics = [#tpu.dimension_semantics<parallel>], iteration_bounds = array<i64: 2>, scalar_prefetch = 0 : i64, scratch_operands = 1 : i64, tpu.core_type = #tpu.core_type<tc>, window_params = [{transform_indices = @transform_0, window_bounds = array<i64: 1, 16, 16, 4>}, {pipeline_mode = #tpu.pipeline_mode<synchronous>, transform_indices = @transform_1, window_bounds = array<i64: 1, 4>}, {pipeline_mode = #tpu.pipeline_mode<synchronous>, transform_indices = @transform_2, window_bounds = array<i64: 1, 4>}, {pipeline_mode = #tpu.pipeline_mode<synchronous>, transform_indices = @transform_3, window_bounds = array<i64: 36, 4>}, {transform_indices = @transform_4, window_bounds = array<i64: 1, 16, 16, 4>}, {transform_indices = @transform_5, window_bounds = array<i64: 1, 2, 4>}]} {
    %c0 = arith.constant 0 : index
    %c0_0 = arith.constant 0 : index
    %c0_1 = arith.constant 0 : index
    %c0_2 = arith.constant 0 : index
    %0 = vector.load %arg1[%c0, %c0_0, %c0_1, %c0_2] : memref<1x16x16x4xf32, #tpu.memory_space<vmem>>, vector<1x16x16x4xf32>
    %c0_3 = arith.constant 0 : index
    %c0_4 = arith.constant 0 : index
    %1 = vector.load %arg2[%c0_3, %c0_4] : memref<1x4xf32, #tpu.memory_space<vmem>>, vector<1x4xf32>
    %2 = vector.shape_cast %1 : vector<1x4xf32> to vector<1x1x1x4xf32>
    %3 = vector.broadcast %2 : vector<1x1x1x4xf32> to vector<1x16x16x4xf32>
    %4 = arith.mulf %0, %3 : vector<1x16x16x4xf32>
    %c0_5 = arith.constant 0 : index
    %c0_6 = arith.constant 0 : index
    %5 = vector.load %arg3[%c0_5, %c0_6] : memref<1x4xf32, #tpu.memory_space<vmem>>, vector<1x4xf32>
    %6 = vector.shape_cast %5 : vector<1x4xf32> to vector<1x1x1x4xf32>
    %7 = vector.broadcast %6 : vector<1x1x1x4xf32> to vector<1x16x16x4xf32>
    %8 = arith.addf %4, %7 : vector<1x16x16x4xf32>
    %cst = arith.constant 0.000000e+00 : f32
    %9 = vector.broadcast %cst : f32 to vector<1x16x16x4xf32>
    %10 = arith.maximumf %8, %9 : vector<1x16x16x4xf32>
    %cst_7 = arith.constant 0.000000e+00 : f32
    %11 = vector.broadcast %cst_7 : f32 to vector<1x1x18x4xf32>
    %cst_8 = arith.constant 0.000000e+00 : f32
    %12 = vector.broadcast %cst_8 : f32 to vector<1x16x1x4xf32>
    %c0_9 = arith.constant 0 : index
    %c0_10 = arith.constant 0 : index
    %c0_11 = arith.constant 0 : index
    %c0_12 = arith.constant 0 : index
    %13 = vector.load %arg7[%c0_9, %c0_10, %c0_11, %c0_12] : memref<1x18x18x4xf32, #tpu.memory_space<vmem>>, vector<1x1x18x4xf32>
    tpu.vector_store %arg7[%c0_9, %c0_10, %c0_11, %c0_12], %11 {strides = array<i32>} : memref<1x18x18x4xf32, #tpu.memory_space<vmem>>, vector<1x1x18x4xf32>,
    %c0_13 = arith.constant 0 : index
    %c17 = arith.constant 17 : index
    %c0_14 = arith.constant 0 : index
    %c0_15 = arith.constant 0 : index
    %14 = vector.load %arg7[%c0_13, %c17, %c0_14, %c0_15] : memref<1x18x18x4xf32, #tpu.memory_space<vmem>>, vector<1x1x18x4xf32>
    tpu.vector_store %arg7[%c0_13, %c17, %c0_14, %c0_15], %11 {strides = array<i32>} : memref<1x18x18x4xf32, #tpu.memory_space<vmem>>, vector<1x1x18x4xf32>,
    %c0_16 = arith.constant 0 : index
    %c1 = arith.constant 1 : index
    %c0_17 = arith.constant 0 : index
    %c0_18 = arith.constant 0 : index
    %15 = vector.load %arg7[%c0_16, %c1, %c0_17, %c0_18] : memref<1x18x18x4xf32, #tpu.memory_space<vmem>>, vector<1x16x1x4xf32>
    tpu.vector_store %arg7[%c0_16, %c1, %c0_17, %c0_18], %12 {strides = array<i32>} : memref<1x18x18x4xf32, #tpu.memory_space<vmem>>, vector<1x16x1x4xf32>,
    %c0_19 = arith.constant 0 : index
    %c1_20 = arith.constant 1 : index
    %c17_21 = arith.constant 17 : index
    %c0_22 = arith.constant 0 : index
    %16 = vector.load %arg7[%c0_19, %c1_20, %c17_21, %c0_22] : memref<1x18x18x4xf32, #tpu.memory_space<vmem>>, vector<1x16x1x4xf32>
    tpu.vector_store %arg7[%c0_19, %c1_20, %c17_21, %c0_22], %12 {strides = array<i32>} : memref<1x18x18x4xf32, #tpu.memory_space<vmem>>, vector<1x16x1x4xf32>,
    %c0_23 = arith.constant 0 : index
    %c1_24 = arith.constant 1 : index
    %c1_25 = arith.constant 1 : index
    %c0_26 = arith.constant 0 : index
    %17 = vector.load %arg7[%c0_23, %c1_24, %c1_25, %c0_26] : memref<1x18x18x4xf32, #tpu.memory_space<vmem>>, vector<1x16x16x4xf32>
    tpu.vector_store %arg7[%c0_23, %c1_24, %c1_25, %c0_26], %10 {strides = array<i32>} : memref<1x18x18x4xf32, #tpu.memory_space<vmem>>, vector<1x16x16x4xf32>,
    %c0_27 = arith.constant 0 : index
    %c0_28 = arith.constant 0 : index
    %c0_29 = arith.constant 0 : index
    %c0_30 = arith.constant 0 : index
    %18 = vector.load %arg7[%c0_27, %c0_28, %c0_29, %c0_30] : memref<1x18x18x4xf32, #tpu.memory_space<vmem>>, vector<1x16x16x4xf32>
    %c0_31 = arith.constant 0 : index
    %c0_32 = arith.constant 0 : index
    %c1_33 = arith.constant 1 : index
    %c0_34 = arith.constant 0 : index
    %19 = vector.load %arg7[%c0_31, %c0_32, %c1_33, %c0_34] : memref<1x18x18x4xf32, #tpu.memory_space<vmem>>, vector<1x16x16x4xf32>
    %c0_35 = arith.constant 0 : index
    %c0_36 = arith.constant 0 : index
    %c2 = arith.constant 2 : index
    %c0_37 = arith.constant 0 : index
    %20 = vector.load %arg7[%c0_35, %c0_36, %c2, %c0_37] : memref<1x18x18x4xf32, #tpu.memory_space<vmem>>, vector<1x16x16x4xf32>
    %c0_38 = arith.constant 0 : index
    %c1_39 = arith.constant 1 : index
    %c0_40 = arith.constant 0 : index
    %c0_41 = arith.constant 0 : index
    %21 = vector.load %arg7[%c0_38, %c1_39, %c0_40, %c0_41] : memref<1x18x18x4xf32, #tpu.memory_space<vmem>>, vector<1x16x16x4xf32>
    %c0_42 = arith.constant 0 : index
    %c1_43 = arith.constant 1 : index
    %c1_44 = arith.constant 1 : index
    %c0_45 = arith.constant 0 : index
    %22 = vector.load %arg7[%c0_42, %c1_43, %c1_44, %c0_45] : memref<1x18x18x4xf32, #tpu.memory_space<vmem>>, vector<1x16x16x4xf32>
    %c0_46 = arith.constant 0 : index
    %c1_47 = arith.constant 1 : index
    %c2_48 = arith.constant 2 : index
    %c0_49 = arith.constant 0 : index
    %23 = vector.load %arg7[%c0_46, %c1_47, %c2_48, %c0_49] : memref<1x18x18x4xf32, #tpu.memory_space<vmem>>, vector<1x16x16x4xf32>
    %c0_50 = arith.constant 0 : index
    %c2_51 = arith.constant 2 : index
    %c0_52 = arith.constant 0 : index
    %c0_53 = arith.constant 0 : index
    %24 = vector.load %arg7[%c0_50, %c2_51, %c0_52, %c0_53] : memref<1x18x18x4xf32, #tpu.memory_space<vmem>>, vector<1x16x16x4xf32>
    %c0_54 = arith.constant 0 : index
    %c2_55 = arith.constant 2 : index
    %c1_56 = arith.constant 1 : index
    %c0_57 = arith.constant 0 : index
    %25 = vector.load %arg7[%c0_54, %c2_55, %c1_56, %c0_57] : memref<1x18x18x4xf32, #tpu.memory_space<vmem>>, vector<1x16x16x4xf32>
    %c0_58 = arith.constant 0 : index
    %c2_59 = arith.constant 2 : index
    %c2_60 = arith.constant 2 : index
    %c0_61 = arith.constant 0 : index
    %26 = vector.load %arg7[%c0_58, %c2_59, %c2_60, %c0_61] : memref<1x18x18x4xf32, #tpu.memory_space<vmem>>, vector<1x16x16x4xf32>
    %27 = tpu.concatenate %18, %19, %20, %21, %22, %23, %24, %25, %26 in 3 : vector<1x16x16x4xf32>, vector<1x16x16x4xf32>, vector<1x16x16x4xf32>, vector<1x16x16x4xf32>, vector<1x16x16x4xf32>, vector<1x16x16x4xf32>, vector<1x16x16x4xf32>, vector<1x16x16x4xf32>, vector<1x16x16x4xf32> -> vector<1x16x16x36xf32>
    %28 = vector.shape_cast %27 : vector<1x16x16x36xf32> to vector<256x36xf32>
    %c0_62 = arith.constant 0 : index
    %c0_63 = arith.constant 0 : index
    %29 = vector.load %arg4[%c0_62, %c0_63] : memref<36x4xf32, #tpu.memory_space<vmem>>, vector<36x4xf32>
    %cst_64 = arith.constant dense<0.000000e+00> : vector<256x4xf32>
    %30 = tpu.matmul %28, %29, %cst_64 {dimension_numbers = #tpu.dot_dimension_numbers<[1], [0], [0], [1], [0, 0, 1, 1], [], []>} : vector<256x36xf32>, vector<36x4xf32>, vector<256x4xf32> -> vector<256x4xf32>
    %31 = vector.shape_cast %30 : vector<256x4xf32> to vector<1x16x16x4xf32>
    %c0_65 = arith.constant 0 : index
    %c0_66 = arith.constant 0 : index
    %c0_67 = arith.constant 0 : index
    %c0_68 = arith.constant 0 : index
    %32 = vector.load %arg5[%c0_65, %c0_66, %c0_67, %c0_68] : memref<1x16x16x4xf32, #tpu.memory_space<vmem>>, vector<1x16x16x4xf32>
    tpu.vector_store %arg5[%c0_65, %c0_66, %c0_67, %c0_68], %31 {strides = array<i32>} : memref<1x16x16x4xf32, #tpu.memory_space<vmem>>, vector<1x16x16x4xf32>,
    %cst_69 = arith.constant dense<0.000000e+00> : vector<4xf32>
    %33 = vector.multi_reduction <add>, %30, %cst_69 [0] : vector<256x4xf32> to vector<4xf32>
    %34 = vector.shape_cast %33 : vector<4xf32> to vector<1x4xf32>
    %35 = arith.mulf %30, %30 : vector<256x4xf32>
    %cst_70 = arith.constant dense<0.000000e+00> : vector<4xf32>
    %36 = vector.multi_reduction <add>, %35, %cst_70 [0] : vector<256x4xf32> to vector<4xf32>
    %37 = vector.shape_cast %36 : vector<4xf32> to vector<1x4xf32>
    %38 = tpu.concatenate %34, %37 in 0 : vector<1x4xf32>, vector<1x4xf32> -> vector<2x4xf32>
    %39 = vector.shape_cast %38 : vector<2x4xf32> to vector<1x2x4xf32>
    %c0_71 = arith.constant 0 : index
    %c0_72 = arith.constant 0 : index
    %c0_73 = arith.constant 0 : index
    %40 = vector.load %arg6[%c0_71, %c0_72, %c0_73] : memref<1x2x4xf32, #tpu.memory_space<vmem>>, vector<1x2x4xf32>
    tpu.vector_store %arg6[%c0_71, %c0_72, %c0_73], %39 {strides = array<i32>} : memref<1x2x4xf32, #tpu.memory_space<vmem>>, vector<1x2x4xf32>,
    return
  }
  func.func @transform_0(%arg0: i32) -> (i32, i32, i32, i32) {
    %c0_i32 = arith.constant 0 : i32
    %c0_i32_0 = arith.constant 0 : i32
    %c0_i32_1 = arith.constant 0 : i32
    %c0_i32_2 = arith.constant 0 : i32
    return %arg0, %c0_i32, %c0_i32_0, %c0_i32_1 : i32, i32, i32, i32
  }
  func.func @transform_1(%arg0: i32) -> (i32, i32) {
    %c0_i32 = arith.constant 0 : i32
    %c0_i32_0 = arith.constant 0 : i32
    %c0_i32_1 = arith.constant 0 : i32
    return %c0_i32, %c0_i32_0 : i32, i32
  }
  func.func @transform_2(%arg0: i32) -> (i32, i32) {
    %c0_i32 = arith.constant 0 : i32
    %c0_i32_0 = arith.constant 0 : i32
    %c0_i32_1 = arith.constant 0 : i32
    return %c0_i32, %c0_i32_0 : i32, i32
  }
  func.func @transform_3(%arg0: i32) -> (i32, i32) {
    %c0_i32 = arith.constant 0 : i32
    %c0_i32_0 = arith.constant 0 : i32
    %c0_i32_1 = arith.constant 0 : i32
    return %c0_i32, %c0_i32_0 : i32, i32
  }
  func.func @transform_4(%arg0: i32) -> (i32, i32, i32, i32) {
    %c0_i32 = arith.constant 0 : i32
    %c0_i32_0 = arith.constant 0 : i32
    %c0_i32_1 = arith.constant 0 : i32
    %c0_i32_2 = arith.constant 0 : i32
    return %arg0, %c0_i32, %c0_i32_0, %c0_i32_1 : i32, i32, i32, i32
  }
  func.func @transform_5(%arg0: i32) -> (i32, i32, i32) {
    %c0_i32 = arith.constant 0 : i32
    %c0_i32_0 = arith.constant 0 : i32
    %c0_i32_1 = arith.constant 0 : i32
    return %arg0, %c0_i32, %c0_i32_0 : i32, i32, i32
  }
}

</mosaic_0001>

<llo_original>
// kernel: basic_block.5
$region0: #{basic_block.5}
  #allocation0 [shape = 'u32[]', space=smem, size = 0x4, offset = 0x4, fixed_abs, tag = 'smem constant byte address 0x4 - core index']
  #allocation1 [shape = 'u32[144,128]{1,0:T(1,128)}', space=vmem, size = 0x12000, scoped, tag = 'internal scratch']
  %s0 = inlined_call_operand.vmem [shape: f32[2,16,16,4], index: 0, kind: input, shape index: {}]
  %s1 = inlined_call_operand.vmem [shape: f32[2,16,16,4], index: 1, kind: input, shape index: {}]
  %s2 = inlined_call_operand.vmem [shape: f32[1,4], index: 2, kind: input, shape index: {}]
  %s3 = inlined_call_operand.vmem [shape: f32[1,4], index: 3, kind: input, shape index: {}]
  %s4 = inlined_call_operand.vmem [shape: f32[2,16,16,4], index: 4, kind: output, shape index: {}]
  %s5 = sld [smem:[#allocation0]]
  $region49: #{basic_block.5} parent=0
    _
  %s7 = ssub.s32 1, %s5
  %s8 = scalar_select 0, %s7, %s5
  loop: start=0, step=1, limit=4
  $region2: #{basic_block.5} parent=0 // loop_pre_header
    _
  $region3: #{basic_block.5} parent=0 // loop_header
    %s10 = sphi 0, %s14
    %p11 = scmp.ge.s32.totalorder %s10, 4
    %s20 = sphi 0, %s22
    %s23 = sphi 0, %s20
    %s24 = sphi 0, %s23
    %s40 = sphi 0, %s24
    %s46 = sphi 0, %s48
    %s49 = sphi 0, %s46
    %s50 = sphi 0, %s49
    %s66 = sphi 0, %s50
    %s70 = sphi 0, %s70
    %s72 = sphi 0, %s70
    %s73 = sphi 0, %s72
    %s87 = sphi 0, %s73
    %s91 = sphi 0, %s91
    %s93 = sphi 0, %s91
    %s94 = sphi 0, %s93
    %s108 = sphi 0, %s94
    %s114 = sphi 0, %s116
    %s117 = sphi 0, %s114
    %s118 = sphi 0, %s117
    %s134 = sphi 0, %s118
  $region4: #{basic_block.5} parent=0 // loop_header_branch
    %13 = sbr.rel (%p11) target = $region8
  $region5: #{basic_block.5} parent=0 // loop_body
    %s15 = ssub.s32 %s10, 1
    %s16 = ssub.s32 %s10, 2
    %s17 = sadd.s32 %s10, 1
    %s18 = ssub.s32 %s10, %s17
    %p19 = scmp.eq.s32.totalorder %s18, 0
    %s21 = sadd.s32 %s20, 1
    %s22 = scalar_select %p19, %s20, %s21
    %p25 = pneg %p19
    %p26 = scmp.eq.s32.totalorder %s10, 1
    %p27 = por %p25, %p26
    %p28 = scmp.ne.s32.totalorder %s20, %s23
    %p29 = scmp.eq.s32.totalorder %s10, 0
    %p30 = por %p28, %p29
    %p31 = scmp.ne.s32.totalorder %s20, %s23
    %p32 = scmp.eq.s32.totalorder %s15, 1
    %p33 = por %p31, %p32
    %p34 = scmp.ne.s32.totalorder %s23, %s24
    %p35 = scmp.eq.s32.totalorder %s15, 0
    %p36 = por %p34, %p35
    %p37 = scmp.ne.s32.totalorder %s23, %s24
    %p38 = scmp.eq.s32.totalorder %s16, 1
    %p39 = por %p37, %p38
    %p41 = scmp.ne.s32.totalorder %s24, %s40
    %p42 = scmp.eq.s32.totalorder %s16, 0
    %p43 = por %p41, %p42
    %s44 = ssub.s32 %s10, %s17
    %p45 = scmp.eq.s32.totalorder %s44, 0
    %s47 = sadd.s32 %s46, 1
    %s48 = scalar_select %p45, %s46, %s47
    %p51 = pneg %p45
    %p52 = scmp.eq.s32.totalorder %s10, 1
    %p53 = por %p51, %p52
    %p54 = scmp.ne.s32.totalorder %s46, %s49
    %p55 = scmp.eq.s32.totalorder %s10, 0
    %p56 = por %p54, %p55
    %p57 = scmp.ne.s32.totalorder %s46, %s49
    %p58 = scmp.eq.s32.totalorder %s15, 1
    %p59 = por %p57, %p58
    %p60 = scmp.ne.s32.totalorder %s49, %s50
    %p61 = scmp.eq.s32.totalorder %s15, 0
    %p62 = por %p60, %p61
    %p63 = scmp.ne.s32.totalorder %s49, %s50
    %p64 = scmp.eq.s32.totalorder %s16, 1
    %p65 = por %p63, %p64
    %p67 = scmp.ne.s32.totalorder %s50, %s66
    %p68 = scmp.eq.s32.totalorder %s16, 0
    %p69 = por %p67, %p68
    %s71 = sadd.s32 %s70, 1
    %p74 = scmp.eq.s32.totalorder %s10, 1
    %p75 = scmp.ne.s32.totalorder %s70, %s72
    %p76 = scmp.eq.s32.totalorder %s10, 0
    %p77 = por %p75, %p76
    %p78 = scmp.ne.s32.totalorder %s70, %s72
    %p79 = scmp.eq.s32.totalorder %s15, 1
    %p80 = por %p78, %p79
    %p81 = scmp.ne.s32.totalorder %s72, %s73
    %p82 = scmp.eq.s32.totalorder %s15, 0
    %p83 = por %p81, %p82
    %p84 = scmp.ne.s32.totalorder %s72, %s73
    %p85 = scmp.eq.s32.totalorder %s16, 1
    %p86 = por %p84, %p85
    %p88 = scmp.ne.s32.totalorder %s73, %s87
    %p89 = scmp.eq.s32.totalorder %s16, 0
    %p90 = por %p88, %p89
    %s92 = sadd.s32 %s91, 1
    %p95 = scmp.eq.s32.totalorder %s10, 1
    %p96 = scmp.ne.s32.totalorder %s91, %s93
    %p97 = scmp.eq.s32.totalorder %s10, 0
    %p98 = por %p96, %p97
    %p99 = scmp.ne.s32.totalorder %s91, %s93
    %p100 = scmp.eq.s32.totalorder %s15, 1
    %p101 = por %p99, %p100
    %p102 = scmp.ne.s32.totalorder %s93, %s94
    %p103 = scmp.eq.s32.totalorder %s15, 0
    %p104 = por %p102, %p103
    %p105 = scmp.ne.s32.totalorder %s93, %s94
    %p106 = scmp.eq.s32.totalorder %s16, 1
    %p107 = por %p105, %p106
    %p109 = scmp.ne.s32.totalorder %s94, %s108
    %p110 = scmp.eq.s32.totalorder %s16, 0
    %p111 = por %p109, %p110
    %s112 = ssub.s32 %s10, %s17
    %p113 = scmp.eq.s32.totalorder %s112, 0
    %s115 = sadd.s32 %s114, 1
    %s116 = scalar_select %p113, %s114, %s115
    %p119 = pneg %p113
    %p120 = scmp.eq.s32.totalorder %s10, 1
    %p121 = por %p119, %p120
    %p122 = scmp.ne.s32.totalorder %s114, %s117
    %p123 = scmp.eq.s32.totalorder %s10, 0
    %p124 = por %p122, %p123
    %p125 = scmp.ne.s32.totalorder %s114, %s117
    %p126 = scmp.eq.s32.totalorder %s15, 1
    %p127 = por %p125, %p126
    %p128 = scmp.ne.s32.totalorder %s117, %s118
    %p129 = scmp.eq.s32.totalorder %s15, 0
    %p130 = por %p128, %p129
    %p131 = scmp.ne.s32.totalorder %s117, %s118
    %p132 = scmp.eq.s32.totalorder %s16, 1
    %p133 = por %p131, %p132
    %p135 = scmp.ne.s32.totalorder %s118, %s134
    %p136 = scmp.eq.s32.totalorder %s16, 0
    %p137 = por %p135, %p136
    %p138 = scmp.le.s32.totalorder 1, %s10
    %p139 = scmp.lt.s32.totalorder %s10, 3
    %p140 = pnand %p138, %p139
    %p141 = pneg %p140
    // Predicated region
    $region9: #{basic_block.5} parent=5 // pred_check
      _
    $region10: #{basic_block.5} parent=5 // pred_check_branch
      %143 = sbr.rel (%p140) target = $region12
    $region11: #{basic_block.5} parent=5 // pred_region
      %s144 = ssub.s32 %s10, 1
      // Predicated region
      $region13: #{basic_block.5} parent=11 // pred_check
        %p145 = pneg %p83
      $region14: #{basic_block.5} parent=11 // pred_check_branch
        %147 = sbr.rel (%p145) target = $region16
      $region15: #{basic_block.5} parent=11 // pred_region
        _
      $region16: #{basic_block.5} parent=11 // pred_fallthru
        _
      // Predicated region
      $region17: #{basic_block.5} parent=11 // pred_check
        %p148 = pneg %p104
      $region18: #{basic_block.5} parent=11 // pred_check_branch
        %150 = sbr.rel (%p148) target = $region20
      $region19: #{basic_block.5} parent=11 // pred_region
        _
      $region20: #{basic_block.5} parent=11 // pred_fallthru
        _
    $region12: #{basic_block.5} parent=5 // pred_fallthru
      _
    %p151 = scmp.lt.s32.totalorder %s10, 2
    // Predicated region
    $region21: #{basic_block.5} parent=5 // pred_check
      %p152 = pneg %p151
    $region22: #{basic_block.5} parent=5 // pred_check_branch
      %154 = sbr.rel (%p152) target = $region24
    $region23: #{basic_block.5} parent=5 // pred_region
      // Predicated region
      $region25: #{basic_block.5} parent=23 // pred_check
        %p155 = pneg %p30
      $region26: #{basic_block.5} parent=23 // pred_check_branch
        %157 = sbr.rel (%p155) target = $region28
      $region27: #{basic_block.5} parent=23 // pred_region
        %p158 = scmp.lt.s32.totalorder %s10, 1
        %s159 = scalar_select %p158, %s10, 1
        %s160 = smul.addr %s159, 32
        %s161 = smul.addr %s160, 8
        %s162 = scalar_lea.vmem %s0, %s161
      $region28: #{basic_block.5} parent=23 // pred_fallthru
        _
      // Predicated region
      $region29: #{basic_block.5} parent=23 // pred_check
        %p163 = pneg %p56
      $region30: #{basic_block.5} parent=23 // pred_check_branch
        %165 = sbr.rel (%p163) target = $region32
      $region31: #{basic_block.5} parent=23 // pred_region
        %p166 = scmp.lt.s32.totalorder %s10, 1
        %s167 = scalar_select %p166, %s10, 1
        %s168 = smul.addr %s167, 32
        %s169 = smul.addr %s168, 8
        %s170 = scalar_lea.vmem %s1, %s169
      $region32: #{basic_block.5} parent=23 // pred_fallthru
        _
    $region24: #{basic_block.5} parent=5 // pred_fallthru
      _
    %p171 = scmp.le.s32.totalorder 1, %s10
    %p172 = scmp.lt.s32.totalorder %s10, 3
    %p173 = pnand %p171, %p172
    %p174 = pneg %p173
    // Predicated region
    $region33: #{basic_block.5} parent=5 // pred_check
      _
    $region34: #{basic_block.5} parent=5 // pred_check_branch
      %176 = sbr.rel (%p173) target = $region36
    $region35: #{basic_block.5} parent=5 // pred_region
      %s177 = ssub.s32 %s10, 1
      %p178 = scmp.lt.s32.totalorder %s15, 1
      %s179 = scalar_select %p178, %s15, 1
      %s180 = smul.addr %s179, 32
      %s181 = smul.addr %s180, 8
      %s182 = scalar_lea.vmem %s0, %s181
      %p183 = pneg %p36
      %p184 = pneg %p33
      %p185 = scmp.lt.s32.totalorder %s15, 1
      %s186 = scalar_select %p185, %s15, 1
      %s187 = smul.addr %s186, 32
      %s188 = smul.addr %s187, 8
      %s189 = scalar_lea.vmem %s1, %s188
      %p190 = pneg %p62
      %p191 = pneg %p59
      %p192 = pneg %p83
      %p193 = pneg %p80
      %p194 = pneg %p104
      %p195 = pneg %p101
      %p196 = pneg %p130
      %p197 = pneg %p127
      %p198 = scmp.lt.s32.totalorder %s15, 1
      %s199 = scalar_select %p198, %s15, 1
      %s200 = smul.addr %s199, 32
      %s201 = smul.addr %s200, 8
      %s202 = scalar_lea.vmem %s4, %s201
      %p203 = scmp.lt.s32.totalorder %s15, 1
      %s204 = scalar_select %p203, %s15, 1
      %s205 = smul.addr %s204, 32
      %s206 = smul.addr %s205, 8
      %s207 = scalar_lea.vmem %s0, %s206
      %p208 = scmp.lt.s32.totalorder %s15, 1
      %s209 = scalar_select %p208, %s15, 1
      %s210 = smul.addr %s209, 32
      %s211 = smul.addr %s210, 8
      %s212 = scalar_lea.vmem %s1, %s211
      %p213 = scmp.lt.s32.totalorder %s15, 1
      %s214 = scalar_select %p213, %s15, 1
      %s215 = smul.addr %s214, 32
      %s216 = smul.addr %s215, 8
      %s217 = scalar_lea.vmem %s4, %s216
      %v218 = vld [vmem:[%s207] sm:$0xff]
      %v219 = vld [vmem:[%s207 + $0x8] sm:$0xff]
      %v220 = vld [vmem:[%s207 + $0x10] sm:$0xff]
      %v221 = vld [vmem:[%s207 + $0x18] sm:$0xff]
      %v222 = vld [vmem:[%s207 + $0x20] sm:$0xff]
      %v223 = vld [vmem:[%s207 + $0x28] sm:$0xff]
      %v224 = vld [vmem:[%s207 + $0x30] sm:$0xff]
      %v225 = vld [vmem:[%s207 + $0x38] sm:$0xff]
      %v226 = vld [vmem:[%s207 + $0x40] sm:$0xff]
      %v227 = vld [vmem:[%s207 + $0x48] sm:$0xff]
      %v228 = vld [vmem:[%s207 + $0x50] sm:$0xff]
      %v229 = vld [vmem:[%s207 + $0x58] sm:$0xff]
      %v230 = vld [vmem:[%s207 + $0x60] sm:$0xff]
      %v231 = vld [vmem:[%s207 + $0x68] sm:$0xff]
      %v232 = vld [vmem:[%s207 + $0x70] sm:$0xff]
      %v233 = vld [vmem:[%s207 + $0x78] sm:$0xff]
      %v234 = vld [vmem:[%s207 + $0x80] sm:$0xff]
      %v235 = vld [vmem:[%s207 + $0x88] sm:$0xff]
      %v236 = vld [vmem:[%s207 + $0x90] sm:$0xff]
      %v237 = vld [vmem:[%s207 + $0x98] sm:$0xff]
      %v238 = vld [vmem:[%s207 + $0xa0] sm:$0xff]
      %v239 = vld [vmem:[%s207 + $0xa8] sm:$0xff]
      %v240 = vld [vmem:[%s207 + $0xb0] sm:$0xff]
      %v241 = vld [vmem:[%s207 + $0xb8] sm:$0xff]
      %v242 = vld [vmem:[%s207 + $0xc0] sm:$0xff]
      %v243 = vld [vmem:[%s207 + $0xc8] sm:$0xff]
      %v244 = vld [vmem:[%s207 + $0xd0] sm:$0xff]
      %v245 = vld [vmem:[%s207 + $0xd8] sm:$0xff]
      %v246 = vld [vmem:[%s207 + $0xe0] sm:$0xff]
      %v247 = vld [vmem:[%s207 + $0xe8] sm:$0xff]
      %v248 = vld [vmem:[%s207 + $0xf0] sm:$0xff]
      %v249 = vld [vmem:[%s207 + $0xf8] sm:$0xff]
      %v250 = vld [vmem:[%s2] sm:$0x1]
      %v252 = vlaneseq
      %v253 = vshrl.u32 %v252, 7
      %v254 = vsub.s32 0, %v253
      %v255 = vrot.slane %v250, %v254
      %v257 = vmul.f32 %v218, %v255
      %v258 = vmul.f32 %v219, %v255
      %v259 = vmul.f32 %v220, %v255
      %v260 = vmul.f32 %v221, %v255
      %v261 = vmul.f32 %v222, %v255
      %v262 = vmul.f32 %v223, %v255
      %v263 = vmul.f32 %v224, %v255
      %v264 = vmul.f32 %v225, %v255
      %v265 = vmul.f32 %v226, %v255
      %v266 = vmul.f32 %v227, %v255
      %v267 = vmul.f32 %v228, %v255
      %v268 = vmul.f32 %v229, %v255
      %v269 = vmul.f32 %v230, %v255
      %v270 = vmul.f32 %v231, %v255
      %v271 = vmul.f32 %v232, %v255
      %v272 = vmul.f32 %v233, %v255
      %v273 = vmul.f32 %v234, %v255
      %v274 = vmul.f32 %v235, %v255
      %v275 = vmul.f32 %v236, %v255
      %v276 = vmul.f32 %v237, %v255
      %v277 = vmul.f32 %v238, %v255
      %v278 = vmul.f32 %v239, %v255
      %v279 = vmul.f32 %v240, %v255
      %v280 = vmul.f32 %v241, %v255
      %v281 = vmul.f32 %v242, %v255
      %v282 = vmul.f32 %v243, %v255
      %v283 = vmul.f32 %v244, %v255
      %v284 = vmul.f32 %v245, %v255
      %v285 = vmul.f32 %v246, %v255
      %v286 = vmul.f32 %v247, %v255
      %v287 = vmul.f32 %v248, %v255
      %v288 = vmul.f32 %v249, %v255
      %v289 = vld [vmem:[%s3] sm:$0x1]
      %v291 = vlaneseq
      %v292 = vshrl.u32 %v291, 7
      %v293 = vsub.s32 0, %v292
      %v294 = vrot.slane %v289, %v293
      %v296 = vadd.f32 %v257, %v294
      %v297 = vadd.f32 %v258, %v294
      %v298 = vadd.f32 %v259, %v294
      %v299 = vadd.f32 %v260, %v294
      %v300 = vadd.f32 %v261, %v294
      %v301 = vadd.f32 %v262, %v294
      %v302 = vadd.f32 %v263, %v294
      %v303 = vadd.f32 %v264, %v294
      %v304 = vadd.f32 %v265, %v294
      %v305 = vadd.f32 %v266, %v294
      %v306 = vadd.f32 %v267, %v294
      %v307 = vadd.f32 %v268, %v294
      %v308 = vadd.f32 %v269, %v294
      %v309 = vadd.f32 %v270, %v294
      %v310 = vadd.f32 %v271, %v294
      %v311 = vadd.f32 %v272, %v294
      %v312 = vadd.f32 %v273, %v294
      %v313 = vadd.f32 %v274, %v294
      %v314 = vadd.f32 %v275, %v294
      %v315 = vadd.f32 %v276, %v294
      %v316 = vadd.f32 %v277, %v294
      %v317 = vadd.f32 %v278, %v294
      %v318 = vadd.f32 %v279, %v294
      %v319 = vadd.f32 %v280, %v294
      %v320 = vadd.f32 %v281, %v294
      %v321 = vadd.f32 %v282, %v294
      %v322 = vadd.f32 %v283, %v294
      %v323 = vadd.f32 %v284, %v294
      %v324 = vadd.f32 %v285, %v294
      %v325 = vadd.f32 %v286, %v294
      %v326 = vadd.f32 %v287, %v294
      %v327 = vadd.f32 %v288, %v294
      %v328 = vld [vmem:[%s212] sm:$0xff]
      %v329 = vld [vmem:[%s212 + $0x8] sm:$0xff]
      %v330 = vld [vmem:[%s212 + $0x10] sm:$0xff]
      %v331 = vld [vmem:[%s212 + $0x18] sm:$0xff]
      %v332 = vld [vmem:[%s212 + $0x20] sm:$0xff]
      %v333 = vld [vmem:[%s212 + $0x28] sm:$0xff]
      %v334 = vld [vmem:[%s212 + $0x30] sm:$0xff]
      %v335 = vld [vmem:[%s212 + $0x38] sm:$0xff]
      %v336 = vld [vmem:[%s212 + $0x40] sm:$0xff]
      %v337 = vld [vmem:[%s212 + $0x48] sm:$0xff]
      %v338 = vld [vmem:[%s212 + $0x50] sm:$0xff]
      %v339 = vld [vmem:[%s212 + $0x58] sm:$0xff]
      %v340 = vld [vmem:[%s212 + $0x60] sm:$0xff]
      %v341 = vld [vmem:[%s212 + $0x68] sm:$0xff]
      %v342 = vld [vmem:[%s212 + $0x70] sm:$0xff]
      %v343 = vld [vmem:[%s212 + $0x78] sm:$0xff]
      %v344 = vld [vmem:[%s212 + $0x80] sm:$0xff]
      %v345 = vld [vmem:[%s212 + $0x88] sm:$0xff]
      %v346 = vld [vmem:[%s212 + $0x90] sm:$0xff]
      %v347 = vld [vmem:[%s212 + $0x98] sm:$0xff]
      %v348 = vld [vmem:[%s212 + $0xa0] sm:$0xff]
      %v349 = vld [vmem:[%s212 + $0xa8] sm:$0xff]
      %v350 = vld [vmem:[%s212 + $0xb0] sm:$0xff]
      %v351 = vld [vmem:[%s212 + $0xb8] sm:$0xff]
      %v352 = vld [vmem:[%s212 + $0xc0] sm:$0xff]
      %v353 = vld [vmem:[%s212 + $0xc8] sm:$0xff]
      %v354 = vld [vmem:[%s212 + $0xd0] sm:$0xff]
      %v355 = vld [vmem:[%s212 + $0xd8] sm:$0xff]
      %v356 = vld [vmem:[%s212 + $0xe0] sm:$0xff]
      %v357 = vld [vmem:[%s212 + $0xe8] sm:$0xff]
      %v358 = vld [vmem:[%s212 + $0xf0] sm:$0xff]
      %v359 = vld [vmem:[%s212 + $0xf8] sm:$0xff]
      %v360 = vadd.f32 %v296, %v328
      %v361 = vadd.f32 %v297, %v329
      %v362 = vadd.f32 %v298, %v330
      %v363 = vadd.f32 %v299, %v331
      %v364 = vadd.f32 %v300, %v332
      %v365 = vadd.f32 %v301, %v333
      %v366 = vadd.f32 %v302, %v334
      %v367 = vadd.f32 %v303, %v335
      %v368 = vadd.f32 %v304, %v336
      %v369 = vadd.f32 %v305, %v337
      %v370 = vadd.f32 %v306, %v338
      %v371 = vadd.f32 %v307, %v339
      %v372 = vadd.f32 %v308, %v340
      %v373 = vadd.f32 %v309, %v341
      %v374 = vadd.f32 %v310, %v342
      %v375 = vadd.f32 %v311, %v343
      %v376 = vadd.f32 %v312, %v344
      %v377 = vadd.f32 %v313, %v345
      %v378 = vadd.f32 %v314, %v346
      %v379 = vadd.f32 %v315, %v347
      %v380 = vadd.f32 %v316, %v348
      %v381 = vadd.f32 %v317, %v349
      %v382 = vadd.f32 %v318, %v350
      %v383 = vadd.f32 %v319, %v351
      %v384 = vadd.f32 %v320, %v352
      %v385 = vadd.f32 %v321, %v353
      %v386 = vadd.f32 %v322, %v354
      %v387 = vadd.f32 %v323, %v355
      %v388 = vadd.f32 %v324, %v356
      %v389 = vadd.f32 %v325, %v357
      %v390 = vadd.f32 %v326, %v358
      %v391 = vadd.f32 %v327, %v359
      %v392 = vmax.f32 %v360, 0.0
      %v393 = vmax.f32 %v361, 0.0
      %v394 = vmax.f32 %v362, 0.0
      %v395 = vmax.f32 %v363, 0.0
      %v396 = vmax.f32 %v364, 0.0
      %v397 = vmax.f32 %v365, 0.0
      %v398 = vmax.f32 %v366, 0.0
      %v399 = vmax.f32 %v367, 0.0
      %v400 = vmax.f32 %v368, 0.0
      %v401 = vmax.f32 %v369, 0.0
      %v402 = vmax.f32 %v370, 0.0
      %v403 = vmax.f32 %v371, 0.0
      %v404 = vmax.f32 %v372, 0.0
      %v405 = vmax.f32 %v373, 0.0
      %v406 = vmax.f32 %v374, 0.0
      %v407 = vmax.f32 %v375, 0.0
      %v408 = vmax.f32 %v376, 0.0
      %v409 = vmax.f32 %v377, 0.0
      %v410 = vmax.f32 %v378, 0.0
      %v411 = vmax.f32 %v379, 0.0
      %v412 = vmax.f32 %v380, 0.0
      %v413 = vmax.f32 %v381, 0.0
      %v414 = vmax.f32 %v382, 0.0
      %v415 = vmax.f32 %v383, 0.0
      %v416 = vmax.f32 %v384, 0.0
      %v417 = vmax.f32 %v385, 0.0
      %v418 = vmax.f32 %v386, 0.0
      %v419 = vmax.f32 %v387, 0.0
      %v420 = vmax.f32 %v388, 0.0
      %v421 = vmax.f32 %v389, 0.0
      %v422 = vmax.f32 %v390, 0.0
      %v423 = vmax.f32 %v391, 0.0
      %vm424 = vcmask 31744
      %425 = vst.msk [vmem:[%s217] sm:$0xff] %vm424, %v392
      %426 = vst.msk [vmem:[%s217 + $0x8] sm:$0xff] %vm424, %v393
      %427 = vst.msk [vmem:[%s217 + $0x10] sm:$0xff] %vm424, %v394
      %428 = vst.msk [vmem:[%s217 + $0x18] sm:$0xff] %vm424, %v395
      %429 = vst.msk [vmem:[%s217 + $0x20] sm:$0xff] %vm424, %v396
      %430 = vst.msk [vmem:[%s217 + $0x28] sm:$0xff] %vm424, %v397
      %431 = vst.msk [vmem:[%s217 + $0x30] sm:$0xff] %vm424, %v398
      %432 = vst.msk [vmem:[%s217 + $0x38] sm:$0xff] %vm424, %v399
      %433 = vst.msk [vmem:[%s217 + $0x40] sm:$0xff] %vm424, %v400
      %434 = vst.msk [vmem:[%s217 + $0x48] sm:$0xff] %vm424, %v401
      %435 = vst.msk [vmem:[%s217 + $0x50] sm:$0xff] %vm424, %v402
      %436 = vst.msk [vmem:[%s217 + $0x58] sm:$0xff] %vm424, %v403
      %437 = vst.msk [vmem:[%s217 + $0x60] sm:$0xff] %vm424, %v404
      %438 = vst.msk [vmem:[%s217 + $0x68] sm:$0xff] %vm424, %v405
      %439 = vst.msk [vmem:[%s217 + $0x70] sm:$0xff] %vm424, %v406
      %440 = vst.msk [vmem:[%s217 + $0x78] sm:$0xff] %vm424, %v407
      %441 = vst.msk [vmem:[%s217 + $0x80] sm:$0xff] %vm424, %v408
      %442 = vst.msk [vmem:[%s217 + $0x88] sm:$0xff] %vm424, %v409
      %443 = vst.msk [vmem:[%s217 + $0x90] sm:$0xff] %vm424, %v410
      %444 = vst.msk [vmem:[%s217 + $0x98] sm:$0xff] %vm424, %v411
      %445 = vst.msk [vmem:[%s217 + $0xa0] sm:$0xff] %vm424, %v412
      %446 = vst.msk [vmem:[%s217 + $0xa8] sm:$0xff] %vm424, %v413
      %447 = vst.msk [vmem:[%s217 + $0xb0] sm:$0xff] %vm424, %v414
      %448 = vst.msk [vmem:[%s217 + $0xb8] sm:$0xff] %vm424, %v415
      %449 = vst.msk [vmem:[%s217 + $0xc0] sm:$0xff] %vm424, %v416
      %450 = vst.msk [vmem:[%s217 + $0xc8] sm:$0xff] %vm424, %v417
      %451 = vst.msk [vmem:[%s217 + $0xd0] sm:$0xff] %vm424, %v418
      %452 = vst.msk [vmem:[%s217 + $0xd8] sm:$0xff] %vm424, %v419
      %453 = vst.msk [vmem:[%s217 + $0xe0] sm:$0xff] %vm424, %v420
      %454 = vst.msk [vmem:[%s217 + $0xe8] sm:$0xff] %vm424, %v421
      %455 = vst.msk [vmem:[%s217 + $0xf0] sm:$0xff] %vm424, %v422
      %456 = vst.msk [vmem:[%s217 + $0xf8] sm:$0xff] %vm424, %v423
      %p457 = scmp.lt.s32.totalorder %s15, 1
      %s458 = scalar_select %p457, %s15, 1
      %s459 = smul.addr %s458, 32
      %s460 = smul.addr %s459, 8
      %s461 = scalar_lea.vmem %s4, %s460
      // Predicated region
      $region37: #{basic_block.5} parent=35 // pred_check
        %p462 = pneg %p127
      $region38: #{basic_block.5} parent=35 // pred_check_branch
        %464 = sbr.rel (%p462) target = $region40
      $region39: #{basic_block.5} parent=35 // pred_region
        _
      $region40: #{basic_block.5} parent=35 // pred_fallthru
        _
    $region36: #{basic_block.5} parent=5 // pred_fallthru
      _
    %p465 = scmp.le.s32.totalorder 2, %s10
    // Predicated region
    $region41: #{basic_block.5} parent=5 // pred_check
      %p466 = pneg %p465
    $region42: #{basic_block.5} parent=5 // pred_check_branch
      %468 = sbr.rel (%p466) target = $region44
    $region43: #{basic_block.5} parent=5 // pred_region
      %s469 = ssub.s32 %s10, 2
      // Predicated region
      $region45: #{basic_block.5} parent=43 // pred_check
        %p470 = pneg %p133
      $region46: #{basic_block.5} parent=43 // pred_check_branch
        %472 = sbr.rel (%p470) target = $region48
      $region47: #{basic_block.5} parent=43 // pred_region
        %p473 = scmp.lt.s32.totalorder %s16, 1
        %s474 = scalar_select %p473, %s16, 1
        %s475 = smul.addr %s474, 32
        %s476 = smul.addr %s475, 8
        %s477 = scalar_lea.vmem %s4, %s476
      $region48: #{basic_block.5} parent=43 // pred_fallthru
        _
    $region44: #{basic_block.5} parent=5 // pred_fallthru
      _
  $region6: #{basic_block.5} parent=0 // loop_footer
    %s14 = sadd.s32 1, %s10
  $region7: #{basic_block.5} parent=0 // loop_footer_branch
    %9 = sbr.rel target = $region3
  $region8: #{basic_block.5} parent=0 // loop_exit
    _

// kernel: basic_block.3
$region0: #{basic_block.3}
  #allocation0 [shape = 'u32[]', space=smem, size = 0x4, offset = 0x4, fixed_abs, tag = 'smem constant byte address 0x4 - core index']
  #allocation1 [shape = 'u32[144,128]{1,0:T(1,128)}', space=vmem, size = 0x12000, scoped, tag = 'internal scratch']
  #allocation2 [shape = 'f32[1,18,18,4]{3,2,1,0:T(8,128)}', space=vmem, size = 0x36000, scoped, tag = 'scratch operand']
  %s0 = inlined_call_operand.vmem [shape: f32[2,16,16,4], index: 0, kind: input, shape index: {}]
  %s1 = inlined_call_operand.vmem [shape: f32[36,4], index: 1, kind: input, shape index: {}]
  %s2 = inlined_call_operand.vmem [shape: f32[2,16,16,4], index: 2, kind: output, shape index: {0}]
  %s3 = inlined_call_operand.vmem [shape: f32[2,2,4], index: 3, kind: output, shape index: {1}]
  %4 = xla_tuple %s2, %s3
  %s5 = sld [smem:[#allocation0]]
  $region49: #{basic_block.3} parent=0
    _
  %s7 = ssub.s32 1, %s5
  %s8 = scalar_select 0, %s7, %s5
  loop: start=0, step=1, limit=4
  $region2: #{basic_block.3} parent=0 // loop_pre_header
    _
  $region3: #{basic_block.3} parent=0 // loop_header
    %s10 = sphi 0, %s14
    %p11 = scmp.ge.s32.totalorder %s10, 4
    %s20 = sphi 0, %s22
    %s23 = sphi 0, %s20
    %s24 = sphi 0, %s23
    %s40 = sphi 0, %s24
    %s44 = sphi 0, %s44
    %s46 = sphi 0, %s44
    %s47 = sphi 0, %s46
    %s61 = sphi 0, %s47
    %s67 = sphi 0, %s69
    %s70 = sphi 0, %s67
    %s71 = sphi 0, %s70
    %s87 = sphi 0, %s71
    %s93 = sphi 0, %s95
    %s96 = sphi 0, %s93
    %s97 = sphi 0, %s96
    %s113 = sphi 0, %s97
  $region4: #{basic_block.3} parent=0 // loop_header_branch
    %13 = sbr.rel (%p11) target = $region8
  $region5: #{basic_block.3} parent=0 // loop_body
    %s15 = ssub.s32 %s10, 1
    %s16 = ssub.s32 %s10, 2
    %s17 = sadd.s32 %s10, 1
    %s18 = ssub.s32 %s10, %s17
    %p19 = scmp.eq.s32.totalorder %s18, 0
    %s21 = sadd.s32 %s20, 1
    %s22 = scalar_select %p19, %s20, %s21
    %p25 = pneg %p19
    %p26 = scmp.eq.s32.totalorder %s10, 1
    %p27 = por %p25, %p26
    %p28 = scmp.ne.s32.totalorder %s20, %s23
    %p29 = scmp.eq.s32.totalorder %s10, 0
    %p30 = por %p28, %p29
    %p31 = scmp.ne.s32.totalorder %s20, %s23
    %p32 = scmp.eq.s32.totalorder %s15, 1
    %p33 = por %p31, %p32
    %p34 = scmp.ne.s32.totalorder %s23, %s24
    %p35 = scmp.eq.s32.totalorder %s15, 0
    %p36 = por %p34, %p35
    %p37 = scmp.ne.s32.totalorder %s23, %s24
    %p38 = scmp.eq.s32.totalorder %s16, 1
    %p39 = por %p37, %p38
    %p41 = scmp.ne.s32.totalorder %s24, %s40
    %p42 = scmp.eq.s32.totalorder %s16, 0
    %p43 = por %p41, %p42
    %s45 = sadd.s32 %s44, 1
    %p48 = scmp.eq.s32.totalorder %s10, 1
    %p49 = scmp.ne.s32.totalorder %s44, %s46
    %p50 = scmp.eq.s32.totalorder %s10, 0
    %p51 = por %p49, %p50
    %p52 = scmp.ne.s32.totalorder %s44, %s46
    %p53 = scmp.eq.s32.totalorder %s15, 1
    %p54 = por %p52, %p53
    %p55 = scmp.ne.s32.totalorder %s46, %s47
    %p56 = scmp.eq.s32.totalorder %s15, 0
    %p57 = por %p55, %p56
    %p58 = scmp.ne.s32.totalorder %s46, %s47
    %p59 = scmp.eq.s32.totalorder %s16, 1
    %p60 = por %p58, %p59
    %p62 = scmp.ne.s32.totalorder %s47, %s61
    %p63 = scmp.eq.s32.totalorder %s16, 0
    %p64 = por %p62, %p63
    %s65 = ssub.s32 %s10, %s17
    %p66 = scmp.eq.s32.totalorder %s65, 0
    %s68 = sadd.s32 %s67, 1
    %s69 = scalar_select %p66, %s67, %s68
    %p72 = pneg %p66
    %p73 = scmp.eq.s32.totalorder %s10, 1
    %p74 = por %p72, %p73
    %p75 = scmp.ne.s32.totalorder %s67, %s70
    %p76 = scmp.eq.s32.totalorder %s10, 0
    %p77 = por %p75, %p76
    %p78 = scmp.ne.s32.totalorder %s67, %s70
    %p79 = scmp.eq.s32.totalorder %s15, 1
    %p80 = por %p78, %p79
    %p81 = scmp.ne.s32.totalorder %s70, %s71
    %p82 = scmp.eq.s32.totalorder %s15, 0
    %p83 = por %p81, %p82
    %p84 = scmp.ne.s32.totalorder %s70, %s71
    %p85 = scmp.eq.s32.totalorder %s16, 1
    %p86 = por %p84, %p85
    %p88 = scmp.ne.s32.totalorder %s71, %s87
    %p89 = scmp.eq.s32.totalorder %s16, 0
    %p90 = por %p88, %p89
    %s91 = ssub.s32 %s10, %s17
    %p92 = scmp.eq.s32.totalorder %s91, 0
    %s94 = sadd.s32 %s93, 1
    %s95 = scalar_select %p92, %s93, %s94
    %p98 = pneg %p92
    %p99 = scmp.eq.s32.totalorder %s10, 1
    %p100 = por %p98, %p99
    %p101 = scmp.ne.s32.totalorder %s93, %s96
    %p102 = scmp.eq.s32.totalorder %s10, 0
    %p103 = por %p101, %p102
    %p104 = scmp.ne.s32.totalorder %s93, %s96
    %p105 = scmp.eq.s32.totalorder %s15, 1
    %p106 = por %p104, %p105
    %p107 = scmp.ne.s32.totalorder %s96, %s97
    %p108 = scmp.eq.s32.totalorder %s15, 0
    %p109 = por %p107, %p108
    %p110 = scmp.ne.s32.totalorder %s96, %s97
    %p111 = scmp.eq.s32.totalorder %s16, 1
    %p112 = por %p110, %p111
    %p114 = scmp.ne.s32.totalorder %s97, %s113
    %p115 = scmp.eq.s32.totalorder %s16, 0
    %p116 = por %p114, %p115
    %p117 = scmp.le.s32.totalorder 1, %s10
    %p118 = scmp.lt.s32.totalorder %s10, 3
    %p119 = pnand %p117, %p118
    %p120 = pneg %p119
    // Predicated region
    $region9: #{basic_block.3} parent=5 // pred_check
      _
    $region10: #{basic_block.3} parent=5 // pred_check_branch
      %122 = sbr.rel (%p119) target = $region12
    $region11: #{basic_block.3} parent=5 // pred_region
      %s123 = ssub.s32 %s10, 1
      // Predicated region
      $region13: #{basic_block.3} parent=11 // pred_check
        %p124 = pneg %p57
      $region14: #{basic_block.3} parent=11 // pred_check_branch
        %126 = sbr.rel (%p124) target = $region16
      $region15: #{basic_block.3} parent=11 // pred_region
        _
      $region16: #{basic_block.3} parent=11 // pred_fallthru
        _
    $region12: #{basic_block.3} parent=5 // pred_fallthru
      _
    %p127 = scmp.lt.s32.totalorder %s10, 2
    // Predicated region
    $region17: #{basic_block.3} parent=5 // pred_check
      %p128 = pneg %p127
    $region18: #{basic_block.3} parent=5 // pred_check_branch
      %130 = sbr.rel (%p128) target = $region20
    $region19: #{basic_block.3} parent=5 // pred_region
      // Predicated region
      $region21: #{basic_block.3} parent=19 // pred_check
        %p131 = pneg %p30
      $region22: #{basic_block.3} parent=19 // pred_check_branch
        %133 = sbr.rel (%p131) target = $region24
      $region23: #{basic_block.3} parent=19 // pred_region
        %p134 = scmp.lt.s32.totalorder %s10, 1
        %s135 = scalar_select %p134, %s10, 1
        %s136 = smul.addr %s135, 32
        %s137 = smul.addr %s136, 8
        %s138 = scalar_lea.vmem %s0, %s137
      $region24: #{basic_block.3} parent=19 // pred_fallthru
        _
    $region20: #{basic_block.3} parent=5 // pred_fallthru
      _
    %p139 = scmp.le.s32.totalorder 1, %s10
    %p140 = scmp.lt.s32.totalorder %s10, 3
    %p141 = pnand %p139, %p140
    %p142 = pneg %p141
    // Predicated region
    $region25: #{basic_block.3} parent=5 // pred_check
      _
    $region26: #{basic_block.3} parent=5 // pred_check_branch
      %144 = sbr.rel (%p141) target = $region28
    $region27: #{basic_block.3} parent=5 // pred_region
      %s145 = ssub.s32 %s10, 1
      %p146 = scmp.lt.s32.totalorder %s15, 1
      %s147 = scalar_select %p146, %s15, 1
      %s148 = smul.addr %s147, 32
      %s149 = smul.addr %s148, 8
      %s150 = scalar_lea.vmem %s0, %s149
      %p151 = pneg %p36
      %p152 = pneg %p33
      %p153 = pneg %p57
      %p154 = pneg %p54
      %p155 = pneg %p83
      %p156 = pneg %p80
      %p157 = scmp.lt.s32.totalorder %s15, 1
      %s158 = scalar_select %p157, %s15, 1
      %s159 = smul.addr %s158, 32
      %s160 = smul.addr %s159, 8
      %s161 = scalar_lea.vmem %s2, %s160
      %p162 = pneg %p109
      %p163 = pneg %p106
      %p164 = scmp.lt.s32.totalorder %s15, 1
      %s165 = scalar_select %p164, %s15, 1
      %s166 = smul.addr %s165, 2
      %s167 = scalar_lea.vmem %s3, %s166
      %p168 = scmp.lt.s32.totalorder %s15, 1
      %s169 = scalar_select %p168, %s15, 1
      %s170 = smul.addr %s169, 32
      %s171 = smul.addr %s170, 8
      %s172 = scalar_lea.vmem %s0, %s171
      %p173 = scmp.lt.s32.totalorder %s15, 1
      %s174 = scalar_select %p173, %s15, 1
      %s175 = smul.addr %s174, 32
      %s176 = smul.addr %s175, 8
      %s177 = scalar_lea.vmem %s2, %s176
      %p178 = scmp.lt.s32.totalorder %s15, 1
      %s179 = scalar_select %p178, %s15, 1
      %s180 = smul.addr %s179, 2
      %s181 = scalar_lea.vmem %s3, %s180
      %v182 = vld [vmem:[%s172] sm:$0xff]
      %v183 = vld [vmem:[%s172 + $0x8] sm:$0xff]
      %v184 = vld [vmem:[%s172 + $0x10] sm:$0xff]
      %v185 = vld [vmem:[%s172 + $0x18] sm:$0xff]
      %v186 = vld [vmem:[%s172 + $0x20] sm:$0xff]
      %v187 = vld [vmem:[%s172 + $0x28] sm:$0xff]
      %v188 = vld [vmem:[%s172 + $0x30] sm:$0xff]
      %v189 = vld [vmem:[%s172 + $0x38] sm:$0xff]
      %v190 = vld [vmem:[%s172 + $0x40] sm:$0xff]
      %v191 = vld [vmem:[%s172 + $0x48] sm:$0xff]
      %v192 = vld [vmem:[%s172 + $0x50] sm:$0xff]
      %v193 = vld [vmem:[%s172 + $0x58] sm:$0xff]
      %v194 = vld [vmem:[%s172 + $0x60] sm:$0xff]
      %v195 = vld [vmem:[%s172 + $0x68] sm:$0xff]
      %v196 = vld [vmem:[%s172 + $0x70] sm:$0xff]
      %v197 = vld [vmem:[%s172 + $0x78] sm:$0xff]
      %v198 = vld [vmem:[%s172 + $0x80] sm:$0xff]
      %v199 = vld [vmem:[%s172 + $0x88] sm:$0xff]
      %v200 = vld [vmem:[%s172 + $0x90] sm:$0xff]
      %v201 = vld [vmem:[%s172 + $0x98] sm:$0xff]
      %v202 = vld [vmem:[%s172 + $0xa0] sm:$0xff]
      %v203 = vld [vmem:[%s172 + $0xa8] sm:$0xff]
      %v204 = vld [vmem:[%s172 + $0xb0] sm:$0xff]
      %v205 = vld [vmem:[%s172 + $0xb8] sm:$0xff]
      %v206 = vld [vmem:[%s172 + $0xc0] sm:$0xff]
      %v207 = vld [vmem:[%s172 + $0xc8] sm:$0xff]
      %v208 = vld [vmem:[%s172 + $0xd0] sm:$0xff]
      %v209 = vld [vmem:[%s172 + $0xd8] sm:$0xff]
      %v210 = vld [vmem:[%s172 + $0xe0] sm:$0xff]
      %v211 = vld [vmem:[%s172 + $0xe8] sm:$0xff]
      %v212 = vld [vmem:[%s172 + $0xf0] sm:$0xff]
      %v213 = vld [vmem:[%s172 + $0xf8] sm:$0xff]
      %vm214 = vcmask 31744
      %215 = vst.msk [vmem:[#allocation2] sm:$0xff] %vm214, 0.0
      %216 = vst.msk [vmem:[#allocation2 + $0x8] sm:$0xff] %vm214, 0.0
      %vm217 = vcmask 25600
      %218 = vst.msk [vmem:[#allocation2 + $0x10] sm:$0x3] %vm217, 0.0
      %s219 = scalar_lea.vmem [#allocation2], 408
      %220 = vst.msk [vmem:[%s219] sm:$0xff] %vm214, 0.0
      %221 = vst.msk [vmem:[%s219 + $0x8] sm:$0xff] %vm214, 0.0
      %222 = vst.msk [vmem:[%s219 + $0x10] sm:$0x3] %vm217, 0.0
      %s223 = scalar_lea.vmem [#allocation2], 24
      %vm224 = vcmask 24576
      %225 = vst.msk [vmem:[%s223] sm:$0x1] %vm224, 0.0
      %226 = vst.msk [vmem:[%s223 + $0x18] sm:$0x1] %vm224, 0.0
      %227 = vst.msk [vmem:[%s223 + $0x30] sm:$0x1] %vm224, 0.0
      %228 = vst.msk [vmem:[%s223 + $0x48] sm:$0x1] %vm224, 0.0
      %229 = vst.msk [vmem:[%s223 + $0x60] sm:$0x1] %vm224, 0.0
      %230 = vst.msk [vmem:[%s223 + $0x78] sm:$0x1] %vm224, 0.0
      %231 = vst.msk [vmem:[%s223 + $0x90] sm:$0x1] %vm224, 0.0
      %232 = vst.msk [vmem:[%s223 + $0xa8] sm:$0x1] %vm224, 0.0
      %233 = vst.msk [vmem:[%s223 + $0xc0] sm:$0x1] %vm224, 0.0
      %234 = vst.msk [vmem:[%s223 + $0xd8] sm:$0x1] %vm224, 0.0
      %235 = vst.msk [vmem:[%s223 + $0xf0] sm:$0x1] %vm224, 0.0
      %236 = vst.msk [vmem:[%s223 + $0x108] sm:$0x1] %vm224, 0.0
      %237 = vst.msk [vmem:[%s223 + $0x120] sm:$0x1] %vm224, 0.0
      %238 = vst.msk [vmem:[%s223 + $0x138] sm:$0x1] %vm224, 0.0
      %239 = vst.msk [vmem:[%s223 + $0x150] sm:$0x1] %vm224, 0.0
      %240 = vst.msk [vmem:[%s223 + $0x168] sm:$0x1] %vm224, 0.0
      %241 = vst.msk [vmem:[%s223 + $0x11] sm:$0x1] %vm224, 0.0
      %242 = vst.msk [vmem:[%s223 + $0x29] sm:$0x1] %vm224, 0.0
      %243 = vst.msk [vmem:[%s223 + $0x41] sm:$0x1] %vm224, 0.0
      %244 = vst.msk [vmem:[%s223 + $0x59] sm:$0x1] %vm224, 0.0
      %245 = vst.msk [vmem:[%s223 + $0x71] sm:$0x1] %vm224, 0.0
      %246 = vst.msk [vmem:[%s223 + $0x89] sm:$0x1] %vm224, 0.0
      %247 = vst.msk [vmem:[%s223 + $0xa1] sm:$0x1] %vm224, 0.0
      %248 = vst.msk [vmem:[%s223 + $0xb9] sm:$0x1] %vm224, 0.0
      %249 = vst.msk [vmem:[%s223 + $0xd1] sm:$0x1] %vm224, 0.0
      %250 = vst.msk [vmem:[%s223 + $0xe9] sm:$0x1] %vm224, 0.0
      %251 = vst.msk [vmem:[%s223 + $0x101] sm:$0x1] %vm224, 0.0
      %252 = vst.msk [vmem:[%s223 + $0x119] sm:$0x1] %vm224, 0.0
      %253 = vst.msk [vmem:[%s223 + $0x131] sm:$0x1] %vm224, 0.0
      %254 = vst.msk [vmem:[%s223 + $0x149] sm:$0x1] %vm224, 0.0
      %255 = vst.msk [vmem:[%s223 + $0x161] sm:$0x1] %vm224, 0.0
      %256 = vst.msk [vmem:[%s223 + $0x179] sm:$0x1] %vm224, 0.0
      %257 = vst.msk [vmem:[%s223 + $0x1] sm:$0xff] %vm214, %v182
      %258 = vst.msk [vmem:[%s223 + $0x9] sm:$0xff] %vm214, %v183
      %259 = vst.msk [vmem:[%s223 + $0x19] sm:$0xff] %vm214, %v184
      %260 = vst.msk [vmem:[%s223 + $0x21] sm:$0xff] %vm214, %v185
      %261 = vst.msk [vmem:[%s223 + $0x31] sm:$0xff] %vm214, %v186
      %262 = vst.msk [vmem:[%s223 + $0x39] sm:$0xff] %vm214, %v187
      %263 = vst.msk [vmem:[%s223 + $0x49] sm:$0xff] %vm214, %v188
      %264 = vst.msk [vmem:[%s223 + $0x51] sm:$0xff] %vm214, %v189
      %265 = vst.msk [vmem:[%s223 + $0x61] sm:$0xff] %vm214, %v190
      %266 = vst.msk [vmem:[%s223 + $0x69] sm:$0xff] %vm214, %v191
      %267 = vst.msk [vmem:[%s223 + $0x79] sm:$0xff] %vm214, %v192
      %268 = vst.msk [vmem:[%s223 + $0x81] sm:$0xff] %vm214, %v193
      %269 = vst.msk [vmem:[%s223 + $0x91] sm:$0xff] %vm214, %v194
      %270 = vst.msk [vmem:[%s223 + $0x99] sm:$0xff] %vm214, %v195
      %271 = vst.msk [vmem:[%s223 + $0xa9] sm:$0xff] %vm214, %v196
      %272 = vst.msk [vmem:[%s223 + $0xb1] sm:$0xff] %vm214, %v197
      %273 = vst.msk [vmem:[%s223 + $0xc1] sm:$0xff] %vm214, %v198
      %274 = vst.msk [vmem:[%s223 + $0xc9] sm:$0xff] %vm214, %v199
      %275 = vst.msk [vmem:[%s223 + $0xd9] sm:$0xff] %vm214, %v200
      %276 = vst.msk [vmem:[%s223 + $0xe1] sm:$0xff] %vm214, %v201
      %277 = vst.msk [vmem:[%s223 + $0xf1] sm:$0xff] %vm214, %v202
      %278 = vst.msk [vmem:[%s223 + $0xf9] sm:$0xff] %vm214, %v203
      %279 = vst.msk [vmem:[%s223 + $0x109] sm:$0xff] %vm214, %v204
      %280 = vst.msk [vmem:[%s223 + $0x111] sm:$0xff] %vm214, %v205
      %281 = vst.msk [vmem:[%s223 + $0x121] sm:$0xff] %vm214, %v206
      %282 = vst.msk [vmem:[%s223 + $0x129] sm:$0xff] %vm214, %v207
      %283 = vst.msk [vmem:[%s223 + $0x139] sm:$0xff] %vm214, %v208
      %284 = vst.msk [vmem:[%s223 + $0x141] sm:$0xff] %vm214, %v209
      %285 = vst.msk [vmem:[%s223 + $0x151] sm:$0xff] %vm214, %v210
      %286 = vst.msk [vmem:[%s223 + $0x159] sm:$0xff] %vm214, %v211
      %287 = vst.msk [vmem:[%s223 + $0x169] sm:$0xff] %vm214, %v212
      %288 = vst.msk [vmem:[%s223 + $0x171] sm:$0xff] %vm214, %v213
      %v289 = vld [vmem:[#allocation2] sm:$0xff]
      %v290 = vld [vmem:[#allocation2 + $0x8] sm:$0xff]
      %v291 = vld [vmem:[#allocation2 + $0x18] sm:$0xff]
      %v292 = vld [vmem:[#allocation2 + $0x20] sm:$0xff]
      %v293 = vld [vmem:[#allocation2 + $0x30] sm:$0xff]
      %v294 = vld [vmem:[#allocation2 + $0x38] sm:$0xff]
      %v295 = vld [vmem:[#allocation2 + $0x48] sm:$0xff]
      %v296 = vld [vmem:[#allocation2 + $0x50] sm:$0xff]
      %v297 = vld [vmem:[#allocation2 + $0x60] sm:$0xff]
      %v298 = vld [vmem:[#allocation2 + $0x68] sm:$0xff]
      %v299 = vld [vmem:[#allocation2 + $0x78] sm:$0xff]
      %v300 = vld [vmem:[#allocation2 + $0x80] sm:$0xff]
      %v301 = vld [vmem:[#allocation2 + $0x90] sm:$0xff]
      %v302 = vld [vmem:[#allocation2 + $0x98] sm:$0xff]
      %v303 = vld [vmem:[#allocation2 + $0xa8] sm:$0xff]
      %v304 = vld [vmem:[#allocation2 + $0xb0] sm:$0xff]
      %v305 = vld [vmem:[#allocation2 + $0xc0] sm:$0xff]
      %v306 = vld [vmem:[#allocation2 + $0xc8] sm:$0xff]
      %v307 = vld [vmem:[#allocation2 + $0xd8] sm:$0xff]
      %v308 = vld [vmem:[#allocation2 + $0xe0] sm:$0xff]
      %v309 = vld [vmem:[#allocation2 + $0xf0] sm:$0xff]
      %v310 = vld [vmem:[#allocation2 + $0xf8] sm:$0xff]
      %v311 = vld [vmem:[#allocation2 + $0x108] sm:$0xff]
      %v312 = vld [vmem:[#allocation2 + $0x110] sm:$0xff]
      %v313 = vld [vmem:[#allocation2 + $0x120] sm:$0xff]
      %v314 = vld [vmem:[#allocation2 + $0x128] sm:$0xff]
      %v315 = vld [vmem:[#allocation2 + $0x138] sm:$0xff]
      %v316 = vld [vmem:[#allocation2 + $0x140] sm:$0xff]
      %v317 = vld [vmem:[#allocation2 + $0x150] sm:$0xff]
      %v318 = vld [vmem:[#allocation2 + $0x158] sm:$0xff]
      %v319 = vld [vmem:[#allocation2 + $0x168] sm:$0xff]
      %v320 = vld [vmem:[#allocation2 + $0x170] sm:$0xff]
      %v321 = vld [vmem:[#allocation2 + $0x1] sm:$0xff]
      %v322 = vld [vmem:[#allocation2 + $0x9] sm:$0xff]
      %v323 = vld [vmem:[#allocation2 + $0x19] sm:$0xff]
      %v324 = vld [vmem:[#allocation2 + $0x21] sm:$0xff]
      %v325 = vld [vmem:[#allocation2 + $0x31] sm:$0xff]
      %v326 = vld [vmem:[#allocation2 + $0x39] sm:$0xff]
      %v327 = vld [vmem:[#allocation2 + $0x49] sm:$0xff]
      %v328 = vld [vmem:[#allocation2 + $0x51] sm:$0xff]
      %v329 = vld [vmem:[#allocation2 + $0x61] sm:$0xff]
      %v330 = vld [vmem:[#allocation2 + $0x69] sm:$0xff]
      %v331 = vld [vmem:[#allocation2 + $0x79] sm:$0xff]
      %v332 = vld [vmem:[#allocation2 + $0x81] sm:$0xff]
      %v333 = vld [vmem:[#allocation2 + $0x91] sm:$0xff]
      %v334 = vld [vmem:[#allocation2 + $0x99] sm:$0xff]
      %v335 = vld [vmem:[#allocation2 + $0xa9] sm:$0xff]
      %v336 = vld [vmem:[#allocation2 + $0xb1] sm:$0xff]
      %v337 = vld [vmem:[#allocation2 + $0xc1] sm:$0xff]
      %v338 = vld [vmem:[#allocation2 + $0xc9] sm:$0xff]
      %v339 = vld [vmem:[#allocation2 + $0xd9] sm:$0xff]
      %v340 = vld [vmem:[#allocation2 + $0xe1] sm:$0xff]
      %v341 = vld [vmem:[#allocation2 + $0xf1] sm:$0xff]
      %v342 = vld [vmem:[#allocation2 + $0xf9] sm:$0xff]
      %v343 = vld [vmem:[#allocation2 + $0x109] sm:$0xff]
      %v344 = vld [vmem:[#allocation2 + $0x111] sm:$0xff]
      %v345 = vld [vmem:[#allocation2 + $0x121] sm:$0xff]
      %v346 = vld [vmem:[#allocation2 + $0x129] sm:$0xff]
      %v347 = vld [vmem:[#allocation2 + $0x139] sm:$0xff]
      %v348 = vld [vmem:[#allocation2 + $0x141] sm:$0xff]
      %v349 = vld [vmem:[#allocation2 + $0x151] sm:$0xff]
      %v350 = vld [vmem:[#allocation2 + $0x159] sm:$0xff]
      %v351 = vld [vmem:[#allocation2 + $0x169] sm:$0xff]
      %v352 = vld [vmem:[#allocation2 + $0x171] sm:$0xff]
      %v353 = vld [vmem:[#allocation2 + $0x2] sm:$0xff]
      %v354 = vld [vmem:[#allocation2 + $0xa] sm:$0xff]
      %v355 = vld [vmem:[#allocation2 + $0x1a] sm:$0xff]
      %v356 = vld [vmem:[#allocation2 + $0x22] sm:$0xff]
      %v357 = vld [vmem:[#allocation2 + $0x32] sm:$0xff]
      %v358 = vld [vmem:[#allocation2 + $0x3a] sm:$0xff]
      %v359 = vld [vmem:[#allocation2 + $0x4a] sm:$0xff]
      %v360 = vld [vmem:[#allocation2 + $0x52] sm:$0xff]
      %v361 = vld [vmem:[#allocation2 + $0x62] sm:$0xff]
      %v362 = vld [vmem:[#allocation2 + $0x6a] sm:$0xff]
      %v363 = vld [vmem:[#allocation2 + $0x7a] sm:$0xff]
      %v364 = vld [vmem:[#allocation2 + $0x82] sm:$0xff]
      %v365 = vld [vmem:[#allocation2 + $0x92] sm:$0xff]
      %v366 = vld [vmem:[#allocation2 + $0x9a] sm:$0xff]
      %v367 = vld [vmem:[#allocation2 + $0xaa] sm:$0xff]
      %v368 = vld [vmem:[#allocation2 + $0xb2] sm:$0xff]
      %v369 = vld [vmem:[#allocation2 + $0xc2] sm:$0xff]
      %v370 = vld [vmem:[#allocation2 + $0xca] sm:$0xff]
      %v371 = vld [vmem:[#allocation2 + $0xda] sm:$0xff]
      %v372 = vld [vmem:[#allocation2 + $0xe2] sm:$0xff]
      %v373 = vld [vmem:[#allocation2 + $0xf2] sm:$0xff]
      %v374 = vld [vmem:[#allocation2 + $0xfa] sm:$0xff]
      %v375 = vld [vmem:[#allocation2 + $0x10a] sm:$0xff]
      %v376 = vld [vmem:[#allocation2 + $0x112] sm:$0xff]
      %v377 = vld [vmem:[#allocation2 + $0x122] sm:$0xff]
      %v378 = vld [vmem:[#allocation2 + $0x12a] sm:$0xff]
      %v379 = vld [vmem:[#allocation2 + $0x13a] sm:$0xff]
      %v380 = vld [vmem:[#allocation2 + $0x142] sm:$0xff]
      %v381 = vld [vmem:[#allocation2 + $0x152] sm:$0xff]
      %v382 = vld [vmem:[#allocation2 + $0x15a] sm:$0xff]
      %v383 = vld [vmem:[#allocation2 + $0x16a] sm:$0xff]
      %v384 = vld [vmem:[#allocation2 + $0x172] sm:$0xff]
      %v385 = vld [vmem:[%s223] sm:$0xff]
      %v386 = vld [vmem:[%s223 + $0x8] sm:$0xff]
      %v387 = vld [vmem:[%s223 + $0x18] sm:$0xff]
      %v388 = vld [vmem:[%s223 + $0x20] sm:$0xff]
      %v389 = vld [vmem:[%s223 + $0x30] sm:$0xff]
      %v390 = vld [vmem:[%s223 + $0x38] sm:$0xff]
      %v391 = vld [vmem:[%s223 + $0x48] sm:$0xff]
      %v392 = vld [vmem:[%s223 + $0x50] sm:$0xff]
      %v393 = vld [vmem:[%s223 + $0x60] sm:$0xff]
      %v394 = vld [vmem:[%s223 + $0x68] sm:$0xff]
      %v395 = vld [vmem:[%s223 + $0x78] sm:$0xff]
      %v396 = vld [vmem:[%s223 + $0x80] sm:$0xff]
      %v397 = vld [vmem:[%s223 + $0x90] sm:$0xff]
      %v398 = vld [vmem:[%s223 + $0x98] sm:$0xff]
      %v399 = vld [vmem:[%s223 + $0xa8] sm:$0xff]
      %v400 = vld [vmem:[%s223 + $0xb0] sm:$0xff]
      %v401 = vld [vmem:[%s223 + $0xc0] sm:$0xff]
      %v402 = vld [vmem:[%s223 + $0xc8] sm:$0xff]
      %v403 = vld [vmem:[%s223 + $0xd8] sm:$0xff]
      %v404 = vld [vmem:[%s223 + $0xe0] sm:$0xff]
      %v405 = vld [vmem:[%s223 + $0xf0] sm:$0xff]
      %v406 = vld [vmem:[%s223 + $0xf8] sm:$0xff]
      %v407 = vld [vmem:[%s223 + $0x108] sm:$0xff]
      %v408 = vld [vmem:[%s223 + $0x110] sm:$0xff]
      %v409 = vld [vmem:[%s223 + $0x120] sm:$0xff]
      %v410 = vld [vmem:[%s223 + $0x128] sm:$0xff]
      %v411 = vld [vmem:[%s223 + $0x138] sm:$0xff]
      %v412 = vld [vmem:[%s223 + $0x140] sm:$0xff]
      %v413 = vld [vmem:[%s223 + $0x150] sm:$0xff]
      %v414 = vld [vmem:[%s223 + $0x158] sm:$0xff]
      %v415 = vld [vmem:[%s223 + $0x168] sm:$0xff]
      %v416 = vld [vmem:[%s223 + $0x170] sm:$0xff]
      %v417 = vld [vmem:[%s223 + $0x1] sm:$0xff]
      %v418 = vld [vmem:[%s223 + $0x9] sm:$0xff]
      %v419 = vld [vmem:[%s223 + $0x19] sm:$0xff]
      %v420 = vld [vmem:[%s223 + $0x21] sm:$0xff]
      %v421 = vld [vmem:[%s223 + $0x31] sm:$0xff]
      %v422 = vld [vmem:[%s223 + $0x39] sm:$0xff]
      %v423 = vld [vmem:[%s223 + $0x49] sm:$0xff]
      %v424 = vld [vmem:[%s223 + $0x51] sm:$0xff]
      %v425 = vld [vmem:[%s223 + $0x61] sm:$0xff]
      %v426 = vld [vmem:[%s223 + $0x69] sm:$0xff]
      %v427 = vld [vmem:[%s223 + $0x79] sm:$0xff]
      %v428 = vld [vmem:[%s223 + $0x81] sm:$0xff]
      %v429 = vld [vmem:[%s223 + $0x91] sm:$0xff]
      %v430 = vld [vmem:[%s223 + $0x99] sm:$0xff]
      %v431 = vld [vmem:[%s223 + $0xa9] sm:$0xff]
      %v432 = vld [vmem:[%s223 + $0xb1] sm:$0xff]
      %v433 = vld [vmem:[%s223 + $0xc1] sm:$0xff]
      %v434 = vld [vmem:[%s223 + $0xc9] sm:$0xff]
      %v435 = vld [vmem:[%s223 + $0xd9] sm:$0xff]
      %v436 = vld [vmem:[%s223 + $0xe1] sm:$0xff]
      %v437 = vld [vmem:[%s223 + $0xf1] sm:$0xff]
      %v438 = vld [vmem:[%s223 + $0xf9] sm:$0xff]
      %v439 = vld [vmem:[%s223 + $0x109] sm:$0xff]
      %v440 = vld [vmem:[%s223 + $0x111] sm:$0xff]
      %v441 = vld [vmem:[%s223 + $0x121] sm:$0xff]
      %v442 = vld [vmem:[%s223 + $0x129] sm:$0xff]
      %v443 = vld [vmem:[%s223 + $0x139] sm:$0xff]
      %v444 = vld [vmem:[%s223 + $0x141] sm:$0xff]
      %v445 = vld [vmem:[%s223 + $0x151] sm:$0xff]
      %v446 = vld [vmem:[%s223 + $0x159] sm:$0xff]
      %v447 = vld [vmem:[%s223 + $0x169] sm:$0xff]
      %v448 = vld [vmem:[%s223 + $0x171] sm:$0xff]
      %v449 = vld [vmem:[%s223 + $0x2] sm:$0xff]
      %v450 = vld [vmem:[%s223 + $0xa] sm:$0xff]
      %v451 = vld [vmem:[%s223 + $0x1a] sm:$0xff]
      %v452 = vld [vmem:[%s223 + $0x22] sm:$0xff]
      %v453 = vld [vmem:[%s223 + $0x32] sm:$0xff]
      %v454 = vld [vmem:[%s223 + $0x3a] sm:$0xff]
      %v455 = vld [vmem:[%s223 + $0x4a] sm:$0xff]
      %v456 = vld [vmem:[%s223 + $0x52] sm:$0xff]
      %v457 = vld [vmem:[%s223 + $0x62] sm:$0xff]
      %v458 = vld [vmem:[%s223 + $0x6a] sm:$0xff]
      %v459 = vld [vmem:[%s223 + $0x7a] sm:$0xff]
      %v460 = vld [vmem:[%s223 + $0x82] sm:$0xff]
      %v461 = vld [vmem:[%s223 + $0x92] sm:$0xff]
      %v462 = vld [vmem:[%s223 + $0x9a] sm:$0xff]
      %v463 = vld [vmem:[%s223 + $0xaa] sm:$0xff]
      %v464 = vld [vmem:[%s223 + $0xb2] sm:$0xff]
      %v465 = vld [vmem:[%s223 + $0xc2] sm:$0xff]
      %v466 = vld [vmem:[%s223 + $0xca] sm:$0xff]
      %v467 = vld [vmem:[%s223 + $0xda] sm:$0xff]
      %v468 = vld [vmem:[%s223 + $0xe2] sm:$0xff]
      %v469 = vld [vmem:[%s223 + $0xf2] sm:$0xff]
      %v470 = vld [vmem:[%s223 + $0xfa] sm:$0xff]
      %v471 = vld [vmem:[%s223 + $0x10a] sm:$0xff]
      %v472 = vld [vmem:[%s223 + $0x112] sm:$0xff]
      %v473 = vld [vmem:[%s223 + $0x122] sm:$0xff]
      %v474 = vld [vmem:[%s223 + $0x12a] sm:$0xff]
      %v475 = vld [vmem:[%s223 + $0x13a] sm:$0xff]
      %v476 = vld [vmem:[%s223 + $0x142] sm:$0xff]
      %v477 = vld [vmem:[%s223 + $0x152] sm:$0xff]
      %v478 = vld [vmem:[%s223 + $0x15a] sm:$0xff]
      %v479 = vld [vmem:[%s223 + $0x16a] sm:$0xff]
      %v480 = vld [vmem:[%s223 + $0x172] sm:$0xff]
      %s481 = scalar_lea.vmem [#allocation2], 48
      %v482 = vld [vmem:[%s481] sm:$0xff]
      %v483 = vld [vmem:[%s481 + $0x8] sm:$0xff]
      %v484 = vld [vmem:[%s481 + $0x18] sm:$0xff]
      %v485 = vld [vmem:[%s481 + $0x20] sm:$0xff]
      %v486 = vld [vmem:[%s481 + $0x30] sm:$0xff]
      %v487 = vld [vmem:[%s481 + $0x38] sm:$0xff]
      %v488 = vld [vmem:[%s481 + $0x48] sm:$0xff]
      %v489 = vld [vmem:[%s481 + $0x50] sm:$0xff]
      %v490 = vld [vmem:[%s481 + $0x60] sm:$0xff]
      %v491 = vld [vmem:[%s481 + $0x68] sm:$0xff]
      %v492 = vld [vmem:[%s481 + $0x78] sm:$0xff]
      %v493 = vld [vmem:[%s481 + $0x80] sm:$0xff]
      %v494 = vld [vmem:[%s481 + $0x90] sm:$0xff]
      %v495 = vld [vmem:[%s481 + $0x98] sm:$0xff]
      %v496 = vld [vmem:[%s481 + $0xa8] sm:$0xff]
      %v497 = vld [vmem:[%s481 + $0xb0] sm:$0xff]
      %v498 = vld [vmem:[%s481 + $0xc0] sm:$0xff]
      %v499 = vld [vmem:[%s481 + $0xc8] sm:$0xff]
      %v500 = vld [vmem:[%s481 + $0xd8] sm:$0xff]
      %v501 = vld [vmem:[%s481 + $0xe0] sm:$0xff]
      %v502 = vld [vmem:[%s481 + $0xf0] sm:$0xff]
      %v503 = vld [vmem:[%s481 + $0xf8] sm:$0xff]
      %v504 = vld [vmem:[%s481 + $0x108] sm:$0xff]
      %v505 = vld [vmem:[%s481 + $0x110] sm:$0xff]
      %v506 = vld [vmem:[%s481 + $0x120] sm:$0xff]
      %v507 = vld [vmem:[%s481 + $0x128] sm:$0xff]
      %v508 = vld [vmem:[%s481 + $0x138] sm:$0xff]
      %v509 = vld [vmem:[%s481 + $0x140] sm:$0xff]
      %v510 = vld [vmem:[%s481 + $0x150] sm:$0xff]
      %v511 = vld [vmem:[%s481 + $0x158] sm:$0xff]
      %v512 = vld [vmem:[%s481 + $0x168] sm:$0xff]
      %v513 = vld [vmem:[%s481 + $0x170] sm:$0xff]
      %v514 = vld [vmem:[%s481 + $0x1] sm:$0xff]
      %v515 = vld [vmem:[%s481 + $0x9] sm:$0xff]
      %v516 = vld [vmem:[%s481 + $0x19] sm:$0xff]
      %v517 = vld [vmem:[%s481 + $0x21] sm:$0xff]
      %v518 = vld [vmem:[%s481 + $0x31] sm:$0xff]
      %v519 = vld [vmem:[%s481 + $0x39] sm:$0xff]
      %v520 = vld [vmem:[%s481 + $0x49] sm:$0xff]
      %v521 = vld [vmem:[%s481 + $0x51] sm:$0xff]
      %v522 = vld [vmem:[%s481 + $0x61] sm:$0xff]
      %v523 = vld [vmem:[%s481 + $0x69] sm:$0xff]
      %v524 = vld [vmem:[%s481 + $0x79] sm:$0xff]
      %v525 = vld [vmem:[%s481 + $0x81] sm:$0xff]
      %v526 = vld [vmem:[%s481 + $0x91] sm:$0xff]
      %v527 = vld [vmem:[%s481 + $0x99] sm:$0xff]
      %v528 = vld [vmem:[%s481 + $0xa9] sm:$0xff]
      %v529 = vld [vmem:[%s481 + $0xb1] sm:$0xff]
      %v530 = vld [vmem:[%s481 + $0xc1] sm:$0xff]
      %v531 = vld [vmem:[%s481 + $0xc9] sm:$0xff]
      %v532 = vld [vmem:[%s481 + $0xd9] sm:$0xff]
      %v533 = vld [vmem:[%s481 + $0xe1] sm:$0xff]
      %v534 = vld [vmem:[%s481 + $0xf1] sm:$0xff]
      %v535 = vld [vmem:[%s481 + $0xf9] sm:$0xff]
      %v536 = vld [vmem:[%s481 + $0x109] sm:$0xff]
      %v537 = vld [vmem:[%s481 + $0x111] sm:$0xff]
      %v538 = vld [vmem:[%s481 + $0x121] sm:$0xff]
      %v539 = vld [vmem:[%s481 + $0x129] sm:$0xff]
      %v540 = vld [vmem:[%s481 + $0x139] sm:$0xff]
      %v541 = vld [vmem:[%s481 + $0x141] sm:$0xff]
      %v542 = vld [vmem:[%s481 + $0x151] sm:$0xff]
      %v543 = vld [vmem:[%s481 + $0x159] sm:$0xff]
      %v544 = vld [vmem:[%s481 + $0x169] sm:$0xff]
      %v545 = vld [vmem:[%s481 + $0x171] sm:$0xff]
      %v546 = vld [vmem:[%s481 + $0x2] sm:$0xff]
      %v547 = vld [vmem:[%s481 + $0xa] sm:$0xff]
      %v548 = vld [vmem:[%s481 + $0x1a] sm:$0xff]
      %v549 = vld [vmem:[%s481 + $0x22] sm:$0xff]
      %v550 = vld [vmem:[%s481 + $0x32] sm:$0xff]
      %v551 = vld [vmem:[%s481 + $0x3a] sm:$0xff]
      %v552 = vld [vmem:[%s481 + $0x4a] sm:$0xff]
      %v553 = vld [vmem:[%s481 + $0x52] sm:$0xff]
      %v554 = vld [vmem:[%s481 + $0x62] sm:$0xff]
      %v555 = vld [vmem:[%s481 + $0x6a] sm:$0xff]
      %v556 = vld [vmem:[%s481 + $0x7a] sm:$0xff]
      %v557 = vld [vmem:[%s481 + $0x82] sm:$0xff]
      %v558 = vld [vmem:[%s481 + $0x92] sm:$0xff]
      %v559 = vld [vmem:[%s481 + $0x9a] sm:$0xff]
      %v560 = vld [vmem:[%s481 + $0xaa] sm:$0xff]
      %v561 = vld [vmem:[%s481 + $0xb2] sm:$0xff]
      %v562 = vld [vmem:[%s481 + $0xc2] sm:$0xff]
      %v563 = vld [vmem:[%s481 + $0xca] sm:$0xff]
      %v564 = vld [vmem:[%s481 + $0xda] sm:$0xff]
      %v565 = vld [vmem:[%s481 + $0xe2] sm:$0xff]
      %v566 = vld [vmem:[%s481 + $0xf2] sm:$0xff]
      %v567 = vld [vmem:[%s481 + $0xfa] sm:$0xff]
      %v568 = vld [vmem:[%s481 + $0x10a] sm:$0xff]
      %v569 = vld [vmem:[%s481 + $0x112] sm:$0xff]
      %v570 = vld [vmem:[%s481 + $0x122] sm:$0xff]
      %v571 = vld [vmem:[%s481 + $0x12a] sm:$0xff]
      %v572 = vld [vmem:[%s481 + $0x13a] sm:$0xff]
      %v573 = vld [vmem:[%s481 + $0x142] sm:$0xff]
      %v574 = vld [vmem:[%s481 + $0x152] sm:$0xff]
      %v575 = vld [vmem:[%s481 + $0x15a] sm:$0xff]
      %v576 = vld [vmem:[%s481 + $0x16a] sm:$0xff]
      %v577 = vld [vmem:[%s481 + $0x172] sm:$0xff]
      %610 = vrot.lane.b32.xlu0 %v321, 4
      %v611 = vpop.permute.xlu0 %610
      %612 = vrot.lane.b32.xlu0 %v322, 4
      %v613 = vpop.permute.xlu0 %612
      %614 = vrot.lane.b32.xlu0 %v323, 4
      %v615 = vpop.permute.xlu0 %614
      %616 = vrot.lane.b32.xlu0 %v324, 4
      %v617 = vpop.permute.xlu0 %616
      %618 = vrot.lane.b32.xlu0 %v325, 4
      %v619 = vpop.permute.xlu0 %618
      %620 = vrot.lane.b32.xlu0 %v326, 4
      %v621 = vpop.permute.xlu0 %620
      %622 = vrot.lane.b32.xlu0 %v327, 4
      %v623 = vpop.permute.xlu0 %622
      %624 = vrot.lane.b32.xlu0 %v328, 4
      %v625 = vpop.permute.xlu0 %624
      %626 = vrot.lane.b32.xlu0 %v329, 4
      %v627 = vpop.permute.xlu0 %626
      %628 = vrot.lane.b32.xlu0 %v330, 4
      %v629 = vpop.permute.xlu0 %628
      %630 = vrot.lane.b32.xlu0 %v331, 4
      %v631 = vpop.permute.xlu0 %630
      %632 = vrot.lane.b32.xlu0 %v332, 4
      %v633 = vpop.permute.xlu0 %632
      %634 = vrot.lane.b32.xlu0 %v333, 4
      %v635 = vpop.permute.xlu0 %634
      %636 = vrot.lane.b32.xlu0 %v334, 4
      %v637 = vpop.permute.xlu0 %636
      %638 = vrot.lane.b32.xlu0 %v335, 4
      %v639 = vpop.permute.xlu0 %638
      %640 = vrot.lane.b32.xlu0 %v336, 4
      %v641 = vpop.permute.xlu0 %640
      %642 = vrot.lane.b32.xlu0 %v337, 4
      %v643 = vpop.permute.xlu0 %642
      %644 = vrot.lane.b32.xlu0 %v338, 4
      %v645 = vpop.permute.xlu0 %644
      %646 = vrot.lane.b32.xlu0 %v339, 4
      %v647 = vpop.permute.xlu0 %646
      %648 = vrot.lane.b32.xlu0 %v340, 4
      %v649 = vpop.permute.xlu0 %648
      %650 = vrot.lane.b32.xlu0 %v341, 4
      %v651 = vpop.permute.xlu0 %650
      %652 = vrot.lane.b32.xlu0 %v342, 4
      %v653 = vpop.permute.xlu0 %652
      %654 = vrot.lane.b32.xlu0 %v343, 4
      %v655 = vpop.permute.xlu0 %654
      %656 = vrot.lane.b32.xlu0 %v344, 4
      %v657 = vpop.permute.xlu0 %656
      %658 = vrot.lane.b32.xlu0 %v345, 4
      %v659 = vpop.permute.xlu0 %658
      %660 = vrot.lane.b32.xlu0 %v346, 4
      %v661 = vpop.permute.xlu0 %660
      %662 = vrot.lane.b32.xlu0 %v347, 4
      %v663 = vpop.permute.xlu0 %662
      %664 = vrot.lane.b32.xlu0 %v348, 4
      %v665 = vpop.permute.xlu0 %664
      %666 = vrot.lane.b32.xlu0 %v349, 4
      %v667 = vpop.permute.xlu0 %666
      %668 = vrot.lane.b32.xlu0 %v350, 4
      %v669 = vpop.permute.xlu0 %668
      %670 = vrot.lane.b32.xlu0 %v351, 4
      %v671 = vpop.permute.xlu0 %670
      %672 = vrot.lane.b32.xlu0 %v352, 4
      %v673 = vpop.permute.xlu0 %672
      %738 = vrot.lane.b32.xlu0 %v353, 8
      %v739 = vpop.permute.xlu0 %738
      %740 = vrot.lane.b32.xlu0 %v354, 8
      %v741 = vpop.permute.xlu0 %740
      %742 = vrot.lane.b32.xlu0 %v355, 8
      %v743 = vpop.permute.xlu0 %742
      %744 = vrot.lane.b32.xlu0 %v356, 8
      %v745 = vpop.permute.xlu0 %744
      %746 = vrot.lane.b32.xlu0 %v357, 8
      %v747 = vpop.permute.xlu0 %746
      %748 = vrot.lane.b32.xlu0 %v358, 8
      %v749 = vpop.permute.xlu0 %748
      %750 = vrot.lane.b32.xlu0 %v359, 8
      %v751 = vpop.permute.xlu0 %750
      %752 = vrot.lane.b32.xlu0 %v360, 8
      %v753 = vpop.permute.xlu0 %752
      %754 = vrot.lane.b32.xlu0 %v361, 8
      %v755 = vpop.permute.xlu0 %754
      %756 = vrot.lane.b32.xlu0 %v362, 8
      %v757 = vpop.permute.xlu0 %756
      %758 = vrot.lane.b32.xlu0 %v363, 8
      %v759 = vpop.permute.xlu0 %758
      %760 = vrot.lane.b32.xlu0 %v364, 8
      %v761 = vpop.permute.xlu0 %760
      %762 = vrot.lane.b32.xlu0 %v365, 8
      %v763 = vpop.permute.xlu0 %762
      %764 = vrot.lane.b32.xlu0 %v366, 8
      %v765 = vpop.permute.xlu0 %764
      %766 = vrot.lane.b32.xlu0 %v367, 8
      %v767 = vpop.permute.xlu0 %766
      %768 = vrot.lane.b32.xlu0 %v368, 8
      %v769 = vpop.permute.xlu0 %768
      %770 = vrot.lane.b32.xlu0 %v369, 8
      %v771 = vpop.permute.xlu0 %770
      %772 = vrot.lane.b32.xlu0 %v370, 8
      %v773 = vpop.permute.xlu0 %772
      %774 = vrot.lane.b32.xlu0 %v371, 8
      %v775 = vpop.permute.xlu0 %774
      %776 = vrot.lane.b32.xlu0 %v372, 8
      %v777 = vpop.permute.xlu0 %776
      %778 = vrot.lane.b32.xlu0 %v373, 8
      %v779 = vpop.permute.xlu0 %778
      %780 = vrot.lane.b32.xlu0 %v374, 8
      %v781 = vpop.permute.xlu0 %780
      %782 = vrot.lane.b32.xlu0 %v375, 8
      %v783 = vpop.permute.xlu0 %782
      %784 = vrot.lane.b32.xlu0 %v376, 8
      %v785 = vpop.permute.xlu0 %784
      %786 = vrot.lane.b32.xlu0 %v377, 8
      %v787 = vpop.permute.xlu0 %786
      %788 = vrot.lane.b32.xlu0 %v378, 8
      %v789 = vpop.permute.xlu0 %788
      %790 = vrot.lane.b32.xlu0 %v379, 8
      %v791 = vpop.permute.xlu0 %790
      %792 = vrot.lane.b32.xlu0 %v380, 8
      %v793 = vpop.permute.xlu0 %792
      %794 = vrot.lane.b32.xlu0 %v381, 8
      %v795 = vpop.permute.xlu0 %794
      %796 = vrot.lane.b32.xlu0 %v382, 8
      %v797 = vpop.permute.xlu0 %796
      %798 = vrot.lane.b32.xlu0 %v383, 8
      %v799 = vpop.permute.xlu0 %798
      %800 = vrot.lane.b32.xlu0 %v384, 8
      %v801 = vpop.permute.xlu0 %800
      %866 = vrot.lane.b32.xlu0 %v385, 12
      %v867 = vpop.permute.xlu0 %866
      %868 = vrot.lane.b32.xlu0 %v386, 12
      %v869 = vpop.permute.xlu0 %868
      %870 = vrot.lane.b32.xlu0 %v387, 12
      %v871 = vpop.permute.xlu0 %870
      %872 = vrot.lane.b32.xlu0 %v388, 12
      %v873 = vpop.permute.xlu0 %872
      %874 = vrot.lane.b32.xlu0 %v389, 12
      %v875 = vpop.permute.xlu0 %874
      %876 = vrot.lane.b32.xlu0 %v390, 12
      %v877 = vpop.permute.xlu0 %876
      %878 = vrot.lane.b32.xlu0 %v391, 12
      %v879 = vpop.permute.xlu0 %878
      %880 = vrot.lane.b32.xlu0 %v392, 12
      %v881 = vpop.permute.xlu0 %880
      %882 = vrot.lane.b32.xlu0 %v393, 12
      %v883 = vpop.permute.xlu0 %882
      %884 = vrot.lane.b32.xlu0 %v394, 12
      %v885 = vpop.permute.xlu0 %884
      %886 = vrot.lane.b32.xlu0 %v395, 12
      %v887 = vpop.permute.xlu0 %886
      %888 = vrot.lane.b32.xlu0 %v396, 12
      %v889 = vpop.permute.xlu0 %888
      %890 = vrot.lane.b32.xlu0 %v397, 12
      %v891 = vpop.permute.xlu0 %890
      %892 = vrot.lane.b32.xlu0 %v398, 12
      %v893 = vpop.permute.xlu0 %892
      %894 = vrot.lane.b32.xlu0 %v399, 12
      %v895 = vpop.permute.xlu0 %894
      %896 = vrot.lane.b32.xlu0 %v400, 12
      %v897 = vpop.permute.xlu0 %896
      %898 = vrot.lane.b32.xlu0 %v401, 12
      %v899 = vpop.permute.xlu0 %898
      %900 = vrot.lane.b32.xlu0 %v402, 12
      %v901 = vpop.permute.xlu0 %900
      %902 = vrot.lane.b32.xlu0 %v403, 12
      %v903 = vpop.permute.xlu0 %902
      %904 = vrot.lane.b32.xlu0 %v404, 12
      %v905 = vpop.permute.xlu0 %904
      %906 = vrot.lane.b32.xlu0 %v405, 12
      %v907 = vpop.permute.xlu0 %906
      %908 = vrot.lane.b32.xlu0 %v406, 12
      %v909 = vpop.permute.xlu0 %908
      %910 = vrot.lane.b32.xlu0 %v407, 12
      %v911 = vpop.permute.xlu0 %910
      %912 = vrot.lane.b32.xlu0 %v408, 12
      %v913 = vpop.permute.xlu0 %912
      %914 = vrot.lane.b32.xlu0 %v409, 12
      %v915 = vpop.permute.xlu0 %914
      %916 = vrot.lane.b32.xlu0 %v410, 12
      %v917 = vpop.permute.xlu0 %916
      %918 = vrot.lane.b32.xlu0 %v411, 12
      %v919 = vpop.permute.xlu0 %918
      %920 = vrot.lane.b32.xlu0 %v412, 12
      %v921 = vpop.permute.xlu0 %920
      %922 = vrot.lane.b32.xlu0 %v413, 12
      %v923 = vpop.permute.xlu0 %922
      %924 = vrot.lane.b32.xlu0 %v414, 12
      %v925 = vpop.permute.xlu0 %924
      %926 = vrot.lane.b32.xlu0 %v415, 12
      %v927 = vpop.permute.xlu0 %926
      %928 = vrot.lane.b32.xlu0 %v416, 12
      %v929 = vpop.permute.xlu0 %928
      %994 = vrot.lane.b32.xlu0 %v417, 16
      %v995 = vpop.permute.xlu0 %994
      %996 = vrot.lane.b32.xlu0 %v418, 16
      %v997 = vpop.permute.xlu0 %996
      %998 = vrot.lane.b32.xlu0 %v419, 16
      %v999 = vpop.permute.xlu0 %998
      %1000 = vrot.lane.b32.xlu0 %v420, 16
      %v1001 = vpop.permute.xlu0 %1000
      %1002 = vrot.lane.b32.xlu0 %v421, 16
      %v1003 = vpop.permute.xlu0 %1002
      %1004 = vrot.lane.b32.xlu0 %v422, 16
      %v1005 = vpop.permute.xlu0 %1004
      %1006 = vrot.lane.b32.xlu0 %v423, 16
      %v1007 = vpop.permute.xlu0 %1006
      %1008 = vrot.lane.b32.xlu0 %v424, 16
      %v1009 = vpop.permute.xlu0 %1008
      %1010 = vrot.lane.b32.xlu0 %v425, 16
      %v1011 = vpop.permute.xlu0 %1010
      %1012 = vrot.lane.b32.xlu0 %v426, 16
      %v1013 = vpop.permute.xlu0 %1012
      %1014 = vrot.lane.b32.xlu0 %v427, 16
      %v1015 = vpop.permute.xlu0 %1014
      %1016 = vrot.lane.b32.xlu0 %v428, 16
      %v1017 = vpop.permute.xlu0 %1016
      %1018 = vrot.lane.b32.xlu0 %v429, 16
      %v1019 = vpop.permute.xlu0 %1018
      %1020 = vrot.lane.b32.xlu0 %v430, 16
      %v1021 = vpop.permute.xlu0 %1020
      %1022 = vrot.lane.b32.xlu0 %v431, 16
      %v1023 = vpop.permute.xlu0 %1022
      %1024 = vrot.lane.b32.xlu0 %v432, 16
      %v1025 = vpop.permute.xlu0 %1024
      %1026 = vrot.lane.b32.xlu0 %v433, 16
      %v1027 = vpop.permute.xlu0 %1026
      %1028 = vrot.lane.b32.xlu0 %v434, 16
      %v1029 = vpop.permute.xlu0 %1028
      %1030 = vrot.lane.b32.xlu0 %v435, 16
      %v1031 = vpop.permute.xlu0 %1030
      %1032 = vrot.lane.b32.xlu0 %v436, 16
      %v1033 = vpop.permute.xlu0 %1032
      %1034 = vrot.lane.b32.xlu0 %v437, 16
      %v1035 = vpop.permute.xlu0 %1034
      %1036 = vrot.lane.b32.xlu0 %v438, 16
      %v1037 = vpop.permute.xlu0 %1036
      %1038 = vrot.lane.b32.xlu0 %v439, 16
      %v1039 = vpop.permute.xlu0 %1038
      %1040 = vrot.lane.b32.xlu0 %v440, 16
      %v1041 = vpop.permute.xlu0 %1040
      %1042 = vrot.lane.b32.xlu0 %v441, 16
      %v1043 = vpop.permute.xlu0 %1042
      %1044 = vrot.lane.b32.xlu0 %v442, 16
      %v1045 = vpop.permute.xlu0 %1044
      %1046 = vrot.lane.b32.xlu0 %v443, 16
      %v1047 = vpop.permute.xlu0 %1046
      %1048 = vrot.lane.b32.xlu0 %v444, 16
      %v1049 = vpop.permute.xlu0 %1048
      %1050 = vrot.lane.b32.xlu0 %v445, 16
      %v1051 = vpop.permute.xlu0 %1050
      %1052 = vrot.lane.b32.xlu0 %v446, 16
      %v1053 = vpop.permute.xlu0 %1052
      %1054 = vrot.lane.b32.xlu0 %v447, 16
      %v1055 = vpop.permute.xlu0 %1054
      %1056 = vrot.lane.b32.xlu0 %v448, 16
      %v1057 = vpop.permute.xlu0 %1056
      %1122 = vrot.lane.b32.xlu0 %v449, 20
      %v1123 = vpop.permute.xlu0 %1122
      %1124 = vrot.lane.b32.xlu0 %v450, 20
      %v1125 = vpop.permute.xlu0 %1124
      %1126 = vrot.lane.b32.xlu0 %v451, 20
      %v1127 = vpop.permute.xlu0 %1126
      %1128 = vrot.lane.b32.xlu0 %v452, 20
      %v1129 = vpop.permute.xlu0 %1128
      %1130 = vrot.lane.b32.xlu0 %v453, 20
      %v1131 = vpop.permute.xlu0 %1130
      %1132 = vrot.lane.b32.xlu0 %v454, 20
      %v1133 = vpop.permute.xlu0 %1132
      %1134 = vrot.lane.b32.xlu0 %v455, 20
      %v1135 = vpop.permute.xlu0 %1134
      %1136 = vrot.lane.b32.xlu0 %v456, 20
      %v1137 = vpop.permute.xlu0 %1136
      %1138 = vrot.lane.b32.xlu0 %v457, 20
      %v1139 = vpop.permute.xlu0 %1138
      %1140 = vrot.lane.b32.xlu0 %v458, 20
      %v1141 = vpop.permute.xlu0 %1140
      %1142 = vrot.lane.b32.xlu0 %v459, 20
      %v1143 = vpop.permute.xlu0 %1142
      %1144 = vrot.lane.b32.xlu0 %v460, 20
      %v1145 = vpop.permute.xlu0 %1144
      %1146 = vrot.lane.b32.xlu0 %v461, 20
      %v1147 = vpop.permute.xlu0 %1146
      %1148 = vrot.lane.b32.xlu0 %v462, 20
      %v1149 = vpop.permute.xlu0 %1148
      %1150 = vrot.lane.b32.xlu0 %v463, 20
      %v1151 = vpop.permute.xlu0 %1150
      %1152 = vrot.lane.b32.xlu0 %v464, 20
      %v1153 = vpop.permute.xlu0 %1152
      %1154 = vrot.lane.b32.xlu0 %v465, 20
      %v1155 = vpop.permute.xlu0 %1154
      %1156 = vrot.lane.b32.xlu0 %v466, 20
      %v1157 = vpop.permute.xlu0 %1156
      %1158 = vrot.lane.b32.xlu0 %v467, 20
      %v1159 = vpop.permute.xlu0 %1158
      %1160 = vrot.lane.b32.xlu0 %v468, 20
      %v1161 = vpop.permute.xlu0 %1160
      %1162 = vrot.lane.b32.xlu0 %v469, 20
      %v1163 = vpop.permute.xlu0 %1162
      %1164 = vrot.lane.b32.xlu0 %v470, 20
      %v1165 = vpop.permute.xlu0 %1164
      %1166 = vrot.lane.b32.xlu0 %v471, 20
      %v1167 = vpop.permute.xlu0 %1166
      %1168 = vrot.lane.b32.xlu0 %v472, 20
      %v1169 = vpop.permute.xlu0 %1168
      %1170 = vrot.lane.b32.xlu0 %v473, 20
      %v1171 = vpop.permute.xlu0 %1170
      %1172 = vrot.lane.b32.xlu0 %v474, 20
      %v1173 = vpop.permute.xlu0 %1172
      %1174 = vrot.lane.b32.xlu0 %v475, 20
      %v1175 = vpop.permute.xlu0 %1174
      %1176 = vrot.lane.b32.xlu0 %v476, 20
      %v1177 = vpop.permute.xlu0 %1176
      %1178 = vrot.lane.b32.xlu0 %v477, 20
      %v1179 = vpop.permute.xlu0 %1178
      %1180 = vrot.lane.b32.xlu0 %v478, 20
      %v1181 = vpop.permute.xlu0 %1180
      %1182 = vrot.lane.b32.xlu0 %v479, 20
      %v1183 = vpop.permute.xlu0 %1182
      %1184 = vrot.lane.b32.xlu0 %v480, 20
      %v1185 = vpop.permute.xlu0 %1184
      %1250 = vrot.lane.b32.xlu0 %v482, 24
      %v1251 = vpop.permute.xlu0 %1250
      %1252 = vrot.lane.b32.xlu0 %v483, 24
      %v1253 = vpop.permute.xlu0 %1252
      %1254 = vrot.lane.b32.xlu0 %v484, 24
      %v1255 = vpop.permute.xlu0 %1254
      %1256 = vrot.lane.b32.xlu0 %v485, 24
      %v1257 = vpop.permute.xlu0 %1256
      %1258 = vrot.lane.b32.xlu0 %v486, 24
      %v1259 = vpop.permute.xlu0 %1258
      %1260 = vrot.lane.b32.xlu0 %v487, 24
      %v1261 = vpop.permute.xlu0 %1260
      %1262 = vrot.lane.b32.xlu0 %v488, 24
      %v1263 = vpop.permute.xlu0 %1262
      %1264 = vrot.lane.b32.xlu0 %v489, 24
      %v1265 = vpop.permute.xlu0 %1264
      %1266 = vrot.lane.b32.xlu0 %v490, 24
      %v1267 = vpop.permute.xlu0 %1266
      %1268 = vrot.lane.b32.xlu0 %v491, 24
      %v1269 = vpop.permute.xlu0 %1268
      %1270 = vrot.lane.b32.xlu0 %v492, 24
      %v1271 = vpop.permute.xlu0 %1270
      %1272 = vrot.lane.b32.xlu0 %v493, 24
      %v1273 = vpop.permute.xlu0 %1272
      %1274 = vrot.lane.b32.xlu0 %v494, 24
      %v1275 = vpop.permute.xlu0 %1274
      %1276 = vrot.lane.b32.xlu0 %v495, 24
      %v1277 = vpop.permute.xlu0 %1276
      %1278 = vrot.lane.b32.xlu0 %v496, 24
      %v1279 = vpop.permute.xlu0 %1278
      %1280 = vrot.lane.b32.xlu0 %v497, 24
      %v1281 = vpop.permute.xlu0 %1280
      %1282 = vrot.lane.b32.xlu0 %v498, 24
      %v1283 = vpop.permute.xlu0 %1282
      %1284 = vrot.lane.b32.xlu0 %v499, 24
      %v1285 = vpop.permute.xlu0 %1284
      %1286 = vrot.lane.b32.xlu0 %v500, 24
      %v1287 = vpop.permute.xlu0 %1286
      %1288 = vrot.lane.b32.xlu0 %v501, 24
      %v1289 = vpop.permute.xlu0 %1288
      %1290 = vrot.lane.b32.xlu0 %v502, 24
      %v1291 = vpop.permute.xlu0 %1290
      %1292 = vrot.lane.b32.xlu0 %v503, 24
      %v1293 = vpop.permute.xlu0 %1292
      %1294 = vrot.lane.b32.xlu0 %v504, 24
      %v1295 = vpop.permute.xlu0 %1294
      %1296 = vrot.lane.b32.xlu0 %v505, 24
      %v1297 = vpop.permute.xlu0 %1296
      %1298 = vrot.lane.b32.xlu0 %v506, 24
      %v1299 = vpop.permute.xlu0 %1298
      %1300 = vrot.lane.b32.xlu0 %v507, 24
      %v1301 = vpop.permute.xlu0 %1300
      %1302 = vrot.lane.b32.xlu0 %v508, 24
      %v1303 = vpop.permute.xlu0 %1302
      %1304 = vrot.lane.b32.xlu0 %v509, 24
      %v1305 = vpop.permute.xlu0 %1304
      %1306 = vrot.lane.b32.xlu0 %v510, 24
      %v1307 = vpop.permute.xlu0 %1306
      %1308 = vrot.lane.b32.xlu0 %v511, 24
      %v1309 = vpop.permute.xlu0 %1308
      %1310 = vrot.lane.b32.xlu0 %v512, 24
      %v1311 = vpop.permute.xlu0 %1310
      %1312 = vrot.lane.b32.xlu0 %v513, 24
      %v1313 = vpop.permute.xlu0 %1312
      %1378 = vrot.lane.b32.xlu0 %v514, 28
      %v1379 = vpop.permute.xlu0 %1378
      %1380 = vrot.lane.b32.xlu0 %v515, 28
      %v1381 = vpop.permute.xlu0 %1380
      %1382 = vrot.lane.b32.xlu0 %v516, 28
      %v1383 = vpop.permute.xlu0 %1382
      %1384 = vrot.lane.b32.xlu0 %v517, 28
      %v1385 = vpop.permute.xlu0 %1384
      %1386 = vrot.lane.b32.xlu0 %v518, 28
      %v1387 = vpop.permute.xlu0 %1386
      %1388 = vrot.lane.b32.xlu0 %v519, 28
      %v1389 = vpop.permute.xlu0 %1388
      %1390 = vrot.lane.b32.xlu0 %v520, 28
      %v1391 = vpop.permute.xlu0 %1390
      %1392 = vrot.lane.b32.xlu0 %v521, 28
      %v1393 = vpop.permute.xlu0 %1392
      %1394 = vrot.lane.b32.xlu0 %v522, 28
      %v1395 = vpop.permute.xlu0 %1394
      %1396 = vrot.lane.b32.xlu0 %v523, 28
      %v1397 = vpop.permute.xlu0 %1396
      %1398 = vrot.lane.b32.xlu0 %v524, 28
      %v1399 = vpop.permute.xlu0 %1398
      %1400 = vrot.lane.b32.xlu0 %v525, 28
      %v1401 = vpop.permute.xlu0 %1400
      %1402 = vrot.lane.b32.xlu0 %v526, 28
      %v1403 = vpop.permute.xlu0 %1402
      %1404 = vrot.lane.b32.xlu0 %v527, 28
      %v1405 = vpop.permute.xlu0 %1404
      %1406 = vrot.lane.b32.xlu0 %v528, 28
      %v1407 = vpop.permute.xlu0 %1406
      %1408 = vrot.lane.b32.xlu0 %v529, 28
      %v1409 = vpop.permute.xlu0 %1408
      %1410 = vrot.lane.b32.xlu0 %v530, 28
      %v1411 = vpop.permute.xlu0 %1410
      %1412 = vrot.lane.b32.xlu0 %v531, 28
      %v1413 = vpop.permute.xlu0 %1412
      %1414 = vrot.lane.b32.xlu0 %v532, 28
      %v1415 = vpop.permute.xlu0 %1414
      %1416 = vrot.lane.b32.xlu0 %v533, 28
      %v1417 = vpop.permute.xlu0 %1416
      %1418 = vrot.lane.b32.xlu0 %v534, 28
      %v1419 = vpop.permute.xlu0 %1418
      %1420 = vrot.lane.b32.xlu0 %v535, 28
      %v1421 = vpop.permute.xlu0 %1420
      %1422 = vrot.lane.b32.xlu0 %v536, 28
      %v1423 = vpop.permute.xlu0 %1422
      %1424 = vrot.lane.b32.xlu0 %v537, 28
      %v1425 = vpop.permute.xlu0 %1424
      %1426 = vrot.lane.b32.xlu0 %v538, 28
      %v1427 = vpop.permute.xlu0 %1426
      %1428 = vrot.lane.b32.xlu0 %v539, 28
      %v1429 = vpop.permute.xlu0 %1428
      %1430 = vrot.lane.b32.xlu0 %v540, 28
      %v1431 = vpop.permute.xlu0 %1430
      %1432 = vrot.lane.b32.xlu0 %v541, 28
      %v1433 = vpop.permute.xlu0 %1432
      %1434 = vrot.lane.b32.xlu0 %v542, 28
      %v1435 = vpop.permute.xlu0 %1434
      %1436 = vrot.lane.b32.xlu0 %v543, 28
      %v1437 = vpop.permute.xlu0 %1436
      %1438 = vrot.lane.b32.xlu0 %v544, 28
      %v1439 = vpop.permute.xlu0 %1438
      %1440 = vrot.lane.b32.xlu0 %v545, 28
      %v1441 = vpop.permute.xlu0 %1440
      %1506 = vrot.lane.b32.xlu0 %v546, 32
      %v1507 = vpop.permute.xlu0 %1506
      %1508 = vrot.lane.b32.xlu0 %v547, 32
      %v1509 = vpop.permute.xlu0 %1508
      %1510 = vrot.lane.b32.xlu0 %v548, 32
      %v1511 = vpop.permute.xlu0 %1510
      %1512 = vrot.lane.b32.xlu0 %v549, 32
      %v1513 = vpop.permute.xlu0 %1512
      %1514 = vrot.lane.b32.xlu0 %v550, 32
      %v1515 = vpop.permute.xlu0 %1514
      %1516 = vrot.lane.b32.xlu0 %v551, 32
      %v1517 = vpop.permute.xlu0 %1516
      %1518 = vrot.lane.b32.xlu0 %v552, 32
      %v1519 = vpop.permute.xlu0 %1518
      %1520 = vrot.lane.b32.xlu0 %v553, 32
      %v1521 = vpop.permute.xlu0 %1520
      %1522 = vrot.lane.b32.xlu0 %v554, 32
      %v1523 = vpop.permute.xlu0 %1522
      %1524 = vrot.lane.b32.xlu0 %v555, 32
      %v1525 = vpop.permute.xlu0 %1524
      %1526 = vrot.lane.b32.xlu0 %v556, 32
      %v1527 = vpop.permute.xlu0 %1526
      %1528 = vrot.lane.b32.xlu0 %v557, 32
      %v1529 = vpop.permute.xlu0 %1528
      %1530 = vrot.lane.b32.xlu0 %v558, 32
      %v1531 = vpop.permute.xlu0 %1530
      %1532 = vrot.lane.b32.xlu0 %v559, 32
      %v1533 = vpop.permute.xlu0 %1532
      %1534 = vrot.lane.b32.xlu0 %v560, 32
      %v1535 = vpop.permute.xlu0 %1534
      %1536 = vrot.lane.b32.xlu0 %v561, 32
      %v1537 = vpop.permute.xlu0 %1536
      %1538 = vrot.lane.b32.xlu0 %v562, 32
      %v1539 = vpop.permute.xlu0 %1538
      %1540 = vrot.lane.b32.xlu0 %v563, 32
      %v1541 = vpop.permute.xlu0 %1540
      %1542 = vrot.lane.b32.xlu0 %v564, 32
      %v1543 = vpop.permute.xlu0 %1542
      %1544 = vrot.lane.b32.xlu0 %v565, 32
      %v1545 = vpop.permute.xlu0 %1544
      %1546 = vrot.lane.b32.xlu0 %v566, 32
      %v1547 = vpop.permute.xlu0 %1546
      %1548 = vrot.lane.b32.xlu0 %v567, 32
      %v1549 = vpop.permute.xlu0 %1548
      %1550 = vrot.lane.b32.xlu0 %v568, 32
      %v1551 = vpop.permute.xlu0 %1550
      %1552 = vrot.lane.b32.xlu0 %v569, 32
      %v1553 = vpop.permute.xlu0 %1552
      %1554 = vrot.lane.b32.xlu0 %v570, 32
      %v1555 = vpop.permute.xlu0 %1554
      %1556 = vrot.lane.b32.xlu0 %v571, 32
      %v1557 = vpop.permute.xlu0 %1556
      %1558 = vrot.lane.b32.xlu0 %v572, 32
      %v1559 = vpop.permute.xlu0 %1558
      %1560 = vrot.lane.b32.xlu0 %v573, 32
      %v1561 = vpop.permute.xlu0 %1560
      %1562 = vrot.lane.b32.xlu0 %v574, 32
      %v1563 = vpop.permute.xlu0 %1562
      %1564 = vrot.lane.b32.xlu0 %v575, 32
      %v1565 = vpop.permute.xlu0 %1564
      %1566 = vrot.lane.b32.xlu0 %v576, 32
      %v1567 = vpop.permute.xlu0 %1566
      %1568 = vrot.lane.b32.xlu0 %v577, 32
      %v1569 = vpop.permute.xlu0 %1568
      %v1602 = vsel %vm214, %v289, %v611
      %v1603 = vsel %vm214, %v290, %v613
      %v1604 = vsel %vm214, %v291, %v615
      %v1605 = vsel %vm214, %v292, %v617
      %v1606 = vsel %vm214, %v293, %v619
      %v1607 = vsel %vm214, %v294, %v621
      %v1608 = vsel %vm214, %v295, %v623
      %v1609 = vsel %vm214, %v296, %v625
      %v1610 = vsel %vm214, %v297, %v627
      %v1611 = vsel %vm214, %v298, %v629
      %v1612 = vsel %vm214, %v299, %v631
      %v1613 = vsel %vm214, %v300, %v633
      %v1614 = vsel %vm214, %v301, %v635
      %v1615 = vsel %vm214, %v302, %v637
      %v1616 = vsel %vm214, %v303, %v639
      %v1617 = vsel %vm214, %v304, %v641
      %v1618 = vsel %vm214, %v305, %v643
      %v1619 = vsel %vm214, %v306, %v645
      %v1620 = vsel %vm214, %v307, %v647
      %v1621 = vsel %vm214, %v308, %v649
      %v1622 = vsel %vm214, %v309, %v651
      %v1623 = vsel %vm214, %v310, %v653
      %v1624 = vsel %vm214, %v311, %v655
      %v1625 = vsel %vm214, %v312, %v657
      %v1626 = vsel %vm214, %v313, %v659
      %v1627 = vsel %vm214, %v314, %v661
      %v1628 = vsel %vm214, %v315, %v663
      %v1629 = vsel %vm214, %v316, %v665
      %v1630 = vsel %vm214, %v317, %v667
      %v1631 = vsel %vm214, %v318, %v669
      %v1632 = vsel %vm214, %v319, %v671
      %v1633 = vsel %vm214, %v320, %v673
      %vm1634 = vcmask 64512
      %v1635 = vsel %vm1634, %v1602, %v739
      %v1636 = vsel %vm1634, %v1603, %v741
      %v1637 = vsel %vm1634, %v1604, %v743
      %v1638 = vsel %vm1634, %v1605, %v745
      %v1639 = vsel %vm1634, %v1606, %v747
      %v1640 = vsel %vm1634, %v1607, %v749
      %v1641 = vsel %vm1634, %v1608, %v751
      %v1642 = vsel %vm1634, %v1609, %v753
      %v1643 = vsel %vm1634, %v1610, %v755
      %v1644 = vsel %vm1634, %v1611, %v757
      %v1645 = vsel %vm1634, %v1612, %v759
      %v1646 = vsel %vm1634, %v1613, %v761
      %v1647 = vsel %vm1634, %v1614, %v763
      %v1648 = vsel %vm1634, %v1615, %v765
      %v1649 = vsel %vm1634, %v1616, %v767
      %v1650 = vsel %vm1634, %v1617, %v769
      %v1651 = vsel %vm1634, %v1618, %v771
      %v1652 = vsel %vm1634, %v1619, %v773
      %v1653 = vsel %vm1634, %v1620, %v775
      %v1654 = vsel %vm1634, %v1621, %v777
      %v1655 = vsel %vm1634, %v1622, %v779
      %v1656 = vsel %vm1634, %v1623, %v781
      %v1657 = vsel %vm1634, %v1624, %v783
      %v1658 = vsel %vm1634, %v1625, %v785
      %v1659 = vsel %vm1634, %v1626, %v787
      %v1660 = vsel %vm1634, %v1627, %v789
      %v1661 = vsel %vm1634, %v1628, %v791
      %v1662 = vsel %vm1634, %v1629, %v793
      %v1663 = vsel %vm1634, %v1630, %v795
      %v1664 = vsel %vm1634, %v1631, %v797
      %v1665 = vsel %vm1634, %v1632, %v799
      %v1666 = vsel %vm1634, %v1633, %v801
      %vm1667 = vcmask 97280
      %v1668 = vsel %vm1667, %v1635, %v867
      %v1669 = vsel %vm1667, %v1636, %v869
      %v1670 = vsel %vm1667, %v1637, %v871
      %v1671 = vsel %vm1667, %v1638, %v873
      %v1672 = vsel %vm1667, %v1639, %v875
      %v1673 = vsel %vm1667, %v1640, %v877
      %v1674 = vsel %vm1667, %v1641, %v879
      %v1675 = vsel %vm1667, %v1642, %v881
      %v1676 = vsel %vm1667, %v1643, %v883
      %v1677 = vsel %vm1667, %v1644, %v885
      %v1678 = vsel %vm1667, %v1645, %v887
      %v1679 = vsel %vm1667, %v1646, %v889
      %v1680 = vsel %vm1667, %v1647, %v891
      %v1681 = vsel %vm1667, %v1648, %v893
      %v1682 = vsel %vm1667, %v1649, %v895
      %v1683 = vsel %vm1667, %v1650, %v897
      %v1684 = vsel %vm1667, %v1651, %v899
      %v1685 = vsel %vm1667, %v1652, %v901
      %v1686 = vsel %vm1667, %v1653, %v903
      %v1687 = vsel %vm1667, %v1654, %v905
      %v1688 = vsel %vm1667, %v1655, %v907
      %v1689 = vsel %vm1667, %v1656, %v909
      %v1690 = vsel %vm1667, %v1657, %v911
      %v1691 = vsel %vm1667, %v1658, %v913
      %v1692 = vsel %vm1667, %v1659, %v915
      %v1693 = vsel %vm1667, %v1660, %v917
      %v1694 = vsel %vm1667, %v1661, %v919
      %v1695 = vsel %vm1667, %v1662, %v921
      %v1696 = vsel %vm1667, %v1663, %v923
      %v1697 = vsel %vm1667, %v1664, %v925
      %v1698 = vsel %vm1667, %v1665, %v927
      %v1699 = vsel %vm1667, %v1666, %v929
      %vm1700 = vcmask 130048
      %v1701 = vsel %vm1700, %v1668, %v995
      %v1702 = vsel %vm1700, %v1669, %v997
      %v1703 = vsel %vm1700, %v1670, %v999
      %v1704 = vsel %vm1700, %v1671, %v1001
      %v1705 = vsel %vm1700, %v1672, %v1003
      %v1706 = vsel %vm1700, %v1673, %v1005
      %v1707 = vsel %vm1700, %v1674, %v1007
      %v1708 = vsel %vm1700, %v1675, %v1009
      %v1709 = vsel %vm1700, %v1676, %v1011
      %v1710 = vsel %vm1700, %v1677, %v1013
      %v1711 = vsel %vm1700, %v1678, %v1015
      %v1712 = vsel %vm1700, %v1679, %v1017
      %v1713 = vsel %vm1700, %v1680, %v1019
      %v1714 = vsel %vm1700, %v1681, %v1021
      %v1715 = vsel %vm1700, %v1682, %v1023
      %v1716 = vsel %vm1700, %v1683, %v1025
      %v1717 = vsel %vm1700, %v1684, %v1027
      %v1718 = vsel %vm1700, %v1685, %v1029
      %v1719 = vsel %vm1700, %v1686, %v1031
      %v1720 = vsel %vm1700, %v1687, %v1033
      %v1721 = vsel %vm1700, %v1688, %v1035
      %v1722 = vsel %vm1700, %v1689, %v1037
      %v1723 = vsel %vm1700, %v1690, %v1039
      %v1724 = vsel %vm1700, %v1691, %v1041
      %v1725 = vsel %vm1700, %v1692, %v1043
      %v1726 = vsel %vm1700, %v1693, %v1045
      %v1727 = vsel %vm1700, %v1694, %v1047
      %v1728 = vsel %vm1700, %v1695, %v1049
      %v1729 = vsel %vm1700, %v1696, %v1051
      %v1730 = vsel %vm1700, %v1697, %v1053
      %v1731 = vsel %vm1700, %v1698, %v1055
      %v1732 = vsel %vm1700, %v1699, %v1057
      %vm1733 = vcmask 162816
      %v1734 = vsel %vm1733, %v1701, %v1123
      %v1735 = vsel %vm1733, %v1702, %v1125
      %v1736 = vsel %vm1733, %v1703, %v1127
      %v1737 = vsel %vm1733, %v1704, %v1129
      %v1738 = vsel %vm1733, %v1705, %v1131
      %v1739 = vsel %vm1733, %v1706, %v1133
      %v1740 = vsel %vm1733, %v1707, %v1135
      %v1741 = vsel %vm1733, %v1708, %v1137
      %v1742 = vsel %vm1733, %v1709, %v1139
      %v1743 = vsel %vm1733, %v1710, %v1141
      %v1744 = vsel %vm1733, %v1711, %v1143
      %v1745 = vsel %vm1733, %v1712, %v1145
      %v1746 = vsel %vm1733, %v1713, %v1147
      %v1747 = vsel %vm1733, %v1714, %v1149
      %v1748 = vsel %vm1733, %v1715, %v1151
      %v1749 = vsel %vm1733, %v1716, %v1153
      %v1750 = vsel %vm1733, %v1717, %v1155
      %v1751 = vsel %vm1733, %v1718, %v1157
      %v1752 = vsel %vm1733, %v1719, %v1159
      %v1753 = vsel %vm1733, %v1720, %v1161
      %v1754 = vsel %vm1733, %v1721, %v1163
      %v1755 = vsel %vm1733, %v1722, %v1165
      %v1756 = vsel %vm1733, %v1723, %v1167
      %v1757 = vsel %vm1733, %v1724, %v1169
      %v1758 = vsel %vm1733, %v1725, %v1171
      %v1759 = vsel %vm1733, %v1726, %v1173
      %v1760 = vsel %vm1733, %v1727, %v1175
      %v1761 = vsel %vm1733, %v1728, %v1177
      %v1762 = vsel %vm1733, %v1729, %v1179
      %v1763 = vsel %vm1733, %v1730, %v1181
      %v1764 = vsel %vm1733, %v1731, %v1183
      %v1765 = vsel %vm1733, %v1732, %v1185
      %vm1766 = vcmask 195584
      %v1767 = vsel %vm1766, %v1734, %v1251
      %v1768 = vsel %vm1766, %v1735, %v1253
      %v1769 = vsel %vm1766, %v1736, %v1255
      %v1770 = vsel %vm1766, %v1737, %v1257
      %v1771 = vsel %vm1766, %v1738, %v1259
      %v1772 = vsel %vm1766, %v1739, %v1261
      %v1773 = vsel %vm1766, %v1740, %v1263
      %v1774 = vsel %vm1766, %v1741, %v1265
      %v1775 = vsel %vm1766, %v1742, %v1267
      %v1776 = vsel %vm1766, %v1743, %v1269
      %v1777 = vsel %vm1766, %v1744, %v1271
      %v1778 = vsel %vm1766, %v1745, %v1273
      %v1779 = vsel %vm1766, %v1746, %v1275
      %v1780 = vsel %vm1766, %v1747, %v1277
      %v1781 = vsel %vm1766, %v1748, %v1279
      %v1782 = vsel %vm1766, %v1749, %v1281
      %v1783 = vsel %vm1766, %v1750, %v1283
      %v1784 = vsel %vm1766, %v1751, %v1285
      %v1785 = vsel %vm1766, %v1752, %v1287
      %v1786 = vsel %vm1766, %v1753, %v1289
      %v1787 = vsel %vm1766, %v1754, %v1291
      %v1788 = vsel %vm1766, %v1755, %v1293
      %v1789 = vsel %vm1766, %v1756, %v1295
      %v1790 = vsel %vm1766, %v1757, %v1297
      %v1791 = vsel %vm1766, %v1758, %v1299
      %v1792 = vsel %vm1766, %v1759, %v1301
      %v1793 = vsel %vm1766, %v1760, %v1303
      %v1794 = vsel %vm1766, %v1761, %v1305
      %v1795 = vsel %vm1766, %v1762, %v1307
      %v1796 = vsel %vm1766, %v1763, %v1309
      %v1797 = vsel %vm1766, %v1764, %v1311
      %v1798 = vsel %vm1766, %v1765, %v1313
      %vm1799 = vcmask 228352
      %v1800 = vsel %vm1799, %v1767, %v1379
      %v1801 = vsel %vm1799, %v1768, %v1381
      %v1802 = vsel %vm1799, %v1769, %v1383
      %v1803 = vsel %vm1799, %v1770, %v1385
      %v1804 = vsel %vm1799, %v1771, %v1387
      %v1805 = vsel %vm1799, %v1772, %v1389
      %v1806 = vsel %vm1799, %v1773, %v1391
      %v1807 = vsel %vm1799, %v1774, %v1393
      %v1808 = vsel %vm1799, %v1775, %v1395
      %v1809 = vsel %vm1799, %v1776, %v1397
      %v1810 = vsel %vm1799, %v1777, %v1399
      %v1811 = vsel %vm1799, %v1778, %v1401
      %v1812 = vsel %vm1799, %v1779, %v1403
      %v1813 = vsel %vm1799, %v1780, %v1405
      %v1814 = vsel %vm1799, %v1781, %v1407
      %v1815 = vsel %vm1799, %v1782, %v1409
      %v1816 = vsel %vm1799, %v1783, %v1411
      %v1817 = vsel %vm1799, %v1784, %v1413
      %v1818 = vsel %vm1799, %v1785, %v1415
      %v1819 = vsel %vm1799, %v1786, %v1417
      %v1820 = vsel %vm1799, %v1787, %v1419
      %v1821 = vsel %vm1799, %v1788, %v1421
      %v1822 = vsel %vm1799, %v1789, %v1423
      %v1823 = vsel %vm1799, %v1790, %v1425
      %v1824 = vsel %vm1799, %v1791, %v1427
      %v1825 = vsel %vm1799, %v1792, %v1429
      %v1826 = vsel %vm1799, %v1793, %v1431
      %v1827 = vsel %vm1799, %v1794, %v1433
      %v1828 = vsel %vm1799, %v1795, %v1435
      %v1829 = vsel %vm1799, %v1796, %v1437
      %v1830 = vsel %vm1799, %v1797, %v1439
      %v1831 = vsel %vm1799, %v1798, %v1441
      %vm1832 = vcmask 261120
      %v1833 = vsel %vm1832, %v1800, %v1507
      %v1834 = vsel %vm1832, %v1801, %v1509
      %v1835 = vsel %vm1832, %v1802, %v1511
      %v1836 = vsel %vm1832, %v1803, %v1513
      %v1837 = vsel %vm1832, %v1804, %v1515
      %v1838 = vsel %vm1832, %v1805, %v1517
      %v1839 = vsel %vm1832, %v1806, %v1519
      %v1840 = vsel %vm1832, %v1807, %v1521
      %v1841 = vsel %vm1832, %v1808, %v1523
      %v1842 = vsel %vm1832, %v1809, %v1525
      %v1843 = vsel %vm1832, %v1810, %v1527
      %v1844 = vsel %vm1832, %v1811, %v1529
      %v1845 = vsel %vm1832, %v1812, %v1531
      %v1846 = vsel %vm1832, %v1813, %v1533
      %v1847 = vsel %vm1832, %v1814, %v1535
      %v1848 = vsel %vm1832, %v1815, %v1537
      %v1849 = vsel %vm1832, %v1816, %v1539
      %v1850 = vsel %vm1832, %v1817, %v1541
      %v1851 = vsel %vm1832, %v1818, %v1543
      %v1852 = vsel %vm1832, %v1819, %v1545
      %v1853 = vsel %vm1832, %v1820, %v1547
      %v1854 = vsel %vm1832, %v1821, %v1549
      %v1855 = vsel %vm1832, %v1822, %v1551
      %v1856 = vsel %vm1832, %v1823, %v1553
      %v1857 = vsel %vm1832, %v1824, %v1555
      %v1858 = vsel %vm1832, %v1825, %v1557
      %v1859 = vsel %vm1832, %v1826, %v1559
      %v1860 = vsel %vm1832, %v1827, %v1561
      %v1861 = vsel %vm1832, %v1828, %v1563
      %v1862 = vsel %vm1832, %v1829, %v1565
      %v1863 = vsel %vm1832, %v1830, %v1567
      %v1864 = vsel %vm1832, %v1831, %v1569
      %v1865 = vld [vmem:[%s1] sm:$0xff]
      %v1866 = vld [vmem:[%s1 + $0x8] sm:$0xff]
      %v1867 = vld [vmem:[%s1 + $0x10] sm:$0xff]
      %v1868 = vld [vmem:[%s1 + $0x18] sm:$0xff]
      %v1869 = vld [vmem:[%s1 + $0x20] sm:$0xf]
      %vm1870 = vcmask 293888
      %v1872 = vsel %vm1870, %v1833, 0
      %v1875 = vsel %vm1870, %v1834, 0
      %v1878 = vsel %vm1870, %v1835, 0
      %v1881 = vsel %vm1870, %v1836, 0
      %v1884 = vsel %vm1870, %v1837, 0
      %v1887 = vsel %vm1870, %v1838, 0
      %v1890 = vsel %vm1870, %v1839, 0
      %v1893 = vsel %vm1870, %v1840, 0
      %v1896 = vsel %vm1870, %v1841, 0
      %v1899 = vsel %vm1870, %v1842, 0
      %v1902 = vsel %vm1870, %v1843, 0
      %v1905 = vsel %vm1870, %v1844, 0
      %v1908 = vsel %vm1870, %v1845, 0
      %v1911 = vsel %vm1870, %v1846, 0
      %v1914 = vsel %vm1870, %v1847, 0
      %v1917 = vsel %vm1870, %v1848, 0
      %v1920 = vsel %vm1870, %v1849, 0
      %v1923 = vsel %vm1870, %v1850, 0
      %v1926 = vsel %vm1870, %v1851, 0
      %v1929 = vsel %vm1870, %v1852, 0
      %v1932 = vsel %vm1870, %v1853, 0
      %v1935 = vsel %vm1870, %v1854, 0
      %v1938 = vsel %vm1870, %v1855, 0
      %v1941 = vsel %vm1870, %v1856, 0
      %v1944 = vsel %vm1870, %v1857, 0
      %v1947 = vsel %vm1870, %v1858, 0
      %v1950 = vsel %vm1870, %v1859, 0
      %v1953 = vsel %vm1870, %v1860, 0
      %v1956 = vsel %vm1870, %v1861, 0
      %v1959 = vsel %vm1870, %v1862, 0
      %v1962 = vsel %vm1870, %v1863, 0
      %v1965 = vsel %vm1870, %v1864, 0
      %vm1967 = vcmask 1043456
      %v1969 = vsel %vm1967, %v1869, 0
      %1971 = vmatprep.subr.mxu0 0.0
      %1972 = vmatpush1.msra.mxu0 0.0
      %1973 = vmatprep.subr.mxu0 0.0
      %1974 = vmatpush1.msra.mxu0 0.0
      %1975 = vmatprep.subr.mxu0 0.0
      %1976 = vmatpush1.msra.mxu0 0.0
      %1977 = vmatprep.subr.mxu0 0.0
      %1978 = vmatpush1.msra.mxu0 0.0
      %1979 = vmatprep.subr.mxu0 0.0
      %1980 = vmatpush1.msra.mxu0 0.0
      %1981 = vmatprep.subr.mxu0 0.0
      %1982 = vmatpush1.msra.mxu0 0.0
      %1983 = vmatprep.subr.mxu0 0.0
      %1984 = vmatpush1.msra.mxu0 0.0
      %1985 = vmatprep.subr.mxu0 0.0
      %1986 = vmatpush1.msra.mxu0 0.0
      %1987 = vmatprep.subr.mxu0 0.0
      %1988 = vmatpush1.msra.mxu0 0.0
      %1989 = vmatprep.subr.mxu0 0.0
      %1990 = vmatpush1.msra.mxu0 0.0
      %1991 = vmatprep.subr.mxu0 0.0
      %1992 = vmatpush1.msra.mxu0 0.0
      %1993 = vmatprep.subr.mxu0 0.0
      %1994 = vmatpush1.msra.mxu0 %v1969
      %1995 = vmatprep.subr.mxu0 0.0
      %1996 = vmatpush1.msra.mxu0 %v1868
      %1997 = vmatprep.subr.mxu0 0.0
      %1998 = vmatpush1.msra.mxu0 %v1867
      %1999 = vmatprep.subr.mxu0 0.0
      %2000 = vmatpush1.msra.mxu0 %v1866
      %2001 = vmatprep.subr.mxu0 0.0
      %2002 = vmatpush1.msra.mxu0 %v1865
      %2003 = vmatprep.subr.mxu0 0.0
      %2004 = vmatpush2.msra.mxu0 0.0
      %2005 = vmatprep.subr.mxu0 0.0
      %2006 = vmatpush2.msra.mxu0 0.0
      %2007 = vmatprep.subr.mxu0 0.0
      %2008 = vmatpush2.msra.mxu0 0.0
      %2009 = vmatprep.subr.mxu0 0.0
      %2010 = vmatpush2.msra.mxu0 0.0
      %2011 = vmatprep.subr.mxu0 0.0
      %2012 = vmatpush2.msra.mxu0 0.0
      %2013 = vmatprep.subr.mxu0 0.0
      %2014 = vmatpush2.msra.mxu0 0.0
      %2015 = vmatprep.subr.mxu0 0.0
      %2016 = vmatpush2.msra.mxu0 0.0
      %2017 = vmatprep.subr.mxu0 0.0
      %2018 = vmatpush2.msra.mxu0 0.0
      %2019 = vmatprep.subr.mxu0 0.0
      %2020 = vmatpush2.msra.mxu0 0.0
      %2021 = vmatprep.subr.mxu0 0.0
      %2022 = vmatpush2.msra.mxu0 0.0
      %2023 = vmatprep.subr.mxu0 0.0
      %2024 = vmatpush2.msra.mxu0 0.0
      %2025 = vmatprep.subr.mxu0 0.0
      %2026 = vmatpush2.msra.mxu0 0.0
      %2027 = vmatprep.subr.mxu0 0.0
      %2028 = vmatpush2.msra.mxu0 0.0
      %2029 = vmatprep.subr.mxu0 0.0
      %2030 = vmatpush2.msra.mxu0 0.0
      %2031 = vmatprep.subr.mxu0 0.0
      %2032 = vmatpush2.msra.mxu0 0.0
      %2033 = vmatprep.subr.mxu0 0.0
      %2034 = vmatpush2.msra.mxu0 0.0
      %2035 = vmatprep.mubr.f32.mxu0 0.0
      %2036 = vmatmul.mubr.f32.gmra.mxu0 %v1872
      %v2037 = vpop.f32.mrf.mxu0
      %v2038 = vadd.f32 0.0, %v2037
      %v2039 = vpop.f32.mrf.mxu0
      %2040 = vmatprep.mubr.f32.mxu0 0.0
      %2041 = vmatmul.mubr.f32.gmra.mxu0 %v1875
      %v2042 = vpop.f32.mrf.mxu0
      %v2043 = vadd.f32 0.0, %v2042
      %v2044 = vpop.f32.mrf.mxu0
      %2045 = vmatprep.mubr.f32.mxu0 0.0
      %2046 = vmatmul.mubr.f32.gmra.mxu0 %v1878
      %v2047 = vpop.f32.mrf.mxu0
      %v2048 = vadd.f32 0.0, %v2047
      %v2049 = vpop.f32.mrf.mxu0
      %2050 = vmatprep.mubr.f32.mxu0 0.0
      %2051 = vmatmul.mubr.f32.gmra.mxu0 %v1881
      %v2052 = vpop.f32.mrf.mxu0
      %v2053 = vadd.f32 0.0, %v2052
      %v2054 = vpop.f32.mrf.mxu0
      %2055 = vmatprep.mubr.f32.mxu0 0.0
      %2056 = vmatmul.mubr.f32.gmra.mxu0 %v1884
      %v2057 = vpop.f32.mrf.mxu0
      %v2058 = vadd.f32 0.0, %v2057
      %v2059 = vpop.f32.mrf.mxu0
      %2060 = vmatprep.mubr.f32.mxu0 0.0
      %2061 = vmatmul.mubr.f32.gmra.mxu0 %v1887
      %v2062 = vpop.f32.mrf.mxu0
      %v2063 = vadd.f32 0.0, %v2062
      %v2064 = vpop.f32.mrf.mxu0
      %2065 = vmatprep.mubr.f32.mxu0 0.0
      %2066 = vmatmul.mubr.f32.gmra.mxu0 %v1890
      %v2067 = vpop.f32.mrf.mxu0
      %v2068 = vadd.f32 0.0, %v2067
      %v2069 = vpop.f32.mrf.mxu0
      %2070 = vmatprep.mubr.f32.mxu0 0.0
      %2071 = vmatmul.mubr.f32.gmra.mxu0 %v1893
      %v2072 = vpop.f32.mrf.mxu0
      %v2073 = vadd.f32 0.0, %v2072
      %v2074 = vpop.f32.mrf.mxu0
      %2075 = vmatprep.mubr.f32.mxu0 0.0
      %2076 = vmatmul.mubr.f32.gmra.mxu0 %v1896
      %v2077 = vpop.f32.mrf.mxu0
      %v2078 = vadd.f32 0.0, %v2077
      %v2079 = vpop.f32.mrf.mxu0
      %2080 = vmatprep.mubr.f32.mxu0 0.0
      %2081 = vmatmul.mubr.f32.gmra.mxu0 %v1899
      %v2082 = vpop.f32.mrf.mxu0
      %v2083 = vadd.f32 0.0, %v2082
      %v2084 = vpop.f32.mrf.mxu0
      %2085 = vmatprep.mubr.f32.mxu0 0.0
      %2086 = vmatmul.mubr.f32.gmra.mxu0 %v1902
      %v2087 = vpop.f32.mrf.mxu0
      %v2088 = vadd.f32 0.0, %v2087
      %v2089 = vpop.f32.mrf.mxu0
      %2090 = vmatprep.mubr.f32.mxu0 0.0
      %2091 = vmatmul.mubr.f32.gmra.mxu0 %v1905
      %v2092 = vpop.f32.mrf.mxu0
      %v2093 = vadd.f32 0.0, %v2092
      %v2094 = vpop.f32.mrf.mxu0
      %2095 = vmatprep.mubr.f32.mxu0 0.0
      %2096 = vmatmul.mubr.f32.gmra.mxu0 %v1908
      %v2097 = vpop.f32.mrf.mxu0
      %v2098 = vadd.f32 0.0, %v2097
      %v2099 = vpop.f32.mrf.mxu0
      %2100 = vmatprep.mubr.f32.mxu0 0.0
      %2101 = vmatmul.mubr.f32.gmra.mxu0 %v1911
      %v2102 = vpop.f32.mrf.mxu0
      %v2103 = vadd.f32 0.0, %v2102
      %v2104 = vpop.f32.mrf.mxu0
      %2105 = vmatprep.mubr.f32.mxu0 0.0
      %2106 = vmatmul.mubr.f32.gmra.mxu0 %v1914
      %v2107 = vpop.f32.mrf.mxu0
      %v2108 = vadd.f32 0.0, %v2107
      %v2109 = vpop.f32.mrf.mxu0
      %2110 = vmatprep.mubr.f32.mxu0 0.0
      %2111 = vmatmul.mubr.f32.gmra.mxu0 %v1917
      %v2112 = vpop.f32.mrf.mxu0
      %v2113 = vadd.f32 0.0, %v2112
      %v2114 = vpop.f32.mrf.mxu0
      %2115 = vmatprep.mubr.f32.mxu0 0.0
      %2116 = vmatmul.mubr.f32.gmra.mxu0 %v1920
      %v2117 = vpop.f32.mrf.mxu0
      %v2118 = vadd.f32 0.0, %v2117
      %v2119 = vpop.f32.mrf.mxu0
      %2120 = vmatprep.mubr.f32.mxu0 0.0
      %2121 = vmatmul.mubr.f32.gmra.mxu0 %v1923
      %v2122 = vpop.f32.mrf.mxu0
      %v2123 = vadd.f32 0.0, %v2122
      %v2124 = vpop.f32.mrf.mxu0
      %2125 = vmatprep.mubr.f32.mxu0 0.0
      %2126 = vmatmul.mubr.f32.gmra.mxu0 %v1926
      %v2127 = vpop.f32.mrf.mxu0
      %v2128 = vadd.f32 0.0, %v2127
      %v2129 = vpop.f32.mrf.mxu0
      %2130 = vmatprep.mubr.f32.mxu0 0.0
      %2131 = vmatmul.mubr.f32.gmra.mxu0 %v1929
      %v2132 = vpop.f32.mrf.mxu0
      %v2133 = vadd.f32 0.0, %v2132
      %v2134 = vpop.f32.mrf.mxu0
      %2135 = vmatprep.mubr.f32.mxu0 0.0
      %2136 = vmatmul.mubr.f32.gmra.mxu0 %v1932
      %v2137 = vpop.f32.mrf.mxu0
      %v2138 = vadd.f32 0.0, %v2137
      %v2139 = vpop.f32.mrf.mxu0
      %2140 = vmatprep.mubr.f32.mxu0 0.0
      %2141 = vmatmul.mubr.f32.gmra.mxu0 %v1935
      %v2142 = vpop.f32.mrf.mxu0
      %v2143 = vadd.f32 0.0, %v2142
      %v2144 = vpop.f32.mrf.mxu0
      %2145 = vmatprep.mubr.f32.mxu0 0.0
      %2146 = vmatmul.mubr.f32.gmra.mxu0 %v1938
      %v2147 = vpop.f32.mrf.mxu0
      %v2148 = vadd.f32 0.0, %v2147
      %v2149 = vpop.f32.mrf.mxu0
      %2150 = vmatprep.mubr.f32.mxu0 0.0
      %2151 = vmatmul.mubr.f32.gmra.mxu0 %v1941
      %v2152 = vpop.f32.mrf.mxu0
      %v2153 = vadd.f32 0.0, %v2152
      %v2154 = vpop.f32.mrf.mxu0
      %2155 = vmatprep.mubr.f32.mxu0 0.0
      %2156 = vmatmul.mubr.f32.gmra.mxu0 %v1944
      %v2157 = vpop.f32.mrf.mxu0
      %v2158 = vadd.f32 0.0, %v2157
      %v2159 = vpop.f32.mrf.mxu0
      %2160 = vmatprep.mubr.f32.mxu0 0.0
      %2161 = vmatmul.mubr.f32.gmra.mxu0 %v1947
      %v2162 = vpop.f32.mrf.mxu0
      %v2163 = vadd.f32 0.0, %v2162
      %v2164 = vpop.f32.mrf.mxu0
      %2165 = vmatprep.mubr.f32.mxu0 0.0
      %2166 = vmatmul.mubr.f32.gmra.mxu0 %v1950
      %v2167 = vpop.f32.mrf.mxu0
      %v2168 = vadd.f32 0.0, %v2167
      %v2169 = vpop.f32.mrf.mxu0
      %2170 = vmatprep.mubr.f32.mxu0 0.0
      %2171 = vmatmul.mubr.f32.gmra.mxu0 %v1953
      %v2172 = vpop.f32.mrf.mxu0
      %v2173 = vadd.f32 0.0, %v2172
      %v2174 = vpop.f32.mrf.mxu0
      %2175 = vmatprep.mubr.f32.mxu0 0.0
      %2176 = vmatmul.mubr.f32.gmra.mxu0 %v1956
      %v2177 = vpop.f32.mrf.mxu0
      %v2178 = vadd.f32 0.0, %v2177
      %v2179 = vpop.f32.mrf.mxu0
      %2180 = vmatprep.mubr.f32.mxu0 0.0
      %2181 = vmatmul.mubr.f32.gmra.mxu0 %v1959
      %v2182 = vpop.f32.mrf.mxu0
      %v2183 = vadd.f32 0.0, %v2182
      %v2184 = vpop.f32.mrf.mxu0
      %2185 = vmatprep.mubr.f32.mxu0 0.0
      %2186 = vmatmul.mubr.f32.gmra.mxu0 %v1962
      %v2187 = vpop.f32.mrf.mxu0
      %v2188 = vadd.f32 0.0, %v2187
      %v2189 = vpop.f32.mrf.mxu0
      %2190 = vmatprep.mubr.f32.mxu0 0.0
      %2191 = vmatmul.mubr.f32.gmra.mxu0 %v1965
      %v2192 = vpop.f32.mrf.mxu0
      %v2193 = vadd.f32 0.0, %v2192
      %v2194 = vpop.f32.mrf.mxu0
      %2195 = vdwg.mxu0
      %2196 = vst.msk [vmem:[%s177] sm:$0xff] %vm214, %v2038
      %2197 = vst.msk [vmem:[%s177 + $0x8] sm:$0xff] %vm214, %v2043
      %2198 = vst.msk [vmem:[%s177 + $0x10] sm:$0xff] %vm214, %v2048
      %2199 = vst.msk [vmem:[%s177 + $0x18] sm:$0xff] %vm214, %v2053
      %2200 = vst.msk [vmem:[%s177 + $0x20] sm:$0xff] %vm214, %v2058
      %2201 = vst.msk [vmem:[%s177 + $0x28] sm:$0xff] %vm214, %v2063
      %2202 = vst.msk [vmem:[%s177 + $0x30] sm:$0xff] %vm214, %v2068
      %2203 = vst.msk [vmem:[%s177 + $0x38] sm:$0xff] %vm214, %v2073
      %2204 = vst.msk [vmem:[%s177 + $0x40] sm:$0xff] %vm214, %v2078
      %2205 = vst.msk [vmem:[%s177 + $0x48] sm:$0xff] %vm214, %v2083
      %2206 = vst.msk [vmem:[%s177 + $0x50] sm:$0xff] %vm214, %v2088
      %2207 = vst.msk [vmem:[%s177 + $0x58] sm:$0xff] %vm214, %v2093
      %2208 = vst.msk [vmem:[%s177 + $0x60] sm:$0xff] %vm214, %v2098
      %2209 = vst.msk [vmem:[%s177 + $0x68] sm:$0xff] %vm214, %v2103
      %2210 = vst.msk [vmem:[%s177 + $0x70] sm:$0xff] %vm214, %v2108
      %2211 = vst.msk [vmem:[%s177 + $0x78] sm:$0xff] %vm214, %v2113
      %2212 = vst.msk [vmem:[%s177 + $0x80] sm:$0xff] %vm214, %v2118
      %2213 = vst.msk [vmem:[%s177 + $0x88] sm:$0xff] %vm214, %v2123
      %2214 = vst.msk [vmem:[%s177 + $0x90] sm:$0xff] %vm214, %v2128
      %2215 = vst.msk [vmem:[%s177 + $0x98] sm:$0xff] %vm214, %v2133
      %2216 = vst.msk [vmem:[%s177 + $0xa0] sm:$0xff] %vm214, %v2138
      %2217 = vst.msk [vmem:[%s177 + $0xa8] sm:$0xff] %vm214, %v2143
      %2218 = vst.msk [vmem:[%s177 + $0xb0] sm:$0xff] %vm214, %v2148
      %2219 = vst.msk [vmem:[%s177 + $0xb8] sm:$0xff] %vm214, %v2153
      %2220 = vst.msk [vmem:[%s177 + $0xc0] sm:$0xff] %vm214, %v2158
      %2221 = vst.msk [vmem:[%s177 + $0xc8] sm:$0xff] %vm214, %v2163
      %2222 = vst.msk [vmem:[%s177 + $0xd0] sm:$0xff] %vm214, %v2168
      %2223 = vst.msk [vmem:[%s177 + $0xd8] sm:$0xff] %vm214, %v2173
      %2224 = vst.msk [vmem:[%s177 + $0xe0] sm:$0xff] %vm214, %v2178
      %2225 = vst.msk [vmem:[%s177 + $0xe8] sm:$0xff] %vm214, %v2183
      %2226 = vst.msk [vmem:[%s177 + $0xf0] sm:$0xff] %vm214, %v2188
      %2227 = vst.msk [vmem:[%s177 + $0xf8] sm:$0xff] %vm214, %v2193
      %v2228 = vsel %vm214, %v2038, 0.0
      %v2229 = vsel %vm214, %v2043, 0.0
      %v2230 = vadd.f32 %v2228, %v2229
      %v2231 = vsel %vm214, %v2048, 0.0
      %v2232 = vadd.f32 %v2230, %v2231
      %v2233 = vsel %vm214, %v2053, 0.0
      %v2234 = vadd.f32 %v2232, %v2233
      %v2235 = vsel %vm214, %v2058, 0.0
      %v2236 = vadd.f32 %v2234, %v2235
      %v2237 = vsel %vm214, %v2063, 0.0
      %v2238 = vadd.f32 %v2236, %v2237
      %v2239 = vsel %vm214, %v2068, 0.0
      %v2240 = vadd.f32 %v2238, %v2239
      %v2241 = vsel %vm214, %v2073, 0.0
      %v2242 = vadd.f32 %v2240, %v2241
      %v2243 = vsel %vm214, %v2078, 0.0
      %v2244 = vadd.f32 %v2242, %v2243
      %v2245 = vsel %vm214, %v2083, 0.0
      %v2246 = vadd.f32 %v2244, %v2245
      %v2247 = vsel %vm214, %v2088, 0.0
      %v2248 = vadd.f32 %v2246, %v2247
      %v2249 = vsel %vm214, %v2093, 0.0
      %v2250 = vadd.f32 %v2248, %v2249
      %v2251 = vsel %vm214, %v2098, 0.0
      %v2252 = vadd.f32 %v2250, %v2251
      %v2253 = vsel %vm214, %v2103, 0.0
      %v2254 = vadd.f32 %v2252, %v2253
      %v2255 = vsel %vm214, %v2108, 0.0
      %v2256 = vadd.f32 %v2254, %v2255
      %v2257 = vsel %vm214, %v2113, 0.0
      %v2258 = vadd.f32 %v2256, %v2257
      %v2259 = vsel %vm214, %v2118, 0.0
      %v2260 = vadd.f32 %v2258, %v2259
      %v2261 = vsel %vm214, %v2123, 0.0
      %v2262 = vadd.f32 %v2260, %v2261
      %v2263 = vsel %vm214, %v2128, 0.0
      %v2264 = vadd.f32 %v2262, %v2263
      %v2265 = vsel %vm214, %v2133, 0.0
      %v2266 = vadd.f32 %v2264, %v2265
      %v2267 = vsel %vm214, %v2138, 0.0
      %v2268 = vadd.f32 %v2266, %v2267
      %v2269 = vsel %vm214, %v2143, 0.0
      %v2270 = vadd.f32 %v2268, %v2269
      %v2271 = vsel %vm214, %v2148, 0.0
      %v2272 = vadd.f32 %v2270, %v2271
      %v2273 = vsel %vm214, %v2153, 0.0
      %v2274 = vadd.f32 %v2272, %v2273
      %v2275 = vsel %vm214, %v2158, 0.0
      %v2276 = vadd.f32 %v2274, %v2275
      %v2277 = vsel %vm214, %v2163, 0.0
      %v2278 = vadd.f32 %v2276, %v2277
      %v2279 = vsel %vm214, %v2168, 0.0
      %v2280 = vadd.f32 %v2278, %v2279
      %v2281 = vsel %vm214, %v2173, 0.0
      %v2282 = vadd.f32 %v2280, %v2281
      %v2283 = vsel %vm214, %v2178, 0.0
      %v2284 = vadd.f32 %v2282, %v2283
      %v2285 = vsel %vm214, %v2183, 0.0
      %v2286 = vadd.f32 %v2284, %v2285
      %v2287 = vsel %vm214, %v2188, 0.0
      %v2288 = vadd.f32 %v2286, %v2287
      %v2289 = vsel %vm214, %v2193, 0.0
      %v2290 = vadd.f32 %v2288, %v2289
      %v2291 = vrot.slane %v2290, 4
      %v2292 = vadd.f32 %v2290, %v2291
      %v2293 = vrot.slane %v2292, 2
      %v2294 = vadd.f32 %v2292, %v2293
      %v2295 = vrot.slane %v2294, 1
      %v2296 = vadd.f32 %v2294, %v2295
      %v2297 = vmul.f32 %v2038, %v2038
      %v2298 = vmul.f32 %v2043, %v2043
      %v2299 = vmul.f32 %v2048, %v2048
      %v2300 = vmul.f32 %v2053, %v2053
      %v2301 = vmul.f32 %v2058, %v2058
      %v2302 = vmul.f32 %v2063, %v2063
      %v2303 = vmul.f32 %v2068, %v2068
      %v2304 = vmul.f32 %v2073, %v2073
      %v2305 = vmul.f32 %v2078, %v2078
      %v2306 = vmul.f32 %v2083, %v2083
      %v2307 = vmul.f32 %v2088, %v2088
      %v2308 = vmul.f32 %v2093, %v2093
      %v2309 = vmul.f32 %v2098, %v2098
      %v2310 = vmul.f32 %v2103, %v2103
      %v2311 = vmul.f32 %v2108, %v2108
      %v2312 = vmul.f32 %v2113, %v2113
      %v2313 = vmul.f32 %v2118, %v2118
      %v2314 = vmul.f32 %v2123, %v2123
      %v2315 = vmul.f32 %v2128, %v2128
      %v2316 = vmul.f32 %v2133, %v2133
      %v2317 = vmul.f32 %v2138, %v2138
      %v2318 = vmul.f32 %v2143, %v2143
      %v2319 = vmul.f32 %v2148, %v2148
      %v2320 = vmul.f32 %v2153, %v2153
      %v2321 = vmul.f32 %v2158, %v2158
      %v2322 = vmul.f32 %v2163, %v2163
      %v2323 = vmul.f32 %v2168, %v2168
      %v2324 = vmul.f32 %v2173, %v2173
      %v2325 = vmul.f32 %v2178, %v2178
      %v2326 = vmul.f32 %v2183, %v2183
      %v2327 = vmul.f32 %v2188, %v2188
      %v2328 = vmul.f32 %v2193, %v2193
      %v2329 = vsel %vm214, %v2297, 0.0
      %v2330 = vsel %vm214, %v2298, 0.0
      %v2331 = vadd.f32 %v2329, %v2330
      %v2332 = vsel %vm214, %v2299, 0.0
      %v2333 = vadd.f32 %v2331, %v2332
      %v2334 = vsel %vm214, %v2300, 0.0
      %v2335 = vadd.f32 %v2333, %v2334
      %v2336 = vsel %vm214, %v2301, 0.0
      %v2337 = vadd.f32 %v2335, %v2336
      %v2338 = vsel %vm214, %v2302, 0.0
      %v2339 = vadd.f32 %v2337, %v2338
      %v2340 = vsel %vm214, %v2303, 0.0
      %v2341 = vadd.f32 %v2339, %v2340
      %v2342 = vsel %vm214, %v2304, 0.0
      %v2343 = vadd.f32 %v2341, %v2342
      %v2344 = vsel %vm214, %v2305, 0.0
      %v2345 = vadd.f32 %v2343, %v2344
      %v2346 = vsel %vm214, %v2306, 0.0
      %v2347 = vadd.f32 %v2345, %v2346
      %v2348 = vsel %vm214, %v2307, 0.0
      %v2349 = vadd.f32 %v2347, %v2348
      %v2350 = vsel %vm214, %v2308, 0.0
      %v2351 = vadd.f32 %v2349, %v2350
      %v2352 = vsel %vm214, %v2309, 0.0
      %v2353 = vadd.f32 %v2351, %v2352
      %v2354 = vsel %vm214, %v2310, 0.0
      %v2355 = vadd.f32 %v2353, %v2354
      %v2356 = vsel %vm214, %v2311, 0.0
      %v2357 = vadd.f32 %v2355, %v2356
      %v2358 = vsel %vm214, %v2312, 0.0
      %v2359 = vadd.f32 %v2357, %v2358
      %v2360 = vsel %vm214, %v2313, 0.0
      %v2361 = vadd.f32 %v2359, %v2360
      %v2362 = vsel %vm214, %v2314, 0.0
      %v2363 = vadd.f32 %v2361, %v2362
      %v2364 = vsel %vm214, %v2315, 0.0
      %v2365 = vadd.f32 %v2363, %v2364
      %v2366 = vsel %vm214, %v2316, 0.0
      %v2367 = vadd.f32 %v2365, %v2366
      %v2368 = vsel %vm214, %v2317, 0.0
      %v2369 = vadd.f32 %v2367, %v2368
      %v2370 = vsel %vm214, %v2318, 0.0
      %v2371 = vadd.f32 %v2369, %v2370
      %v2372 = vsel %vm214, %v2319, 0.0
      %v2373 = vadd.f32 %v2371, %v2372
      %v2374 = vsel %vm214, %v2320, 0.0
      %v2375 = vadd.f32 %v2373, %v2374
      %v2376 = vsel %vm214, %v2321, 0.0
      %v2377 = vadd.f32 %v2375, %v2376
      %v2378 = vsel %vm214, %v2322, 0.0
      %v2379 = vadd.f32 %v2377, %v2378
      %v2380 = vsel %vm214, %v2323, 0.0
      %v2381 = vadd.f32 %v2379, %v2380
      %v2382 = vsel %vm214, %v2324, 0.0
      %v2383 = vadd.f32 %v2381, %v2382
      %v2384 = vsel %vm214, %v2325, 0.0
      %v2385 = vadd.f32 %v2383, %v2384
      %v2386 = vsel %vm214, %v2326, 0.0
      %v2387 = vadd.f32 %v2385, %v2386
      %v2388 = vsel %vm214, %v2327, 0.0
      %v2389 = vadd.f32 %v2387, %v2388
      %v2390 = vsel %vm214, %v2328, 0.0
      %v2391 = vadd.f32 %v2389, %v2390
      %v2392 = vrot.slane %v2391, 4
      %v2393 = vadd.f32 %v2391, %v2392
      %v2394 = vrot.slane %v2393, 2
      %v2395 = vadd.f32 %v2393, %v2394
      %v2396 = vrot.slane %v2395, 1
      %v2397 = vadd.f32 %v2395, %v2396
      %vm2398 = vcmask 1040384
      %v2399 = vsel %vm2398, %v2296, %v2397
      %2400 = vst.msk [vmem:[%s181] sm:$0x3] %vm217, %v2399
      %p2401 = scmp.lt.s32.totalorder %s15, 1
      %s2402 = scalar_select %p2401, %s15, 1
      %s2403 = smul.addr %s2402, 32
      %s2404 = smul.addr %s2403, 8
      %s2405 = scalar_lea.vmem %s2, %s2404
      %p2406 = scmp.lt.s32.totalorder %s15, 1
      %s2407 = scalar_select %p2406, %s15, 1
      %s2408 = smul.addr %s2407, 2
      %s2409 = scalar_lea.vmem %s3, %s2408
      // Predicated region
      $region29: #{basic_block.3} parent=27 // pred_check
        %p2410 = pneg %p80
      $region30: #{basic_block.3} parent=27 // pred_check_branch
        %2412 = sbr.rel (%p2410) target = $region32
      $region31: #{basic_block.3} parent=27 // pred_region
        _
      $region32: #{basic_block.3} parent=27 // pred_fallthru
        _
      // Predicated region
      $region33: #{basic_block.3} parent=27 // pred_check
        %p2413 = pneg %p106
      $region34: #{basic_block.3} parent=27 // pred_check_branch
        %2415 = sbr.rel (%p2413) target = $region36
      $region35: #{basic_block.3} parent=27 // pred_region
        _
      $region36: #{basic_block.3} parent=27 // pred_fallthru
        _
    $region28: #{basic_block.3} parent=5 // pred_fallthru
      _
    %p2416 = scmp.le.s32.totalorder 2, %s10
    // Predicated region
    $region37: #{basic_block.3} parent=5 // pred_check
      %p2417 = pneg %p2416
    $region38: #{basic_block.3} parent=5 // pred_check_branch
      %2419 = sbr.rel (%p2417) target = $region40
    $region39: #{basic_block.3} parent=5 // pred_region
      %s2420 = ssub.s32 %s10, 2
      // Predicated region
      $region41: #{basic_block.3} parent=39 // pred_check
        %p2421 = pneg %p86
      $region42: #{basic_block.3} parent=39 // pred_check_branch
        %2423 = sbr.rel (%p2421) target = $region44
      $region43: #{basic_block.3} parent=39 // pred_region
        %p2424 = scmp.lt.s32.totalorder %s16, 1
        %s2425 = scalar_select %p2424, %s16, 1
        %s2426 = smul.addr %s2425, 32
        %s2427 = smul.addr %s2426, 8
        %s2428 = scalar_lea.vmem %s2, %s2427
      $region44: #{basic_block.3} parent=39 // pred_fallthru
        _
      // Predicated region
      $region45: #{basic_block.3} parent=39 // pred_check
        %p2429 = pneg %p112
      $region46: #{basic_block.3} parent=39 // pred_check_branch
        %2431 = sbr.rel (%p2429) target = $region48
      $region47: #{basic_block.3} parent=39 // pred_region
        %p2432 = scmp.lt.s32.totalorder %s16, 1
        %s2433 = scalar_select %p2432, %s16, 1
        %s2434 = smul.addr %s2433, 2
        %s2435 = scalar_lea.vmem %s3, %s2434
      $region48: #{basic_block.3} parent=39 // pred_fallthru
        _
    $region40: #{basic_block.3} parent=5 // pred_fallthru
      _
  $region6: #{basic_block.3} parent=0 // loop_footer
    %s14 = sadd.s32 1, %s10
  $region7: #{basic_block.3} parent=0 // loop_footer_branch
    %9 = sbr.rel target = $region3
  $region8: #{basic_block.3} parent=0 // loop_exit
    _

// kernel: basic_block.4
$region0: #{basic_block.4}
  #allocation0 [shape = 'u32[]', space=smem, size = 0x4, offset = 0x4, fixed_abs, tag = 'smem constant byte address 0x4 - core index']
  #allocation1 [shape = 'u32[144,128]{1,0:T(1,128)}', space=vmem, size = 0x12000, scoped, tag = 'internal scratch']
  #allocation2 [shape = 'f32[1,18,18,4]{3,2,1,0:T(8,128)}', space=vmem, size = 0x36000, scoped, tag = 'scratch operand']
  %s0 = inlined_call_operand.vmem [shape: f32[2,16,16,4], index: 0, kind: input, shape index: {}]
  %s1 = inlined_call_operand.vmem [shape: f32[1,4], index: 1, kind: input, shape index: {}]
  %s2 = inlined_call_operand.vmem [shape: f32[1,4], index: 2, kind: input, shape index: {}]
  %s3 = inlined_call_operand.vmem [shape: f32[36,4], index: 3, kind: input, shape index: {}]
  %s4 = inlined_call_operand.vmem [shape: f32[2,16,16,4], index: 4, kind: output, shape index: {0}]
  %s5 = inlined_call_operand.vmem [shape: f32[2,2,4], index: 5, kind: output, shape index: {1}]
  %6 = xla_tuple %s4, %s5
  %s7 = sld [smem:[#allocation0]]
  $region57: #{basic_block.4} parent=0
    _
  %s9 = ssub.s32 1, %s7
  %s10 = scalar_select 0, %s9, %s7
  loop: start=0, step=1, limit=4
  $region2: #{basic_block.4} parent=0 // loop_pre_header
    _
  $region3: #{basic_block.4} parent=0 // loop_header
    %s12 = sphi 0, %s16
    %p13 = scmp.ge.s32.totalorder %s12, 4
    %s22 = sphi 0, %s24
    %s25 = sphi 0, %s22
    %s26 = sphi 0, %s25
    %s42 = sphi 0, %s26
    %s46 = sphi 0, %s46
    %s48 = sphi 0, %s46
    %s49 = sphi 0, %s48
    %s63 = sphi 0, %s49
    %s67 = sphi 0, %s67
    %s69 = sphi 0, %s67
    %s70 = sphi 0, %s69
    %s84 = sphi 0, %s70
    %s88 = sphi 0, %s88
    %s90 = sphi 0, %s88
    %s91 = sphi 0, %s90
    %s105 = sphi 0, %s91
    %s111 = sphi 0, %s113
    %s114 = sphi 0, %s111
    %s115 = sphi 0, %s114
    %s131 = sphi 0, %s115
    %s137 = sphi 0, %s139
    %s140 = sphi 0, %s137
    %s141 = sphi 0, %s140
    %s157 = sphi 0, %s141
  $region4: #{basic_block.4} parent=0 // loop_header_branch
    %15 = sbr.rel (%p13) target = $region8
  $region5: #{basic_block.4} parent=0 // loop_body
    %s17 = ssub.s32 %s12, 1
    %s18 = ssub.s32 %s12, 2
    %s19 = sadd.s32 %s12, 1
    %s20 = ssub.s32 %s12, %s19
    %p21 = scmp.eq.s32.totalorder %s20, 0
    %s23 = sadd.s32 %s22, 1
    %s24 = scalar_select %p21, %s22, %s23
    %p27 = pneg %p21
    %p28 = scmp.eq.s32.totalorder %s12, 1
    %p29 = por %p27, %p28
    %p30 = scmp.ne.s32.totalorder %s22, %s25
    %p31 = scmp.eq.s32.totalorder %s12, 0
    %p32 = por %p30, %p31
    %p33 = scmp.ne.s32.totalorder %s22, %s25
    %p34 = scmp.eq.s32.totalorder %s17, 1
    %p35 = por %p33, %p34
    %p36 = scmp.ne.s32.totalorder %s25, %s26
    %p37 = scmp.eq.s32.totalorder %s17, 0
    %p38 = por %p36, %p37
    %p39 = scmp.ne.s32.totalorder %s25, %s26
    %p40 = scmp.eq.s32.totalorder %s18, 1
    %p41 = por %p39, %p40
    %p43 = scmp.ne.s32.totalorder %s26, %s42
    %p44 = scmp.eq.s32.totalorder %s18, 0
    %p45 = por %p43, %p44
    %s47 = sadd.s32 %s46, 1
    %p50 = scmp.eq.s32.totalorder %s12, 1
    %p51 = scmp.ne.s32.totalorder %s46, %s48
    %p52 = scmp.eq.s32.totalorder %s12, 0
    %p53 = por %p51, %p52
    %p54 = scmp.ne.s32.totalorder %s46, %s48
    %p55 = scmp.eq.s32.totalorder %s17, 1
    %p56 = por %p54, %p55
    %p57 = scmp.ne.s32.totalorder %s48, %s49
    %p58 = scmp.eq.s32.totalorder %s17, 0
    %p59 = por %p57, %p58
    %p60 = scmp.ne.s32.totalorder %s48, %s49
    %p61 = scmp.eq.s32.totalorder %s18, 1
    %p62 = por %p60, %p61
    %p64 = scmp.ne.s32.totalorder %s49, %s63
    %p65 = scmp.eq.s32.totalorder %s18, 0
    %p66 = por %p64, %p65
    %s68 = sadd.s32 %s67, 1
    %p71 = scmp.eq.s32.totalorder %s12, 1
    %p72 = scmp.ne.s32.totalorder %s67, %s69
    %p73 = scmp.eq.s32.totalorder %s12, 0
    %p74 = por %p72, %p73
    %p75 = scmp.ne.s32.totalorder %s67, %s69
    %p76 = scmp.eq.s32.totalorder %s17, 1
    %p77 = por %p75, %p76
    %p78 = scmp.ne.s32.totalorder %s69, %s70
    %p79 = scmp.eq.s32.totalorder %s17, 0
    %p80 = por %p78, %p79
    %p81 = scmp.ne.s32.totalorder %s69, %s70
    %p82 = scmp.eq.s32.totalorder %s18, 1
    %p83 = por %p81, %p82
    %p85 = scmp.ne.s32.totalorder %s70, %s84
    %p86 = scmp.eq.s32.totalorder %s18, 0
    %p87 = por %p85, %p86
    %s89 = sadd.s32 %s88, 1
    %p92 = scmp.eq.s32.totalorder %s12, 1
    %p93 = scmp.ne.s32.totalorder %s88, %s90
    %p94 = scmp.eq.s32.totalorder %s12, 0
    %p95 = por %p93, %p94
    %p96 = scmp.ne.s32.totalorder %s88, %s90
    %p97 = scmp.eq.s32.totalorder %s17, 1
    %p98 = por %p96, %p97
    %p99 = scmp.ne.s32.totalorder %s90, %s91
    %p100 = scmp.eq.s32.totalorder %s17, 0
    %p101 = por %p99, %p100
    %p102 = scmp.ne.s32.totalorder %s90, %s91
    %p103 = scmp.eq.s32.totalorder %s18, 1
    %p104 = por %p102, %p103
    %p106 = scmp.ne.s32.totalorder %s91, %s105
    %p107 = scmp.eq.s32.totalorder %s18, 0
    %p108 = por %p106, %p107
    %s109 = ssub.s32 %s12, %s19
    %p110 = scmp.eq.s32.totalorder %s109, 0
    %s112 = sadd.s32 %s111, 1
    %s113 = scalar_select %p110, %s111, %s112
    %p116 = pneg %p110
    %p117 = scmp.eq.s32.totalorder %s12, 1
    %p118 = por %p116, %p117
    %p119 = scmp.ne.s32.totalorder %s111, %s114
    %p120 = scmp.eq.s32.totalorder %s12, 0
    %p121 = por %p119, %p120
    %p122 = scmp.ne.s32.totalorder %s111, %s114
    %p123 = scmp.eq.s32.totalorder %s17, 1
    %p124 = por %p122, %p123
    %p125 = scmp.ne.s32.totalorder %s114, %s115
    %p126 = scmp.eq.s32.totalorder %s17, 0
    %p127 = por %p125, %p126
    %p128 = scmp.ne.s32.totalorder %s114, %s115
    %p129 = scmp.eq.s32.totalorder %s18, 1
    %p130 = por %p128, %p129
    %p132 = scmp.ne.s32.totalorder %s115, %s131
    %p133 = scmp.eq.s32.totalorder %s18, 0
    %p134 = por %p132, %p133
    %s135 = ssub.s32 %s12, %s19
    %p136 = scmp.eq.s32.totalorder %s135, 0
    %s138 = sadd.s32 %s137, 1
    %s139 = scalar_select %p136, %s137, %s138
    %p142 = pneg %p136
    %p143 = scmp.eq.s32.totalorder %s12, 1
    %p144 = por %p142, %p143
    %p145 = scmp.ne.s32.totalorder %s137, %s140
    %p146 = scmp.eq.s32.totalorder %s12, 0
    %p147 = por %p145, %p146
    %p148 = scmp.ne.s32.totalorder %s137, %s140
    %p149 = scmp.eq.s32.totalorder %s17, 1
    %p150 = por %p148, %p149
    %p151 = scmp.ne.s32.totalorder %s140, %s141
    %p152 = scmp.eq.s32.totalorder %s17, 0
    %p153 = por %p151, %p152
    %p154 = scmp.ne.s32.totalorder %s140, %s141
    %p155 = scmp.eq.s32.totalorder %s18, 1
    %p156 = por %p154, %p155
    %p158 = scmp.ne.s32.totalorder %s141, %s157
    %p159 = scmp.eq.s32.totalorder %s18, 0
    %p160 = por %p158, %p159
    %p161 = scmp.le.s32.totalorder 1, %s12
    %p162 = scmp.lt.s32.totalorder %s12, 3
    %p163 = pnand %p161, %p162
    %p164 = pneg %p163
    // Predicated region
    $region9: #{basic_block.4} parent=5 // pred_check
      _
    $region10: #{basic_block.4} parent=5 // pred_check_branch
      %166 = sbr.rel (%p163) target = $region12
    $region11: #{basic_block.4} parent=5 // pred_region
      %s167 = ssub.s32 %s12, 1
      // Predicated region
      $region13: #{basic_block.4} parent=11 // pred_check
        %p168 = pneg %p59
      $region14: #{basic_block.4} parent=11 // pred_check_branch
        %170 = sbr.rel (%p168) target = $region16
      $region15: #{basic_block.4} parent=11 // pred_region
        _
      $region16: #{basic_block.4} parent=11 // pred_fallthru
        _
      // Predicated region
      $region17: #{basic_block.4} parent=11 // pred_check
        %p171 = pneg %p80
      $region18: #{basic_block.4} parent=11 // pred_check_branch
        %173 = sbr.rel (%p171) target = $region20
      $region19: #{basic_block.4} parent=11 // pred_region
        _
      $region20: #{basic_block.4} parent=11 // pred_fallthru
        _
      // Predicated region
      $region21: #{basic_block.4} parent=11 // pred_check
        %p174 = pneg %p101
      $region22: #{basic_block.4} parent=11 // pred_check_branch
        %176 = sbr.rel (%p174) target = $region24
      $region23: #{basic_block.4} parent=11 // pred_region
        _
      $region24: #{basic_block.4} parent=11 // pred_fallthru
        _
    $region12: #{basic_block.4} parent=5 // pred_fallthru
      _
    %p177 = scmp.lt.s32.totalorder %s12, 2
    // Predicated region
    $region25: #{basic_block.4} parent=5 // pred_check
      %p178 = pneg %p177
    $region26: #{basic_block.4} parent=5 // pred_check_branch
      %180 = sbr.rel (%p178) target = $region28
    $region27: #{basic_block.4} parent=5 // pred_region
      // Predicated region
      $region29: #{basic_block.4} parent=27 // pred_check
        %p181 = pneg %p32
      $region30: #{basic_block.4} parent=27 // pred_check_branch
        %183 = sbr.rel (%p181) target = $region32
      $region31: #{basic_block.4} parent=27 // pred_region
        %p184 = scmp.lt.s32.totalorder %s12, 1
        %s185 = scalar_select %p184, %s12, 1
        %s186 = smul.addr %s185, 32
        %s187 = smul.addr %s186, 8
        %s188 = scalar_lea.vmem %s0, %s187
      $region32: #{basic_block.4} parent=27 // pred_fallthru
        _
    $region28: #{basic_block.4} parent=5 // pred_fallthru
      _
    %p189 = scmp.le.s32.totalorder 1, %s12
    %p190 = scmp.lt.s32.totalorder %s12, 3
    %p191 = pnand %p189, %p190
    %p192 = pneg %p191
    // Predicated region
    $region33: #{basic_block.4} parent=5 // pred_check
      _
    $region34: #{basic_block.4} parent=5 // pred_check_branch
      %194 = sbr.rel (%p191) target = $region36
    $region35: #{basic_block.4} parent=5 // pred_region
      %s195 = ssub.s32 %s12, 1
      %p196 = scmp.lt.s32.totalorder %s17, 1
      %s197 = scalar_select %p196, %s17, 1
      %s198 = smul.addr %s197, 32
      %s199 = smul.addr %s198, 8
      %s200 = scalar_lea.vmem %s0, %s199
      %p201 = pneg %p38
      %p202 = pneg %p35
      %p203 = pneg %p59
      %p204 = pneg %p56
      %p205 = pneg %p80
      %p206 = pneg %p77
      %p207 = pneg %p101
      %p208 = pneg %p98
      %p209 = pneg %p127
      %p210 = pneg %p124
      %p211 = scmp.lt.s32.totalorder %s17, 1
      %s212 = scalar_select %p211, %s17, 1
      %s213 = smul.addr %s212, 32
      %s214 = smul.addr %s213, 8
      %s215 = scalar_lea.vmem %s4, %s214
      %p216 = pneg %p153
      %p217 = pneg %p150
      %p218 = scmp.lt.s32.totalorder %s17, 1
      %s219 = scalar_select %p218, %s17, 1
      %s220 = smul.addr %s219, 2
      %s221 = scalar_lea.vmem %s5, %s220
      %p222 = scmp.lt.s32.totalorder %s17, 1
      %s223 = scalar_select %p222, %s17, 1
      %s224 = smul.addr %s223, 32
      %s225 = smul.addr %s224, 8
      %s226 = scalar_lea.vmem %s0, %s225
      %p227 = scmp.lt.s32.totalorder %s17, 1
      %s228 = scalar_select %p227, %s17, 1
      %s229 = smul.addr %s228, 32
      %s230 = smul.addr %s229, 8
      %s231 = scalar_lea.vmem %s4, %s230
      %p232 = scmp.lt.s32.totalorder %s17, 1
      %s233 = scalar_select %p232, %s17, 1
      %s234 = smul.addr %s233, 2
      %s235 = scalar_lea.vmem %s5, %s234
      %v236 = vld [vmem:[%s226] sm:$0xff]
      %v237 = vld [vmem:[%s226 + $0x8] sm:$0xff]
      %v238 = vld [vmem:[%s226 + $0x10] sm:$0xff]
      %v239 = vld [vmem:[%s226 + $0x18] sm:$0xff]
      %v240 = vld [vmem:[%s226 + $0x20] sm:$0xff]
      %v241 = vld [vmem:[%s226 + $0x28] sm:$0xff]
      %v242 = vld [vmem:[%s226 + $0x30] sm:$0xff]
      %v243 = vld [vmem:[%s226 + $0x38] sm:$0xff]
      %v244 = vld [vmem:[%s226 + $0x40] sm:$0xff]
      %v245 = vld [vmem:[%s226 + $0x48] sm:$0xff]
      %v246 = vld [vmem:[%s226 + $0x50] sm:$0xff]
      %v247 = vld [vmem:[%s226 + $0x58] sm:$0xff]
      %v248 = vld [vmem:[%s226 + $0x60] sm:$0xff]
      %v249 = vld [vmem:[%s226 + $0x68] sm:$0xff]
      %v250 = vld [vmem:[%s226 + $0x70] sm:$0xff]
      %v251 = vld [vmem:[%s226 + $0x78] sm:$0xff]
      %v252 = vld [vmem:[%s226 + $0x80] sm:$0xff]
      %v253 = vld [vmem:[%s226 + $0x88] sm:$0xff]
      %v254 = vld [vmem:[%s226 + $0x90] sm:$0xff]
      %v255 = vld [vmem:[%s226 + $0x98] sm:$0xff]
      %v256 = vld [vmem:[%s226 + $0xa0] sm:$0xff]
      %v257 = vld [vmem:[%s226 + $0xa8] sm:$0xff]
      %v258 = vld [vmem:[%s226 + $0xb0] sm:$0xff]
      %v259 = vld [vmem:[%s226 + $0xb8] sm:$0xff]
      %v260 = vld [vmem:[%s226 + $0xc0] sm:$0xff]
      %v261 = vld [vmem:[%s226 + $0xc8] sm:$0xff]
      %v262 = vld [vmem:[%s226 + $0xd0] sm:$0xff]
      %v263 = vld [vmem:[%s226 + $0xd8] sm:$0xff]
      %v264 = vld [vmem:[%s226 + $0xe0] sm:$0xff]
      %v265 = vld [vmem:[%s226 + $0xe8] sm:$0xff]
      %v266 = vld [vmem:[%s226 + $0xf0] sm:$0xff]
      %v267 = vld [vmem:[%s226 + $0xf8] sm:$0xff]
      %v268 = vld [vmem:[%s1] sm:$0x1]
      %v270 = vlaneseq
      %v271 = vshrl.u32 %v270, 7
      %v272 = vsub.s32 0, %v271
      %v273 = vrot.slane %v268, %v272
      %v275 = vmul.f32 %v236, %v273
      %v276 = vmul.f32 %v237, %v273
      %v277 = vmul.f32 %v238, %v273
      %v278 = vmul.f32 %v239, %v273
      %v279 = vmul.f32 %v240, %v273
      %v280 = vmul.f32 %v241, %v273
      %v281 = vmul.f32 %v242, %v273
      %v282 = vmul.f32 %v243, %v273
      %v283 = vmul.f32 %v244, %v273
      %v284 = vmul.f32 %v245, %v273
      %v285 = vmul.f32 %v246, %v273
      %v286 = vmul.f32 %v247, %v273
      %v287 = vmul.f32 %v248, %v273
      %v288 = vmul.f32 %v249, %v273
      %v289 = vmul.f32 %v250, %v273
      %v290 = vmul.f32 %v251, %v273
      %v291 = vmul.f32 %v252, %v273
      %v292 = vmul.f32 %v253, %v273
      %v293 = vmul.f32 %v254, %v273
      %v294 = vmul.f32 %v255, %v273
      %v295 = vmul.f32 %v256, %v273
      %v296 = vmul.f32 %v257, %v273
      %v297 = vmul.f32 %v258, %v273
      %v298 = vmul.f32 %v259, %v273
      %v299 = vmul.f32 %v260, %v273
      %v300 = vmul.f32 %v261, %v273
      %v301 = vmul.f32 %v262, %v273
      %v302 = vmul.f32 %v263, %v273
      %v303 = vmul.f32 %v264, %v273
      %v304 = vmul.f32 %v265, %v273
      %v305 = vmul.f32 %v266, %v273
      %v306 = vmul.f32 %v267, %v273
      %v307 = vld [vmem:[%s2] sm:$0x1]
      %v309 = vlaneseq
      %v310 = vshrl.u32 %v309, 7
      %v311 = vsub.s32 0, %v310
      %v312 = vrot.slane %v307, %v311
      %v314 = vadd.f32 %v275, %v312
      %v315 = vadd.f32 %v276, %v312
      %v316 = vadd.f32 %v277, %v312
      %v317 = vadd.f32 %v278, %v312
      %v318 = vadd.f32 %v279, %v312
      %v319 = vadd.f32 %v280, %v312
      %v320 = vadd.f32 %v281, %v312
      %v321 = vadd.f32 %v282, %v312
      %v322 = vadd.f32 %v283, %v312
      %v323 = vadd.f32 %v284, %v312
      %v324 = vadd.f32 %v285, %v312
      %v325 = vadd.f32 %v286, %v312
      %v326 = vadd.f32 %v287, %v312
      %v327 = vadd.f32 %v288, %v312
      %v328 = vadd.f32 %v289, %v312
      %v329 = vadd.f32 %v290, %v312
      %v330 = vadd.f32 %v291, %v312
      %v331 = vadd.f32 %v292, %v312
      %v332 = vadd.f32 %v293, %v312
      %v333 = vadd.f32 %v294, %v312
      %v334 = vadd.f32 %v295, %v312
      %v335 = vadd.f32 %v296, %v312
      %v336 = vadd.f32 %v297, %v312
      %v337 = vadd.f32 %v298, %v312
      %v338 = vadd.f32 %v299, %v312
      %v339 = vadd.f32 %v300, %v312
      %v340 = vadd.f32 %v301, %v312
      %v341 = vadd.f32 %v302, %v312
      %v342 = vadd.f32 %v303, %v312
      %v343 = vadd.f32 %v304, %v312
      %v344 = vadd.f32 %v305, %v312
      %v345 = vadd.f32 %v306, %v312
      %v346 = vmax.f32 %v314, 0.0
      %v347 = vmax.f32 %v315, 0.0
      %v348 = vmax.f32 %v316, 0.0
      %v349 = vmax.f32 %v317, 0.0
      %v350 = vmax.f32 %v318, 0.0
      %v351 = vmax.f32 %v319, 0.0
      %v352 = vmax.f32 %v320, 0.0
      %v353 = vmax.f32 %v321, 0.0
      %v354 = vmax.f32 %v322, 0.0
      %v355 = vmax.f32 %v323, 0.0
      %v356 = vmax.f32 %v324, 0.0
      %v357 = vmax.f32 %v325, 0.0
      %v358 = vmax.f32 %v326, 0.0
      %v359 = vmax.f32 %v327, 0.0
      %v360 = vmax.f32 %v328, 0.0
      %v361 = vmax.f32 %v329, 0.0
      %v362 = vmax.f32 %v330, 0.0
      %v363 = vmax.f32 %v331, 0.0
      %v364 = vmax.f32 %v332, 0.0
      %v365 = vmax.f32 %v333, 0.0
      %v366 = vmax.f32 %v334, 0.0
      %v367 = vmax.f32 %v335, 0.0
      %v368 = vmax.f32 %v336, 0.0
      %v369 = vmax.f32 %v337, 0.0
      %v370 = vmax.f32 %v338, 0.0
      %v371 = vmax.f32 %v339, 0.0
      %v372 = vmax.f32 %v340, 0.0
      %v373 = vmax.f32 %v341, 0.0
      %v374 = vmax.f32 %v342, 0.0
      %v375 = vmax.f32 %v343, 0.0
      %v376 = vmax.f32 %v344, 0.0
      %v377 = vmax.f32 %v345, 0.0
      %vm378 = vcmask 31744
      %379 = vst.msk [vmem:[#allocation2] sm:$0xff] %vm378, 0.0
      %380 = vst.msk [vmem:[#allocation2 + $0x8] sm:$0xff] %vm378, 0.0
      %vm381 = vcmask 25600
      %382 = vst.msk [vmem:[#allocation2 + $0x10] sm:$0x3] %vm381, 0.0
      %s383 = scalar_lea.vmem [#allocation2], 408
      %384 = vst.msk [vmem:[%s383] sm:$0xff] %vm378, 0.0
      %385 = vst.msk [vmem:[%s383 + $0x8] sm:$0xff] %vm378, 0.0
      %386 = vst.msk [vmem:[%s383 + $0x10] sm:$0x3] %vm381, 0.0
      %s387 = scalar_lea.vmem [#allocation2], 24
      %vm388 = vcmask 24576
      %389 = vst.msk [vmem:[%s387] sm:$0x1] %vm388, 0.0
      %390 = vst.msk [vmem:[%s387 + $0x18] sm:$0x1] %vm388, 0.0
      %391 = vst.msk [vmem:[%s387 + $0x30] sm:$0x1] %vm388, 0.0
      %392 = vst.msk [vmem:[%s387 + $0x48] sm:$0x1] %vm388, 0.0
      %393 = vst.msk [vmem:[%s387 + $0x60] sm:$0x1] %vm388, 0.0
      %394 = vst.msk [vmem:[%s387 + $0x78] sm:$0x1] %vm388, 0.0
      %395 = vst.msk [vmem:[%s387 + $0x90] sm:$0x1] %vm388, 0.0
      %396 = vst.msk [vmem:[%s387 + $0xa8] sm:$0x1] %vm388, 0.0
      %397 = vst.msk [vmem:[%s387 + $0xc0] sm:$0x1] %vm388, 0.0
      %398 = vst.msk [vmem:[%s387 + $0xd8] sm:$0x1] %vm388, 0.0
      %399 = vst.msk [vmem:[%s387 + $0xf0] sm:$0x1] %vm388, 0.0
      %400 = vst.msk [vmem:[%s387 + $0x108] sm:$0x1] %vm388, 0.0
      %401 = vst.msk [vmem:[%s387 + $0x120] sm:$0x1] %vm388, 0.0
      %402 = vst.msk [vmem:[%s387 + $0x138] sm:$0x1] %vm388, 0.0
      %403 = vst.msk [vmem:[%s387 + $0x150] sm:$0x1] %vm388, 0.0
      %404 = vst.msk [vmem:[%s387 + $0x168] sm:$0x1] %vm388, 0.0
      %405 = vst.msk [vmem:[%s387 + $0x11] sm:$0x1] %vm388, 0.0
      %406 = vst.msk [vmem:[%s387 + $0x29] sm:$0x1] %vm388, 0.0
      %407 = vst.msk [vmem:[%s387 + $0x41] sm:$0x1] %vm388, 0.0
      %408 = vst.msk [vmem:[%s387 + $0x59] sm:$0x1] %vm388, 0.0
      %409 = vst.msk [vmem:[%s387 + $0x71] sm:$0x1] %vm388, 0.0
      %410 = vst.msk [vmem:[%s387 + $0x89] sm:$0x1] %vm388, 0.0
      %411 = vst.msk [vmem:[%s387 + $0xa1] sm:$0x1] %vm388, 0.0
      %412 = vst.msk [vmem:[%s387 + $0xb9] sm:$0x1] %vm388, 0.0
      %413 = vst.msk [vmem:[%s387 + $0xd1] sm:$0x1] %vm388, 0.0
      %414 = vst.msk [vmem:[%s387 + $0xe9] sm:$0x1] %vm388, 0.0
      %415 = vst.msk [vmem:[%s387 + $0x101] sm:$0x1] %vm388, 0.0
      %416 = vst.msk [vmem:[%s387 + $0x119] sm:$0x1] %vm388, 0.0
      %417 = vst.msk [vmem:[%s387 + $0x131] sm:$0x1] %vm388, 0.0
      %418 = vst.msk [vmem:[%s387 + $0x149] sm:$0x1] %vm388, 0.0
      %419 = vst.msk [vmem:[%s387 + $0x161] sm:$0x1] %vm388, 0.0
      %420 = vst.msk [vmem:[%s387 + $0x179] sm:$0x1] %vm388, 0.0
      %421 = vst.msk [vmem:[%s387 + $0x1] sm:$0xff] %vm378, %v346
      %422 = vst.msk [vmem:[%s387 + $0x9] sm:$0xff] %vm378, %v347
      %423 = vst.msk [vmem:[%s387 + $0x19] sm:$0xff] %vm378, %v348
      %424 = vst.msk [vmem:[%s387 + $0x21] sm:$0xff] %vm378, %v349
      %425 = vst.msk [vmem:[%s387 + $0x31] sm:$0xff] %vm378, %v350
      %426 = vst.msk [vmem:[%s387 + $0x39] sm:$0xff] %vm378, %v351
      %427 = vst.msk [vmem:[%s387 + $0x49] sm:$0xff] %vm378, %v352
      %428 = vst.msk [vmem:[%s387 + $0x51] sm:$0xff] %vm378, %v353
      %429 = vst.msk [vmem:[%s387 + $0x61] sm:$0xff] %vm378, %v354
      %430 = vst.msk [vmem:[%s387 + $0x69] sm:$0xff] %vm378, %v355
      %431 = vst.msk [vmem:[%s387 + $0x79] sm:$0xff] %vm378, %v356
      %432 = vst.msk [vmem:[%s387 + $0x81] sm:$0xff] %vm378, %v357
      %433 = vst.msk [vmem:[%s387 + $0x91] sm:$0xff] %vm378, %v358
      %434 = vst.msk [vmem:[%s387 + $0x99] sm:$0xff] %vm378, %v359
      %435 = vst.msk [vmem:[%s387 + $0xa9] sm:$0xff] %vm378, %v360
      %436 = vst.msk [vmem:[%s387 + $0xb1] sm:$0xff] %vm378, %v361
      %437 = vst.msk [vmem:[%s387 + $0xc1] sm:$0xff] %vm378, %v362
      %438 = vst.msk [vmem:[%s387 + $0xc9] sm:$0xff] %vm378, %v363
      %439 = vst.msk [vmem:[%s387 + $0xd9] sm:$0xff] %vm378, %v364
      %440 = vst.msk [vmem:[%s387 + $0xe1] sm:$0xff] %vm378, %v365
      %441 = vst.msk [vmem:[%s387 + $0xf1] sm:$0xff] %vm378, %v366
      %442 = vst.msk [vmem:[%s387 + $0xf9] sm:$0xff] %vm378, %v367
      %443 = vst.msk [vmem:[%s387 + $0x109] sm:$0xff] %vm378, %v368
      %444 = vst.msk [vmem:[%s387 + $0x111] sm:$0xff] %vm378, %v369
      %445 = vst.msk [vmem:[%s387 + $0x121] sm:$0xff] %vm378, %v370
      %446 = vst.msk [vmem:[%s387 + $0x129] sm:$0xff] %vm378, %v371
      %447 = vst.msk [vmem:[%s387 + $0x139] sm:$0xff] %vm378, %v372
      %448 = vst.msk [vmem:[%s387 + $0x141] sm:$0xff] %vm378, %v373
      %449 = vst.msk [vmem:[%s387 + $0x151] sm:$0xff] %vm378, %v374
      %450 = vst.msk [vmem:[%s387 + $0x159] sm:$0xff] %vm378, %v375
      %451 = vst.msk [vmem:[%s387 + $0x169] sm:$0xff] %vm378, %v376
      %452 = vst.msk [vmem:[%s387 + $0x171] sm:$0xff] %vm378, %v377
      %v453 = vld [vmem:[#allocation2] sm:$0xff]
      %v454 = vld [vmem:[#allocation2 + $0x8] sm:$0xff]
      %v455 = vld [vmem:[#allocation2 + $0x18] sm:$0xff]
      %v456 = vld [vmem:[#allocation2 + $0x20] sm:$0xff]
      %v457 = vld [vmem:[#allocation2 + $0x30] sm:$0xff]
      %v458 = vld [vmem:[#allocation2 + $0x38] sm:$0xff]
      %v459 = vld [vmem:[#allocation2 + $0x48] sm:$0xff]
      %v460 = vld [vmem:[#allocation2 + $0x50] sm:$0xff]
      %v461 = vld [vmem:[#allocation2 + $0x60] sm:$0xff]
      %v462 = vld [vmem:[#allocation2 + $0x68] sm:$0xff]
      %v463 = vld [vmem:[#allocation2 + $0x78] sm:$0xff]
      %v464 = vld [vmem:[#allocation2 + $0x80] sm:$0xff]
      %v465 = vld [vmem:[#allocation2 + $0x90] sm:$0xff]
      %v466 = vld [vmem:[#allocation2 + $0x98] sm:$0xff]
      %v467 = vld [vmem:[#allocation2 + $0xa8] sm:$0xff]
      %v468 = vld [vmem:[#allocation2 + $0xb0] sm:$0xff]
      %v469 = vld [vmem:[#allocation2 + $0xc0] sm:$0xff]
      %v470 = vld [vmem:[#allocation2 + $0xc8] sm:$0xff]
      %v471 = vld [vmem:[#allocation2 + $0xd8] sm:$0xff]
      %v472 = vld [vmem:[#allocation2 + $0xe0] sm:$0xff]
      %v473 = vld [vmem:[#allocation2 + $0xf0] sm:$0xff]
      %v474 = vld [vmem:[#allocation2 + $0xf8] sm:$0xff]
      %v475 = vld [vmem:[#allocation2 + $0x108] sm:$0xff]
      %v476 = vld [vmem:[#allocation2 + $0x110] sm:$0xff]
      %v477 = vld [vmem:[#allocation2 + $0x120] sm:$0xff]
      %v478 = vld [vmem:[#allocation2 + $0x128] sm:$0xff]
      %v479 = vld [vmem:[#allocation2 + $0x138] sm:$0xff]
      %v480 = vld [vmem:[#allocation2 + $0x140] sm:$0xff]
      %v481 = vld [vmem:[#allocation2 + $0x150] sm:$0xff]
      %v482 = vld [vmem:[#allocation2 + $0x158] sm:$0xff]
      %v483 = vld [vmem:[#allocation2 + $0x168] sm:$0xff]
      %v484 = vld [vmem:[#allocation2 + $0x170] sm:$0xff]
      %v485 = vld [vmem:[#allocation2 + $0x1] sm:$0xff]
      %v486 = vld [vmem:[#allocation2 + $0x9] sm:$0xff]
      %v487 = vld [vmem:[#allocation2 + $0x19] sm:$0xff]
      %v488 = vld [vmem:[#allocation2 + $0x21] sm:$0xff]
      %v489 = vld [vmem:[#allocation2 + $0x31] sm:$0xff]
      %v490 = vld [vmem:[#allocation2 + $0x39] sm:$0xff]
      %v491 = vld [vmem:[#allocation2 + $0x49] sm:$0xff]
      %v492 = vld [vmem:[#allocation2 + $0x51] sm:$0xff]
      %v493 = vld [vmem:[#allocation2 + $0x61] sm:$0xff]
      %v494 = vld [vmem:[#allocation2 + $0x69] sm:$0xff]
      %v495 = vld [vmem:[#allocation2 + $0x79] sm:$0xff]
      %v496 = vld [vmem:[#allocation2 + $0x81] sm:$0xff]
      %v497 = vld [vmem:[#allocation2 + $0x91] sm:$0xff]
      %v498 = vld [vmem:[#allocation2 + $0x99] sm:$0xff]
      %v499 = vld [vmem:[#allocation2 + $0xa9] sm:$0xff]
      %v500 = vld [vmem:[#allocation2 + $0xb1] sm:$0xff]
      %v501 = vld [vmem:[#allocation2 + $0xc1] sm:$0xff]
      %v502 = vld [vmem:[#allocation2 + $0xc9] sm:$0xff]
      %v503 = vld [vmem:[#allocation2 + $0xd9] sm:$0xff]
      %v504 = vld [vmem:[#allocation2 + $0xe1] sm:$0xff]
      %v505 = vld [vmem:[#allocation2 + $0xf1] sm:$0xff]
      %v506 = vld [vmem:[#allocation2 + $0xf9] sm:$0xff]
      %v507 = vld [vmem:[#allocation2 + $0x109] sm:$0xff]
      %v508 = vld [vmem:[#allocation2 + $0x111] sm:$0xff]
      %v509 = vld [vmem:[#allocation2 + $0x121] sm:$0xff]
      %v510 = vld [vmem:[#allocation2 + $0x129] sm:$0xff]
      %v511 = vld [vmem:[#allocation2 + $0x139] sm:$0xff]
      %v512 = vld [vmem:[#allocation2 + $0x141] sm:$0xff]
      %v513 = vld [vmem:[#allocation2 + $0x151] sm:$0xff]
      %v514 = vld [vmem:[#allocation2 + $0x159] sm:$0xff]
      %v515 = vld [vmem:[#allocation2 + $0x169] sm:$0xff]
      %v516 = vld [vmem:[#allocation2 + $0x171] sm:$0xff]
      %v517 = vld [vmem:[#allocation2 + $0x2] sm:$0xff]
      %v518 = vld [vmem:[#allocation2 + $0xa] sm:$0xff]
      %v519 = vld [vmem:[#allocation2 + $0x1a] sm:$0xff]
      %v520 = vld [vmem:[#allocation2 + $0x22] sm:$0xff]
      %v521 = vld [vmem:[#allocation2 + $0x32] sm:$0xff]
      %v522 = vld [vmem:[#allocation2 + $0x3a] sm:$0xff]
      %v523 = vld [vmem:[#allocation2 + $0x4a] sm:$0xff]
      %v524 = vld [vmem:[#allocation2 + $0x52] sm:$0xff]
      %v525 = vld [vmem:[#allocation2 + $0x62] sm:$0xff]
      %v526 = vld [vmem:[#allocation2 + $0x6a] sm:$0xff]
      %v527 = vld [vmem:[#allocation2 + $0x7a] sm:$0xff]
      %v528 = vld [vmem:[#allocation2 + $0x82] sm:$0xff]
      %v529 = vld [vmem:[#allocation2 + $0x92] sm:$0xff]
      %v530 = vld [vmem:[#allocation2 + $0x9a] sm:$0xff]
      %v531 = vld [vmem:[#allocation2 + $0xaa] sm:$0xff]
      %v532 = vld [vmem:[#allocation2 + $0xb2] sm:$0xff]
      %v533 = vld [vmem:[#allocation2 + $0xc2] sm:$0xff]
      %v534 = vld [vmem:[#allocation2 + $0xca] sm:$0xff]
      %v535 = vld [vmem:[#allocation2 + $0xda] sm:$0xff]
      %v536 = vld [vmem:[#allocation2 + $0xe2] sm:$0xff]
      %v537 = vld [vmem:[#allocation2 + $0xf2] sm:$0xff]
      %v538 = vld [vmem:[#allocation2 + $0xfa] sm:$0xff]
      %v539 = vld [vmem:[#allocation2 + $0x10a] sm:$0xff]
      %v540 = vld [vmem:[#allocation2 + $0x112] sm:$0xff]
      %v541 = vld [vmem:[#allocation2 + $0x122] sm:$0xff]
      %v542 = vld [vmem:[#allocation2 + $0x12a] sm:$0xff]
      %v543 = vld [vmem:[#allocation2 + $0x13a] sm:$0xff]
      %v544 = vld [vmem:[#allocation2 + $0x142] sm:$0xff]
      %v545 = vld [vmem:[#allocation2 + $0x152] sm:$0xff]
      %v546 = vld [vmem:[#allocation2 + $0x15a] sm:$0xff]
      %v547 = vld [vmem:[#allocation2 + $0x16a] sm:$0xff]
      %v548 = vld [vmem:[#allocation2 + $0x172] sm:$0xff]
      %v549 = vld [vmem:[%s387] sm:$0xff]
      %v550 = vld [vmem:[%s387 + $0x8] sm:$0xff]
      %v551 = vld [vmem:[%s387 + $0x18] sm:$0xff]
      %v552 = vld [vmem:[%s387 + $0x20] sm:$0xff]
      %v553 = vld [vmem:[%s387 + $0x30] sm:$0xff]
      %v554 = vld [vmem:[%s387 + $0x38] sm:$0xff]
      %v555 = vld [vmem:[%s387 + $0x48] sm:$0xff]
      %v556 = vld [vmem:[%s387 + $0x50] sm:$0xff]
      %v557 = vld [vmem:[%s387 + $0x60] sm:$0xff]
      %v558 = vld [vmem:[%s387 + $0x68] sm:$0xff]
      %v559 = vld [vmem:[%s387 + $0x78] sm:$0xff]
      %v560 = vld [vmem:[%s387 + $0x80] sm:$0xff]
      %v561 = vld [vmem:[%s387 + $0x90] sm:$0xff]
      %v562 = vld [vmem:[%s387 + $0x98] sm:$0xff]
      %v563 = vld [vmem:[%s387 + $0xa8] sm:$0xff]
      %v564 = vld [vmem:[%s387 + $0xb0] sm:$0xff]
      %v565 = vld [vmem:[%s387 + $0xc0] sm:$0xff]
      %v566 = vld [vmem:[%s387 + $0xc8] sm:$0xff]
      %v567 = vld [vmem:[%s387 + $0xd8] sm:$0xff]
      %v568 = vld [vmem:[%s387 + $0xe0] sm:$0xff]
      %v569 = vld [vmem:[%s387 + $0xf0] sm:$0xff]
      %v570 = vld [vmem:[%s387 + $0xf8] sm:$0xff]
      %v571 = vld [vmem:[%s387 + $0x108] sm:$0xff]
      %v572 = vld [vmem:[%s387 + $0x110] sm:$0xff]
      %v573 = vld [vmem:[%s387 + $0x120] sm:$0xff]
      %v574 = vld [vmem:[%s387 + $0x128] sm:$0xff]
      %v575 = vld [vmem:[%s387 + $0x138] sm:$0xff]
      %v576 = vld [vmem:[%s387 + $0x140] sm:$0xff]
      %v577 = vld [vmem:[%s387 + $0x150] sm:$0xff]
      %v578 = vld [vmem:[%s387 + $0x158] sm:$0xff]
      %v579 = vld [vmem:[%s387 + $0x168] sm:$0xff]
      %v580 = vld [vmem:[%s387 + $0x170] sm:$0xff]
      %v581 = vld [vmem:[%s387 + $0x1] sm:$0xff]
      %v582 = vld [vmem:[%s387 + $0x9] sm:$0xff]
      %v583 = vld [vmem:[%s387 + $0x19] sm:$0xff]
      %v584 = vld [vmem:[%s387 + $0x21] sm:$0xff]
      %v585 = vld [vmem:[%s387 + $0x31] sm:$0xff]
      %v586 = vld [vmem:[%s387 + $0x39] sm:$0xff]
      %v587 = vld [vmem:[%s387 + $0x49] sm:$0xff]
      %v588 = vld [vmem:[%s387 + $0x51] sm:$0xff]
      %v589 = vld [vmem:[%s387 + $0x61] sm:$0xff]
      %v590 = vld [vmem:[%s387 + $0x69] sm:$0xff]
      %v591 = vld [vmem:[%s387 + $0x79] sm:$0xff]
      %v592 = vld [vmem:[%s387 + $0x81] sm:$0xff]
      %v593 = vld [vmem:[%s387 + $0x91] sm:$0xff]
      %v594 = vld [vmem:[%s387 + $0x99] sm:$0xff]
      %v595 = vld [vmem:[%s387 + $0xa9] sm:$0xff]
      %v596 = vld [vmem:[%s387 + $0xb1] sm:$0xff]
      %v597 = vld [vmem:[%s387 + $0xc1] sm:$0xff]
      %v598 = vld [vmem:[%s387 + $0xc9] sm:$0xff]
      %v599 = vld [vmem:[%s387 + $0xd9] sm:$0xff]
      %v600 = vld [vmem:[%s387 + $0xe1] sm:$0xff]
      %v601 = vld [vmem:[%s387 + $0xf1] sm:$0xff]
      %v602 = vld [vmem:[%s387 + $0xf9] sm:$0xff]
      %v603 = vld [vmem:[%s387 + $0x109] sm:$0xff]
      %v604 = vld [vmem:[%s387 + $0x111] sm:$0xff]
      %v605 = vld [vmem:[%s387 + $0x121] sm:$0xff]
      %v606 = vld [vmem:[%s387 + $0x129] sm:$0xff]
      %v607 = vld [vmem:[%s387 + $0x139] sm:$0xff]
      %v608 = vld [vmem:[%s387 + $0x141] sm:$0xff]
      %v609 = vld [vmem:[%s387 + $0x151] sm:$0xff]
      %v610 = vld [vmem:[%s387 + $0x159] sm:$0xff]
      %v611 = vld [vmem:[%s387 + $0x169] sm:$0xff]
      %v612 = vld [vmem:[%s387 + $0x171] sm:$0xff]
      %v613 = vld [vmem:[%s387 + $0x2] sm:$0xff]
      %v614 = vld [vmem:[%s387 + $0xa] sm:$0xff]
      %v615 = vld [vmem:[%s387 + $0x1a] sm:$0xff]
      %v616 = vld [vmem:[%s387 + $0x22] sm:$0xff]
      %v617 = vld [vmem:[%s387 + $0x32] sm:$0xff]
      %v618 = vld [vmem:[%s387 + $0x3a] sm:$0xff]
      %v619 = vld [vmem:[%s387 + $0x4a] sm:$0xff]
      %v620 = vld [vmem:[%s387 + $0x52] sm:$0xff]
      %v621 = vld [vmem:[%s387 + $0x62] sm:$0xff]
      %v622 = vld [vmem:[%s387 + $0x6a] sm:$0xff]
      %v623 = vld [vmem:[%s387 + $0x7a] sm:$0xff]
      %v624 = vld [vmem:[%s387 + $0x82] sm:$0xff]
      %v625 = vld [vmem:[%s387 + $0x92] sm:$0xff]
      %v626 = vld [vmem:[%s387 + $0x9a] sm:$0xff]
      %v627 = vld [vmem:[%s387 + $0xaa] sm:$0xff]
      %v628 = vld [vmem:[%s387 + $0xb2] sm:$0xff]
      %v629 = vld [vmem:[%s387 + $0xc2] sm:$0xff]
      %v630 = vld [vmem:[%s387 + $0xca] sm:$0xff]
      %v631 = vld [vmem:[%s387 + $0xda] sm:$0xff]
      %v632 = vld [vmem:[%s387 + $0xe2] sm:$0xff]
      %v633 = vld [vmem:[%s387 + $0xf2] sm:$0xff]
      %v634 = vld [vmem:[%s387 + $0xfa] sm:$0xff]
      %v635 = vld [vmem:[%s387 + $0x10a] sm:$0xff]
      %v636 = vld [vmem:[%s387 + $0x112] sm:$0xff]
      %v637 = vld [vmem:[%s387 + $0x122] sm:$0xff]
      %v638 = vld [vmem:[%s387 + $0x12a] sm:$0xff]
      %v639 = vld [vmem:[%s387 + $0x13a] sm:$0xff]
      %v640 = vld [vmem:[%s387 + $0x142] sm:$0xff]
      %v641 = vld [vmem:[%s387 + $0x152] sm:$0xff]
      %v642 = vld [vmem:[%s387 + $0x15a] sm:$0xff]
      %v643 = vld [vmem:[%s387 + $0x16a] sm:$0xff]
      %v644 = vld [vmem:[%s387 + $0x172] sm:$0xff]
      %s645 = scalar_lea.vmem [#allocation2], 48
      %v646 = vld [vmem:[%s645] sm:$0xff]
      %v647 = vld [vmem:[%s645 + $0x8] sm:$0xff]
      %v648 = vld [vmem:[%s645 + $0x18] sm:$0xff]
      %v649 = vld [vmem:[%s645 + $0x20] sm:$0xff]
      %v650 = vld [vmem:[%s645 + $0x30] sm:$0xff]
      %v651 = vld [vmem:[%s645 + $0x38] sm:$0xff]
      %v652 = vld [vmem:[%s645 + $0x48] sm:$0xff]
      %v653 = vld [vmem:[%s645 + $0x50] sm:$0xff]
      %v654 = vld [vmem:[%s645 + $0x60] sm:$0xff]
      %v655 = vld [vmem:[%s645 + $0x68] sm:$0xff]
      %v656 = vld [vmem:[%s645 + $0x78] sm:$0xff]
      %v657 = vld [vmem:[%s645 + $0x80] sm:$0xff]
      %v658 = vld [vmem:[%s645 + $0x90] sm:$0xff]
      %v659 = vld [vmem:[%s645 + $0x98] sm:$0xff]
      %v660 = vld [vmem:[%s645 + $0xa8] sm:$0xff]
      %v661 = vld [vmem:[%s645 + $0xb0] sm:$0xff]
      %v662 = vld [vmem:[%s645 + $0xc0] sm:$0xff]
      %v663 = vld [vmem:[%s645 + $0xc8] sm:$0xff]
      %v664 = vld [vmem:[%s645 + $0xd8] sm:$0xff]
      %v665 = vld [vmem:[%s645 + $0xe0] sm:$0xff]
      %v666 = vld [vmem:[%s645 + $0xf0] sm:$0xff]
      %v667 = vld [vmem:[%s645 + $0xf8] sm:$0xff]
      %v668 = vld [vmem:[%s645 + $0x108] sm:$0xff]
      %v669 = vld [vmem:[%s645 + $0x110] sm:$0xff]
      %v670 = vld [vmem:[%s645 + $0x120] sm:$0xff]
      %v671 = vld [vmem:[%s645 + $0x128] sm:$0xff]
      %v672 = vld [vmem:[%s645 + $0x138] sm:$0xff]
      %v673 = vld [vmem:[%s645 + $0x140] sm:$0xff]
      %v674 = vld [vmem:[%s645 + $0x150] sm:$0xff]
      %v675 = vld [vmem:[%s645 + $0x158] sm:$0xff]
      %v676 = vld [vmem:[%s645 + $0x168] sm:$0xff]
      %v677 = vld [vmem:[%s645 + $0x170] sm:$0xff]
      %v678 = vld [vmem:[%s645 + $0x1] sm:$0xff]
      %v679 = vld [vmem:[%s645 + $0x9] sm:$0xff]
      %v680 = vld [vmem:[%s645 + $0x19] sm:$0xff]
      %v681 = vld [vmem:[%s645 + $0x21] sm:$0xff]
      %v682 = vld [vmem:[%s645 + $0x31] sm:$0xff]
      %v683 = vld [vmem:[%s645 + $0x39] sm:$0xff]
      %v684 = vld [vmem:[%s645 + $0x49] sm:$0xff]
      %v685 = vld [vmem:[%s645 + $0x51] sm:$0xff]
      %v686 = vld [vmem:[%s645 + $0x61] sm:$0xff]
      %v687 = vld [vmem:[%s645 + $0x69] sm:$0xff]
      %v688 = vld [vmem:[%s645 + $0x79] sm:$0xff]
      %v689 = vld [vmem:[%s645 + $0x81] sm:$0xff]
      %v690 = vld [vmem:[%s645 + $0x91] sm:$0xff]
      %v691 = vld [vmem:[%s645 + $0x99] sm:$0xff]
      %v692 = vld [vmem:[%s645 + $0xa9] sm:$0xff]
      %v693 = vld [vmem:[%s645 + $0xb1] sm:$0xff]
      %v694 = vld [vmem:[%s645 + $0xc1] sm:$0xff]
      %v695 = vld [vmem:[%s645 + $0xc9] sm:$0xff]
      %v696 = vld [vmem:[%s645 + $0xd9] sm:$0xff]
      %v697 = vld [vmem:[%s645 + $0xe1] sm:$0xff]
      %v698 = vld [vmem:[%s645 + $0xf1] sm:$0xff]
      %v699 = vld [vmem:[%s645 + $0xf9] sm:$0xff]
      %v700 = vld [vmem:[%s645 + $0x109] sm:$0xff]
      %v701 = vld [vmem:[%s645 + $0x111] sm:$0xff]
      %v702 = vld [vmem:[%s645 + $0x121] sm:$0xff]
      %v703 = vld [vmem:[%s645 + $0x129] sm:$0xff]
      %v704 = vld [vmem:[%s645 + $0x139] sm:$0xff]
      %v705 = vld [vmem:[%s645 + $0x141] sm:$0xff]
      %v706 = vld [vmem:[%s645 + $0x151] sm:$0xff]
      %v707 = vld [vmem:[%s645 + $0x159] sm:$0xff]
      %v708 = vld [vmem:[%s645 + $0x169] sm:$0xff]
      %v709 = vld [vmem:[%s645 + $0x171] sm:$0xff]
      %v710 = vld [vmem:[%s645 + $0x2] sm:$0xff]
      %v711 = vld [vmem:[%s645 + $0xa] sm:$0xff]
      %v712 = vld [vmem:[%s645 + $0x1a] sm:$0xff]
      %v713 = vld [vmem:[%s645 + $0x22] sm:$0xff]
      %v714 = vld [vmem:[%s645 + $0x32] sm:$0xff]
      %v715 = vld [vmem:[%s645 + $0x3a] sm:$0xff]
      %v716 = vld [vmem:[%s645 + $0x4a] sm:$0xff]
      %v717 = vld [vmem:[%s645 + $0x52] sm:$0xff]
      %v718 = vld [vmem:[%s645 + $0x62] sm:$0xff]
      %v719 = vld [vmem:[%s645 + $0x6a] sm:$0xff]
      %v720 = vld [vmem:[%s645 + $0x7a] sm:$0xff]
      %v721 = vld [vmem:[%s645 + $0x82] sm:$0xff]
      %v722 = vld [vmem:[%s645 + $0x92] sm:$0xff]
      %v723 = vld [vmem:[%s645 + $0x9a] sm:$0xff]
      %v724 = vld [vmem:[%s645 + $0xaa] sm:$0xff]
      %v725 = vld [vmem:[%s645 + $0xb2] sm:$0xff]
      %v726 = vld [vmem:[%s645 + $0xc2] sm:$0xff]
      %v727 = vld [vmem:[%s645 + $0xca] sm:$0xff]
      %v728 = vld [vmem:[%s645 + $0xda] sm:$0xff]
      %v729 = vld [vmem:[%s645 + $0xe2] sm:$0xff]
      %v730 = vld [vmem:[%s645 + $0xf2] sm:$0xff]
      %v731 = vld [vmem:[%s645 + $0xfa] sm:$0xff]
      %v732 = vld [vmem:[%s645 + $0x10a] sm:$0xff]
      %v733 = vld [vmem:[%s645 + $0x112] sm:$0xff]
      %v734 = vld [vmem:[%s645 + $0x122] sm:$0xff]
      %v735 = vld [vmem:[%s645 + $0x12a] sm:$0xff]
      %v736 = vld [vmem:[%s645 + $0x13a] sm:$0xff]
      %v737 = vld [vmem:[%s645 + $0x142] sm:$0xff]
      %v738 = vld [vmem:[%s645 + $0x152] sm:$0xff]
      %v739 = vld [vmem:[%s645 + $0x15a] sm:$0xff]
      %v740 = vld [vmem:[%s645 + $0x16a] sm:$0xff]
      %v741 = vld [vmem:[%s645 + $0x172] sm:$0xff]
      %774 = vrot.lane.b32.xlu0 %v485, 4
      %v775 = vpop.permute.xlu0 %774
      %776 = vrot.lane.b32.xlu0 %v486, 4
      %v777 = vpop.permute.xlu0 %776
      %778 = vrot.lane.b32.xlu0 %v487, 4
      %v779 = vpop.permute.xlu0 %778
      %780 = vrot.lane.b32.xlu0 %v488, 4
      %v781 = vpop.permute.xlu0 %780
      %782 = vrot.lane.b32.xlu0 %v489, 4
      %v783 = vpop.permute.xlu0 %782
      %784 = vrot.lane.b32.xlu0 %v490, 4
      %v785 = vpop.permute.xlu0 %784
      %786 = vrot.lane.b32.xlu0 %v491, 4
      %v787 = vpop.permute.xlu0 %786
      %788 = vrot.lane.b32.xlu0 %v492, 4
      %v789 = vpop.permute.xlu0 %788
      %790 = vrot.lane.b32.xlu0 %v493, 4
      %v791 = vpop.permute.xlu0 %790
      %792 = vrot.lane.b32.xlu0 %v494, 4
      %v793 = vpop.permute.xlu0 %792
      %794 = vrot.lane.b32.xlu0 %v495, 4
      %v795 = vpop.permute.xlu0 %794
      %796 = vrot.lane.b32.xlu0 %v496, 4
      %v797 = vpop.permute.xlu0 %796
      %798 = vrot.lane.b32.xlu0 %v497, 4
      %v799 = vpop.permute.xlu0 %798
      %800 = vrot.lane.b32.xlu0 %v498, 4
      %v801 = vpop.permute.xlu0 %800
      %802 = vrot.lane.b32.xlu0 %v499, 4
      %v803 = vpop.permute.xlu0 %802
      %804 = vrot.lane.b32.xlu0 %v500, 4
      %v805 = vpop.permute.xlu0 %804
      %806 = vrot.lane.b32.xlu0 %v501, 4
      %v807 = vpop.permute.xlu0 %806
      %808 = vrot.lane.b32.xlu0 %v502, 4
      %v809 = vpop.permute.xlu0 %808
      %810 = vrot.lane.b32.xlu0 %v503, 4
      %v811 = vpop.permute.xlu0 %810
      %812 = vrot.lane.b32.xlu0 %v504, 4
      %v813 = vpop.permute.xlu0 %812
      %814 = vrot.lane.b32.xlu0 %v505, 4
      %v815 = vpop.permute.xlu0 %814
      %816 = vrot.lane.b32.xlu0 %v506, 4
      %v817 = vpop.permute.xlu0 %816
      %818 = vrot.lane.b32.xlu0 %v507, 4
      %v819 = vpop.permute.xlu0 %818
      %820 = vrot.lane.b32.xlu0 %v508, 4
      %v821 = vpop.permute.xlu0 %820
      %822 = vrot.lane.b32.xlu0 %v509, 4
      %v823 = vpop.permute.xlu0 %822
      %824 = vrot.lane.b32.xlu0 %v510, 4
      %v825 = vpop.permute.xlu0 %824
      %826 = vrot.lane.b32.xlu0 %v511, 4
      %v827 = vpop.permute.xlu0 %826
      %828 = vrot.lane.b32.xlu0 %v512, 4
      %v829 = vpop.permute.xlu0 %828
      %830 = vrot.lane.b32.xlu0 %v513, 4
      %v831 = vpop.permute.xlu0 %830
      %832 = vrot.lane.b32.xlu0 %v514, 4
      %v833 = vpop.permute.xlu0 %832
      %834 = vrot.lane.b32.xlu0 %v515, 4
      %v835 = vpop.permute.xlu0 %834
      %836 = vrot.lane.b32.xlu0 %v516, 4
      %v837 = vpop.permute.xlu0 %836
      %902 = vrot.lane.b32.xlu0 %v517, 8
      %v903 = vpop.permute.xlu0 %902
      %904 = vrot.lane.b32.xlu0 %v518, 8
      %v905 = vpop.permute.xlu0 %904
      %906 = vrot.lane.b32.xlu0 %v519, 8
      %v907 = vpop.permute.xlu0 %906
      %908 = vrot.lane.b32.xlu0 %v520, 8
      %v909 = vpop.permute.xlu0 %908
      %910 = vrot.lane.b32.xlu0 %v521, 8
      %v911 = vpop.permute.xlu0 %910
      %912 = vrot.lane.b32.xlu0 %v522, 8
      %v913 = vpop.permute.xlu0 %912
      %914 = vrot.lane.b32.xlu0 %v523, 8
      %v915 = vpop.permute.xlu0 %914
      %916 = vrot.lane.b32.xlu0 %v524, 8
      %v917 = vpop.permute.xlu0 %916
      %918 = vrot.lane.b32.xlu0 %v525, 8
      %v919 = vpop.permute.xlu0 %918
      %920 = vrot.lane.b32.xlu0 %v526, 8
      %v921 = vpop.permute.xlu0 %920
      %922 = vrot.lane.b32.xlu0 %v527, 8
      %v923 = vpop.permute.xlu0 %922
      %924 = vrot.lane.b32.xlu0 %v528, 8
      %v925 = vpop.permute.xlu0 %924
      %926 = vrot.lane.b32.xlu0 %v529, 8
      %v927 = vpop.permute.xlu0 %926
      %928 = vrot.lane.b32.xlu0 %v530, 8
      %v929 = vpop.permute.xlu0 %928
      %930 = vrot.lane.b32.xlu0 %v531, 8
      %v931 = vpop.permute.xlu0 %930
      %932 = vrot.lane.b32.xlu0 %v532, 8
      %v933 = vpop.permute.xlu0 %932
      %934 = vrot.lane.b32.xlu0 %v533, 8
      %v935 = vpop.permute.xlu0 %934
      %936 = vrot.lane.b32.xlu0 %v534, 8
      %v937 = vpop.permute.xlu0 %936
      %938 = vrot.lane.b32.xlu0 %v535, 8
      %v939 = vpop.permute.xlu0 %938
      %940 = vrot.lane.b32.xlu0 %v536, 8
      %v941 = vpop.permute.xlu0 %940
      %942 = vrot.lane.b32.xlu0 %v537, 8
      %v943 = vpop.permute.xlu0 %942
      %944 = vrot.lane.b32.xlu0 %v538, 8
      %v945 = vpop.permute.xlu0 %944
      %946 = vrot.lane.b32.xlu0 %v539, 8
      %v947 = vpop.permute.xlu0 %946
      %948 = vrot.lane.b32.xlu0 %v540, 8
      %v949 = vpop.permute.xlu0 %948
      %950 = vrot.lane.b32.xlu0 %v541, 8
      %v951 = vpop.permute.xlu0 %950
      %952 = vrot.lane.b32.xlu0 %v542, 8
      %v953 = vpop.permute.xlu0 %952
      %954 = vrot.lane.b32.xlu0 %v543, 8
      %v955 = vpop.permute.xlu0 %954
      %956 = vrot.lane.b32.xlu0 %v544, 8
      %v957 = vpop.permute.xlu0 %956
      %958 = vrot.lane.b32.xlu0 %v545, 8
      %v959 = vpop.permute.xlu0 %958
      %960 = vrot.lane.b32.xlu0 %v546, 8
      %v961 = vpop.permute.xlu0 %960
      %962 = vrot.lane.b32.xlu0 %v547, 8
      %v963 = vpop.permute.xlu0 %962
      %964 = vrot.lane.b32.xlu0 %v548, 8
      %v965 = vpop.permute.xlu0 %964
      %1030 = vrot.lane.b32.xlu0 %v549, 12
      %v1031 = vpop.permute.xlu0 %1030
      %1032 = vrot.lane.b32.xlu0 %v550, 12
      %v1033 = vpop.permute.xlu0 %1032
      %1034 = vrot.lane.b32.xlu0 %v551, 12
      %v1035 = vpop.permute.xlu0 %1034
      %1036 = vrot.lane.b32.xlu0 %v552, 12
      %v1037 = vpop.permute.xlu0 %1036
      %1038 = vrot.lane.b32.xlu0 %v553, 12
      %v1039 = vpop.permute.xlu0 %1038
      %1040 = vrot.lane.b32.xlu0 %v554, 12
      %v1041 = vpop.permute.xlu0 %1040
      %1042 = vrot.lane.b32.xlu0 %v555, 12
      %v1043 = vpop.permute.xlu0 %1042
      %1044 = vrot.lane.b32.xlu0 %v556, 12
      %v1045 = vpop.permute.xlu0 %1044
      %1046 = vrot.lane.b32.xlu0 %v557, 12
      %v1047 = vpop.permute.xlu0 %1046
      %1048 = vrot.lane.b32.xlu0 %v558, 12
      %v1049 = vpop.permute.xlu0 %1048
      %1050 = vrot.lane.b32.xlu0 %v559, 12
      %v1051 = vpop.permute.xlu0 %1050
      %1052 = vrot.lane.b32.xlu0 %v560, 12
      %v1053 = vpop.permute.xlu0 %1052
      %1054 = vrot.lane.b32.xlu0 %v561, 12
      %v1055 = vpop.permute.xlu0 %1054
      %1056 = vrot.lane.b32.xlu0 %v562, 12
      %v1057 = vpop.permute.xlu0 %1056
      %1058 = vrot.lane.b32.xlu0 %v563, 12
      %v1059 = vpop.permute.xlu0 %1058
      %1060 = vrot.lane.b32.xlu0 %v564, 12
      %v1061 = vpop.permute.xlu0 %1060
      %1062 = vrot.lane.b32.xlu0 %v565, 12
      %v1063 = vpop.permute.xlu0 %1062
      %1064 = vrot.lane.b32.xlu0 %v566, 12
      %v1065 = vpop.permute.xlu0 %1064
      %1066 = vrot.lane.b32.xlu0 %v567, 12
      %v1067 = vpop.permute.xlu0 %1066
      %1068 = vrot.lane.b32.xlu0 %v568, 12
      %v1069 = vpop.permute.xlu0 %1068
      %1070 = vrot.lane.b32.xlu0 %v569, 12
      %v1071 = vpop.permute.xlu0 %1070
      %1072 = vrot.lane.b32.xlu0 %v570, 12
      %v1073 = vpop.permute.xlu0 %1072
      %1074 = vrot.lane.b32.xlu0 %v571, 12
      %v1075 = vpop.permute.xlu0 %1074
      %1076 = vrot.lane.b32.xlu0 %v572, 12
      %v1077 = vpop.permute.xlu0 %1076
      %1078 = vrot.lane.b32.xlu0 %v573, 12
      %v1079 = vpop.permute.xlu0 %1078
      %1080 = vrot.lane.b32.xlu0 %v574, 12
      %v1081 = vpop.permute.xlu0 %1080
      %1082 = vrot.lane.b32.xlu0 %v575, 12
      %v1083 = vpop.permute.xlu0 %1082
      %1084 = vrot.lane.b32.xlu0 %v576, 12
      %v1085 = vpop.permute.xlu0 %1084
      %1086 = vrot.lane.b32.xlu0 %v577, 12
      %v1087 = vpop.permute.xlu0 %1086
      %1088 = vrot.lane.b32.xlu0 %v578, 12
      %v1089 = vpop.permute.xlu0 %1088
      %1090 = vrot.lane.b32.xlu0 %v579, 12
      %v1091 = vpop.permute.xlu0 %1090
      %1092 = vrot.lane.b32.xlu0 %v580, 12
      %v1093 = vpop.permute.xlu0 %1092
      %1158 = vrot.lane.b32.xlu0 %v581, 16
      %v1159 = vpop.permute.xlu0 %1158
      %1160 = vrot.lane.b32.xlu0 %v582, 16
      %v1161 = vpop.permute.xlu0 %1160
      %1162 = vrot.lane.b32.xlu0 %v583, 16
      %v1163 = vpop.permute.xlu0 %1162
      %1164 = vrot.lane.b32.xlu0 %v584, 16
      %v1165 = vpop.permute.xlu0 %1164
      %1166 = vrot.lane.b32.xlu0 %v585, 16
      %v1167 = vpop.permute.xlu0 %1166
      %1168 = vrot.lane.b32.xlu0 %v586, 16
      %v1169 = vpop.permute.xlu0 %1168
      %1170 = vrot.lane.b32.xlu0 %v587, 16
      %v1171 = vpop.permute.xlu0 %1170
      %1172 = vrot.lane.b32.xlu0 %v588, 16
      %v1173 = vpop.permute.xlu0 %1172
      %1174 = vrot.lane.b32.xlu0 %v589, 16
      %v1175 = vpop.permute.xlu0 %1174
      %1176 = vrot.lane.b32.xlu0 %v590, 16
      %v1177 = vpop.permute.xlu0 %1176
      %1178 = vrot.lane.b32.xlu0 %v591, 16
      %v1179 = vpop.permute.xlu0 %1178
      %1180 = vrot.lane.b32.xlu0 %v592, 16
      %v1181 = vpop.permute.xlu0 %1180
      %1182 = vrot.lane.b32.xlu0 %v593, 16
      %v1183 = vpop.permute.xlu0 %1182
      %1184 = vrot.lane.b32.xlu0 %v594, 16
      %v1185 = vpop.permute.xlu0 %1184
      %1186 = vrot.lane.b32.xlu0 %v595, 16
      %v1187 = vpop.permute.xlu0 %1186
      %1188 = vrot.lane.b32.xlu0 %v596, 16
      %v1189 = vpop.permute.xlu0 %1188
      %1190 = vrot.lane.b32.xlu0 %v597, 16
      %v1191 = vpop.permute.xlu0 %1190
      %1192 = vrot.lane.b32.xlu0 %v598, 16
      %v1193 = vpop.permute.xlu0 %1192
      %1194 = vrot.lane.b32.xlu0 %v599, 16
      %v1195 = vpop.permute.xlu0 %1194
      %1196 = vrot.lane.b32.xlu0 %v600, 16
      %v1197 = vpop.permute.xlu0 %1196
      %1198 = vrot.lane.b32.xlu0 %v601, 16
      %v1199 = vpop.permute.xlu0 %1198
      %1200 = vrot.lane.b32.xlu0 %v602, 16
      %v1201 = vpop.permute.xlu0 %1200
      %1202 = vrot.lane.b32.xlu0 %v603, 16
      %v1203 = vpop.permute.xlu0 %1202
      %1204 = vrot.lane.b32.xlu0 %v604, 16
      %v1205 = vpop.permute.xlu0 %1204
      %1206 = vrot.lane.b32.xlu0 %v605, 16
      %v1207 = vpop.permute.xlu0 %1206
      %1208 = vrot.lane.b32.xlu0 %v606, 16
      %v1209 = vpop.permute.xlu0 %1208
      %1210 = vrot.lane.b32.xlu0 %v607, 16
      %v1211 = vpop.permute.xlu0 %1210
      %1212 = vrot.lane.b32.xlu0 %v608, 16
      %v1213 = vpop.permute.xlu0 %1212
      %1214 = vrot.lane.b32.xlu0 %v609, 16
      %v1215 = vpop.permute.xlu0 %1214
      %1216 = vrot.lane.b32.xlu0 %v610, 16
      %v1217 = vpop.permute.xlu0 %1216
      %1218 = vrot.lane.b32.xlu0 %v611, 16
      %v1219 = vpop.permute.xlu0 %1218
      %1220 = vrot.lane.b32.xlu0 %v612, 16
      %v1221 = vpop.permute.xlu0 %1220
      %1286 = vrot.lane.b32.xlu0 %v613, 20
      %v1287 = vpop.permute.xlu0 %1286
      %1288 = vrot.lane.b32.xlu0 %v614, 20
      %v1289 = vpop.permute.xlu0 %1288
      %1290 = vrot.lane.b32.xlu0 %v615, 20
      %v1291 = vpop.permute.xlu0 %1290
      %1292 = vrot.lane.b32.xlu0 %v616, 20
      %v1293 = vpop.permute.xlu0 %1292
      %1294 = vrot.lane.b32.xlu0 %v617, 20
      %v1295 = vpop.permute.xlu0 %1294
      %1296 = vrot.lane.b32.xlu0 %v618, 20
      %v1297 = vpop.permute.xlu0 %1296
      %1298 = vrot.lane.b32.xlu0 %v619, 20
      %v1299 = vpop.permute.xlu0 %1298
      %1300 = vrot.lane.b32.xlu0 %v620, 20
      %v1301 = vpop.permute.xlu0 %1300
      %1302 = vrot.lane.b32.xlu0 %v621, 20
      %v1303 = vpop.permute.xlu0 %1302
      %1304 = vrot.lane.b32.xlu0 %v622, 20
      %v1305 = vpop.permute.xlu0 %1304
      %1306 = vrot.lane.b32.xlu0 %v623, 20
      %v1307 = vpop.permute.xlu0 %1306
      %1308 = vrot.lane.b32.xlu0 %v624, 20
      %v1309 = vpop.permute.xlu0 %1308
      %1310 = vrot.lane.b32.xlu0 %v625, 20
      %v1311 = vpop.permute.xlu0 %1310
      %1312 = vrot.lane.b32.xlu0 %v626, 20
      %v1313 = vpop.permute.xlu0 %1312
      %1314 = vrot.lane.b32.xlu0 %v627, 20
      %v1315 = vpop.permute.xlu0 %1314
      %1316 = vrot.lane.b32.xlu0 %v628, 20
      %v1317 = vpop.permute.xlu0 %1316
      %1318 = vrot.lane.b32.xlu0 %v629, 20
      %v1319 = vpop.permute.xlu0 %1318
      %1320 = vrot.lane.b32.xlu0 %v630, 20
      %v1321 = vpop.permute.xlu0 %1320
      %1322 = vrot.lane.b32.xlu0 %v631, 20
      %v1323 = vpop.permute.xlu0 %1322
      %1324 = vrot.lane.b32.xlu0 %v632, 20
      %v1325 = vpop.permute.xlu0 %1324
      %1326 = vrot.lane.b32.xlu0 %v633, 20
      %v1327 = vpop.permute.xlu0 %1326
      %1328 = vrot.lane.b32.xlu0 %v634, 20
      %v1329 = vpop.permute.xlu0 %1328
      %1330 = vrot.lane.b32.xlu0 %v635, 20
      %v1331 = vpop.permute.xlu0 %1330
      %1332 = vrot.lane.b32.xlu0 %v636, 20
      %v1333 = vpop.permute.xlu0 %1332
      %1334 = vrot.lane.b32.xlu0 %v637, 20
      %v1335 = vpop.permute.xlu0 %1334
      %1336 = vrot.lane.b32.xlu0 %v638, 20
      %v1337 = vpop.permute.xlu0 %1336
      %1338 = vrot.lane.b32.xlu0 %v639, 20
      %v1339 = vpop.permute.xlu0 %1338
      %1340 = vrot.lane.b32.xlu0 %v640, 20
      %v1341 = vpop.permute.xlu0 %1340
      %1342 = vrot.lane.b32.xlu0 %v641, 20
      %v1343 = vpop.permute.xlu0 %1342
      %1344 = vrot.lane.b32.xlu0 %v642, 20
      %v1345 = vpop.permute.xlu0 %1344
      %1346 = vrot.lane.b32.xlu0 %v643, 20
      %v1347 = vpop.permute.xlu0 %1346
      %1348 = vrot.lane.b32.xlu0 %v644, 20
      %v1349 = vpop.permute.xlu0 %1348
      %1414 = vrot.lane.b32.xlu0 %v646, 24
      %v1415 = vpop.permute.xlu0 %1414
      %1416 = vrot.lane.b32.xlu0 %v647, 24
      %v1417 = vpop.permute.xlu0 %1416
      %1418 = vrot.lane.b32.xlu0 %v648, 24
      %v1419 = vpop.permute.xlu0 %1418
      %1420 = vrot.lane.b32.xlu0 %v649, 24
      %v1421 = vpop.permute.xlu0 %1420
      %1422 = vrot.lane.b32.xlu0 %v650, 24
      %v1423 = vpop.permute.xlu0 %1422
      %1424 = vrot.lane.b32.xlu0 %v651, 24
      %v1425 = vpop.permute.xlu0 %1424
      %1426 = vrot.lane.b32.xlu0 %v652, 24
      %v1427 = vpop.permute.xlu0 %1426
      %1428 = vrot.lane.b32.xlu0 %v653, 24
      %v1429 = vpop.permute.xlu0 %1428
      %1430 = vrot.lane.b32.xlu0 %v654, 24
      %v1431 = vpop.permute.xlu0 %1430
      %1432 = vrot.lane.b32.xlu0 %v655, 24
      %v1433 = vpop.permute.xlu0 %1432
      %1434 = vrot.lane.b32.xlu0 %v656, 24
      %v1435 = vpop.permute.xlu0 %1434
      %1436 = vrot.lane.b32.xlu0 %v657, 24
      %v1437 = vpop.permute.xlu0 %1436
      %1438 = vrot.lane.b32.xlu0 %v658, 24
      %v1439 = vpop.permute.xlu0 %1438
      %1440 = vrot.lane.b32.xlu0 %v659, 24
      %v1441 = vpop.permute.xlu0 %1440
      %1442 = vrot.lane.b32.xlu0 %v660, 24
      %v1443 = vpop.permute.xlu0 %1442
      %1444 = vrot.lane.b32.xlu0 %v661, 24
      %v1445 = vpop.permute.xlu0 %1444
      %1446 = vrot.lane.b32.xlu0 %v662, 24
      %v1447 = vpop.permute.xlu0 %1446
      %1448 = vrot.lane.b32.xlu0 %v663, 24
      %v1449 = vpop.permute.xlu0 %1448
      %1450 = vrot.lane.b32.xlu0 %v664, 24
      %v1451 = vpop.permute.xlu0 %1450
      %1452 = vrot.lane.b32.xlu0 %v665, 24
      %v1453 = vpop.permute.xlu0 %1452
      %1454 = vrot.lane.b32.xlu0 %v666, 24
      %v1455 = vpop.permute.xlu0 %1454
      %1456 = vrot.lane.b32.xlu0 %v667, 24
      %v1457 = vpop.permute.xlu0 %1456
      %1458 = vrot.lane.b32.xlu0 %v668, 24
      %v1459 = vpop.permute.xlu0 %1458
      %1460 = vrot.lane.b32.xlu0 %v669, 24
      %v1461 = vpop.permute.xlu0 %1460
      %1462 = vrot.lane.b32.xlu0 %v670, 24
      %v1463 = vpop.permute.xlu0 %1462
      %1464 = vrot.lane.b32.xlu0 %v671, 24
      %v1465 = vpop.permute.xlu0 %1464
      %1466 = vrot.lane.b32.xlu0 %v672, 24
      %v1467 = vpop.permute.xlu0 %1466
      %1468 = vrot.lane.b32.xlu0 %v673, 24
      %v1469 = vpop.permute.xlu0 %1468
      %1470 = vrot.lane.b32.xlu0 %v674, 24
      %v1471 = vpop.permute.xlu0 %1470
      %1472 = vrot.lane.b32.xlu0 %v675, 24
      %v1473 = vpop.permute.xlu0 %1472
      %1474 = vrot.lane.b32.xlu0 %v676, 24
      %v1475 = vpop.permute.xlu0 %1474
      %1476 = vrot.lane.b32.xlu0 %v677, 24
      %v1477 = vpop.permute.xlu0 %1476
      %1542 = vrot.lane.b32.xlu0 %v678, 28
      %v1543 = vpop.permute.xlu0 %1542
      %1544 = vrot.lane.b32.xlu0 %v679, 28
      %v1545 = vpop.permute.xlu0 %1544
      %1546 = vrot.lane.b32.xlu0 %v680, 28
      %v1547 = vpop.permute.xlu0 %1546
      %1548 = vrot.lane.b32.xlu0 %v681, 28
      %v1549 = vpop.permute.xlu0 %1548
      %1550 = vrot.lane.b32.xlu0 %v682, 28
      %v1551 = vpop.permute.xlu0 %1550
      %1552 = vrot.lane.b32.xlu0 %v683, 28
      %v1553 = vpop.permute.xlu0 %1552
      %1554 = vrot.lane.b32.xlu0 %v684, 28
      %v1555 = vpop.permute.xlu0 %1554
      %1556 = vrot.lane.b32.xlu0 %v685, 28
      %v1557 = vpop.permute.xlu0 %1556
      %1558 = vrot.lane.b32.xlu0 %v686, 28
      %v1559 = vpop.permute.xlu0 %1558
      %1560 = vrot.lane.b32.xlu0 %v687, 28
      %v1561 = vpop.permute.xlu0 %1560
      %1562 = vrot.lane.b32.xlu0 %v688, 28
      %v1563 = vpop.permute.xlu0 %1562
      %1564 = vrot.lane.b32.xlu0 %v689, 28
      %v1565 = vpop.permute.xlu0 %1564
      %1566 = vrot.lane.b32.xlu0 %v690, 28
      %v1567 = vpop.permute.xlu0 %1566
      %1568 = vrot.lane.b32.xlu0 %v691, 28
      %v1569 = vpop.permute.xlu0 %1568
      %1570 = vrot.lane.b32.xlu0 %v692, 28
      %v1571 = vpop.permute.xlu0 %1570
      %1572 = vrot.lane.b32.xlu0 %v693, 28
      %v1573 = vpop.permute.xlu0 %1572
      %1574 = vrot.lane.b32.xlu0 %v694, 28
      %v1575 = vpop.permute.xlu0 %1574
      %1576 = vrot.lane.b32.xlu0 %v695, 28
      %v1577 = vpop.permute.xlu0 %1576
      %1578 = vrot.lane.b32.xlu0 %v696, 28
      %v1579 = vpop.permute.xlu0 %1578
      %1580 = vrot.lane.b32.xlu0 %v697, 28
      %v1581 = vpop.permute.xlu0 %1580
      %1582 = vrot.lane.b32.xlu0 %v698, 28
      %v1583 = vpop.permute.xlu0 %1582
      %1584 = vrot.lane.b32.xlu0 %v699, 28
      %v1585 = vpop.permute.xlu0 %1584
      %1586 = vrot.lane.b32.xlu0 %v700, 28
      %v1587 = vpop.permute.xlu0 %1586
      %1588 = vrot.lane.b32.xlu0 %v701, 28
      %v1589 = vpop.permute.xlu0 %1588
      %1590 = vrot.lane.b32.xlu0 %v702, 28
      %v1591 = vpop.permute.xlu0 %1590
      %1592 = vrot.lane.b32.xlu0 %v703, 28
      %v1593 = vpop.permute.xlu0 %1592
      %1594 = vrot.lane.b32.xlu0 %v704, 28
      %v1595 = vpop.permute.xlu0 %1594
      %1596 = vrot.lane.b32.xlu0 %v705, 28
      %v1597 = vpop.permute.xlu0 %1596
      %1598 = vrot.lane.b32.xlu0 %v706, 28
      %v1599 = vpop.permute.xlu0 %1598
      %1600 = vrot.lane.b32.xlu0 %v707, 28
      %v1601 = vpop.permute.xlu0 %1600
      %1602 = vrot.lane.b32.xlu0 %v708, 28
      %v1603 = vpop.permute.xlu0 %1602
      %1604 = vrot.lane.b32.xlu0 %v709, 28
      %v1605 = vpop.permute.xlu0 %1604
      %1670 = vrot.lane.b32.xlu0 %v710, 32
      %v1671 = vpop.permute.xlu0 %1670
      %1672 = vrot.lane.b32.xlu0 %v711, 32
      %v1673 = vpop.permute.xlu0 %1672
      %1674 = vrot.lane.b32.xlu0 %v712, 32
      %v1675 = vpop.permute.xlu0 %1674
      %1676 = vrot.lane.b32.xlu0 %v713, 32
      %v1677 = vpop.permute.xlu0 %1676
      %1678 = vrot.lane.b32.xlu0 %v714, 32
      %v1679 = vpop.permute.xlu0 %1678
      %1680 = vrot.lane.b32.xlu0 %v715, 32
      %v1681 = vpop.permute.xlu0 %1680
      %1682 = vrot.lane.b32.xlu0 %v716, 32
      %v1683 = vpop.permute.xlu0 %1682
      %1684 = vrot.lane.b32.xlu0 %v717, 32
      %v1685 = vpop.permute.xlu0 %1684
      %1686 = vrot.lane.b32.xlu0 %v718, 32
      %v1687 = vpop.permute.xlu0 %1686
      %1688 = vrot.lane.b32.xlu0 %v719, 32
      %v1689 = vpop.permute.xlu0 %1688
      %1690 = vrot.lane.b32.xlu0 %v720, 32
      %v1691 = vpop.permute.xlu0 %1690
      %1692 = vrot.lane.b32.xlu0 %v721, 32
      %v1693 = vpop.permute.xlu0 %1692
      %1694 = vrot.lane.b32.xlu0 %v722, 32
      %v1695 = vpop.permute.xlu0 %1694
      %1696 = vrot.lane.b32.xlu0 %v723, 32
      %v1697 = vpop.permute.xlu0 %1696
      %1698 = vrot.lane.b32.xlu0 %v724, 32
      %v1699 = vpop.permute.xlu0 %1698
      %1700 = vrot.lane.b32.xlu0 %v725, 32
      %v1701 = vpop.permute.xlu0 %1700
      %1702 = vrot.lane.b32.xlu0 %v726, 32
      %v1703 = vpop.permute.xlu0 %1702
      %1704 = vrot.lane.b32.xlu0 %v727, 32
      %v1705 = vpop.permute.xlu0 %1704
      %1706 = vrot.lane.b32.xlu0 %v728, 32
      %v1707 = vpop.permute.xlu0 %1706
      %1708 = vrot.lane.b32.xlu0 %v729, 32
      %v1709 = vpop.permute.xlu0 %1708
      %1710 = vrot.lane.b32.xlu0 %v730, 32
      %v1711 = vpop.permute.xlu0 %1710
      %1712 = vrot.lane.b32.xlu0 %v731, 32
      %v1713 = vpop.permute.xlu0 %1712
      %1714 = vrot.lane.b32.xlu0 %v732, 32
      %v1715 = vpop.permute.xlu0 %1714
      %1716 = vrot.lane.b32.xlu0 %v733, 32
      %v1717 = vpop.permute.xlu0 %1716
      %1718 = vrot.lane.b32.xlu0 %v734, 32
      %v1719 = vpop.permute.xlu0 %1718
      %1720 = vrot.lane.b32.xlu0 %v735, 32
      %v1721 = vpop.permute.xlu0 %1720
      %1722 = vrot.lane.b32.xlu0 %v736, 32
      %v1723 = vpop.permute.xlu0 %1722
      %1724 = vrot.lane.b32.xlu0 %v737, 32
      %v1725 = vpop.permute.xlu0 %1724
      %1726 = vrot.lane.b32.xlu0 %v738, 32
      %v1727 = vpop.permute.xlu0 %1726
      %1728 = vrot.lane.b32.xlu0 %v739, 32
      %v1729 = vpop.permute.xlu0 %1728
      %1730 = vrot.lane.b32.xlu0 %v740, 32
      %v1731 = vpop.permute.xlu0 %1730
      %1732 = vrot.lane.b32.xlu0 %v741, 32
      %v1733 = vpop.permute.xlu0 %1732
      %v1766 = vsel %vm378, %v453, %v775
      %v1767 = vsel %vm378, %v454, %v777
      %v1768 = vsel %vm378, %v455, %v779
      %v1769 = vsel %vm378, %v456, %v781
      %v1770 = vsel %vm378, %v457, %v783
      %v1771 = vsel %vm378, %v458, %v785
      %v1772 = vsel %vm378, %v459, %v787
      %v1773 = vsel %vm378, %v460, %v789
      %v1774 = vsel %vm378, %v461, %v791
      %v1775 = vsel %vm378, %v462, %v793
      %v1776 = vsel %vm378, %v463, %v795
      %v1777 = vsel %vm378, %v464, %v797
      %v1778 = vsel %vm378, %v465, %v799
      %v1779 = vsel %vm378, %v466, %v801
      %v1780 = vsel %vm378, %v467, %v803
      %v1781 = vsel %vm378, %v468, %v805
      %v1782 = vsel %vm378, %v469, %v807
      %v1783 = vsel %vm378, %v470, %v809
      %v1784 = vsel %vm378, %v471, %v811
      %v1785 = vsel %vm378, %v472, %v813
      %v1786 = vsel %vm378, %v473, %v815
      %v1787 = vsel %vm378, %v474, %v817
      %v1788 = vsel %vm378, %v475, %v819
      %v1789 = vsel %vm378, %v476, %v821
      %v1790 = vsel %vm378, %v477, %v823
      %v1791 = vsel %vm378, %v478, %v825
      %v1792 = vsel %vm378, %v479, %v827
      %v1793 = vsel %vm378, %v480, %v829
      %v1794 = vsel %vm378, %v481, %v831
      %v1795 = vsel %vm378, %v482, %v833
      %v1796 = vsel %vm378, %v483, %v835
      %v1797 = vsel %vm378, %v484, %v837
      %vm1798 = vcmask 64512
      %v1799 = vsel %vm1798, %v1766, %v903
      %v1800 = vsel %vm1798, %v1767, %v905
      %v1801 = vsel %vm1798, %v1768, %v907
      %v1802 = vsel %vm1798, %v1769, %v909
      %v1803 = vsel %vm1798, %v1770, %v911
      %v1804 = vsel %vm1798, %v1771, %v913
      %v1805 = vsel %vm1798, %v1772, %v915
      %v1806 = vsel %vm1798, %v1773, %v917
      %v1807 = vsel %vm1798, %v1774, %v919
      %v1808 = vsel %vm1798, %v1775, %v921
      %v1809 = vsel %vm1798, %v1776, %v923
      %v1810 = vsel %vm1798, %v1777, %v925
      %v1811 = vsel %vm1798, %v1778, %v927
      %v1812 = vsel %vm1798, %v1779, %v929
      %v1813 = vsel %vm1798, %v1780, %v931
      %v1814 = vsel %vm1798, %v1781, %v933
      %v1815 = vsel %vm1798, %v1782, %v935
      %v1816 = vsel %vm1798, %v1783, %v937
      %v1817 = vsel %vm1798, %v1784, %v939
      %v1818 = vsel %vm1798, %v1785, %v941
      %v1819 = vsel %vm1798, %v1786, %v943
      %v1820 = vsel %vm1798, %v1787, %v945
      %v1821 = vsel %vm1798, %v1788, %v947
      %v1822 = vsel %vm1798, %v1789, %v949
      %v1823 = vsel %vm1798, %v1790, %v951
      %v1824 = vsel %vm1798, %v1791, %v953
      %v1825 = vsel %vm1798, %v1792, %v955
      %v1826 = vsel %vm1798, %v1793, %v957
      %v1827 = vsel %vm1798, %v1794, %v959
      %v1828 = vsel %vm1798, %v1795, %v961
      %v1829 = vsel %vm1798, %v1796, %v963
      %v1830 = vsel %vm1798, %v1797, %v965
      %vm1831 = vcmask 97280
      %v1832 = vsel %vm1831, %v1799, %v1031
      %v1833 = vsel %vm1831, %v1800, %v1033
      %v1834 = vsel %vm1831, %v1801, %v1035
      %v1835 = vsel %vm1831, %v1802, %v1037
      %v1836 = vsel %vm1831, %v1803, %v1039
      %v1837 = vsel %vm1831, %v1804, %v1041
      %v1838 = vsel %vm1831, %v1805, %v1043
      %v1839 = vsel %vm1831, %v1806, %v1045
      %v1840 = vsel %vm1831, %v1807, %v1047
      %v1841 = vsel %vm1831, %v1808, %v1049
      %v1842 = vsel %vm1831, %v1809, %v1051
      %v1843 = vsel %vm1831, %v1810, %v1053
      %v1844 = vsel %vm1831, %v1811, %v1055
      %v1845 = vsel %vm1831, %v1812, %v1057
      %v1846 = vsel %vm1831, %v1813, %v1059
      %v1847 = vsel %vm1831, %v1814, %v1061
      %v1848 = vsel %vm1831, %v1815, %v1063
      %v1849 = vsel %vm1831, %v1816, %v1065
      %v1850 = vsel %vm1831, %v1817, %v1067
      %v1851 = vsel %vm1831, %v1818, %v1069
      %v1852 = vsel %vm1831, %v1819, %v1071
      %v1853 = vsel %vm1831, %v1820, %v1073
      %v1854 = vsel %vm1831, %v1821, %v1075
      %v1855 = vsel %vm1831, %v1822, %v1077
      %v1856 = vsel %vm1831, %v1823, %v1079
      %v1857 = vsel %vm1831, %v1824, %v1081
      %v1858 = vsel %vm1831, %v1825, %v1083
      %v1859 = vsel %vm1831, %v1826, %v1085
      %v1860 = vsel %vm1831, %v1827, %v1087
      %v1861 = vsel %vm1831, %v1828, %v1089
      %v1862 = vsel %vm1831, %v1829, %v1091
      %v1863 = vsel %vm1831, %v1830, %v1093
      %vm1864 = vcmask 130048
      %v1865 = vsel %vm1864, %v1832, %v1159
      %v1866 = vsel %vm1864, %v1833, %v1161
      %v1867 = vsel %vm1864, %v1834, %v1163
      %v1868 = vsel %vm1864, %v1835, %v1165
      %v1869 = vsel %vm1864, %v1836, %v1167
      %v1870 = vsel %vm1864, %v1837, %v1169
      %v1871 = vsel %vm1864, %v1838, %v1171
      %v1872 = vsel %vm1864, %v1839, %v1173
      %v1873 = vsel %vm1864, %v1840, %v1175
      %v1874 = vsel %vm1864, %v1841, %v1177
      %v1875 = vsel %vm1864, %v1842, %v1179
      %v1876 = vsel %vm1864, %v1843, %v1181
      %v1877 = vsel %vm1864, %v1844, %v1183
      %v1878 = vsel %vm1864, %v1845, %v1185
      %v1879 = vsel %vm1864, %v1846, %v1187
      %v1880 = vsel %vm1864, %v1847, %v1189
      %v1881 = vsel %vm1864, %v1848, %v1191
      %v1882 = vsel %vm1864, %v1849, %v1193
      %v1883 = vsel %vm1864, %v1850, %v1195
      %v1884 = vsel %vm1864, %v1851, %v1197
      %v1885 = vsel %vm1864, %v1852, %v1199
      %v1886 = vsel %vm1864, %v1853, %v1201
      %v1887 = vsel %vm1864, %v1854, %v1203
      %v1888 = vsel %vm1864, %v1855, %v1205
      %v1889 = vsel %vm1864, %v1856, %v1207
      %v1890 = vsel %vm1864, %v1857, %v1209
      %v1891 = vsel %vm1864, %v1858, %v1211
      %v1892 = vsel %vm1864, %v1859, %v1213
      %v1893 = vsel %vm1864, %v1860, %v1215
      %v1894 = vsel %vm1864, %v1861, %v1217
      %v1895 = vsel %vm1864, %v1862, %v1219
      %v1896 = vsel %vm1864, %v1863, %v1221
      %vm1897 = vcmask 162816
      %v1898 = vsel %vm1897, %v1865, %v1287
      %v1899 = vsel %vm1897, %v1866, %v1289
      %v1900 = vsel %vm1897, %v1867, %v1291
      %v1901 = vsel %vm1897, %v1868, %v1293
      %v1902 = vsel %vm1897, %v1869, %v1295
      %v1903 = vsel %vm1897, %v1870, %v1297
      %v1904 = vsel %vm1897, %v1871, %v1299
      %v1905 = vsel %vm1897, %v1872, %v1301
      %v1906 = vsel %vm1897, %v1873, %v1303
      %v1907 = vsel %vm1897, %v1874, %v1305
      %v1908 = vsel %vm1897, %v1875, %v1307
      %v1909 = vsel %vm1897, %v1876, %v1309
      %v1910 = vsel %vm1897, %v1877, %v1311
      %v1911 = vsel %vm1897, %v1878, %v1313
      %v1912 = vsel %vm1897, %v1879, %v1315
      %v1913 = vsel %vm1897, %v1880, %v1317
      %v1914 = vsel %vm1897, %v1881, %v1319
      %v1915 = vsel %vm1897, %v1882, %v1321
      %v1916 = vsel %vm1897, %v1883, %v1323
      %v1917 = vsel %vm1897, %v1884, %v1325
      %v1918 = vsel %vm1897, %v1885, %v1327
      %v1919 = vsel %vm1897, %v1886, %v1329
      %v1920 = vsel %vm1897, %v1887, %v1331
      %v1921 = vsel %vm1897, %v1888, %v1333
      %v1922 = vsel %vm1897, %v1889, %v1335
      %v1923 = vsel %vm1897, %v1890, %v1337
      %v1924 = vsel %vm1897, %v1891, %v1339
      %v1925 = vsel %vm1897, %v1892, %v1341
      %v1926 = vsel %vm1897, %v1893, %v1343
      %v1927 = vsel %vm1897, %v1894, %v1345
      %v1928 = vsel %vm1897, %v1895, %v1347
      %v1929 = vsel %vm1897, %v1896, %v1349
      %vm1930 = vcmask 195584
      %v1931 = vsel %vm1930, %v1898, %v1415
      %v1932 = vsel %vm1930, %v1899, %v1417
      %v1933 = vsel %vm1930, %v1900, %v1419
      %v1934 = vsel %vm1930, %v1901, %v1421
      %v1935 = vsel %vm1930, %v1902, %v1423
      %v1936 = vsel %vm1930, %v1903, %v1425
      %v1937 = vsel %vm1930, %v1904, %v1427
      %v1938 = vsel %vm1930, %v1905, %v1429
      %v1939 = vsel %vm1930, %v1906, %v1431
      %v1940 = vsel %vm1930, %v1907, %v1433
      %v1941 = vsel %vm1930, %v1908, %v1435
      %v1942 = vsel %vm1930, %v1909, %v1437
      %v1943 = vsel %vm1930, %v1910, %v1439
      %v1944 = vsel %vm1930, %v1911, %v1441
      %v1945 = vsel %vm1930, %v1912, %v1443
      %v1946 = vsel %vm1930, %v1913, %v1445
      %v1947 = vsel %vm1930, %v1914, %v1447
      %v1948 = vsel %vm1930, %v1915, %v1449
      %v1949 = vsel %vm1930, %v1916, %v1451
      %v1950 = vsel %vm1930, %v1917, %v1453
      %v1951 = vsel %vm1930, %v1918, %v1455
      %v1952 = vsel %vm1930, %v1919, %v1457
      %v1953 = vsel %vm1930, %v1920, %v1459
      %v1954 = vsel %vm1930, %v1921, %v1461
      %v1955 = vsel %vm1930, %v1922, %v1463
      %v1956 = vsel %vm1930, %v1923, %v1465
      %v1957 = vsel %vm1930, %v1924, %v1467
      %v1958 = vsel %vm1930, %v1925, %v1469
      %v1959 = vsel %vm1930, %v1926, %v1471
      %v1960 = vsel %vm1930, %v1927, %v1473
      %v1961 = vsel %vm1930, %v1928, %v1475
      %v1962 = vsel %vm1930, %v1929, %v1477
      %vm1963 = vcmask 228352
      %v1964 = vsel %vm1963, %v1931, %v1543
      %v1965 = vsel %vm1963, %v1932, %v1545
      %v1966 = vsel %vm1963, %v1933, %v1547
      %v1967 = vsel %vm1963, %v1934, %v1549
      %v1968 = vsel %vm1963, %v1935, %v1551
      %v1969 = vsel %vm1963, %v1936, %v1553
      %v1970 = vsel %vm1963, %v1937, %v1555
      %v1971 = vsel %vm1963, %v1938, %v1557
      %v1972 = vsel %vm1963, %v1939, %v1559
      %v1973 = vsel %vm1963, %v1940, %v1561
      %v1974 = vsel %vm1963, %v1941, %v1563
      %v1975 = vsel %vm1963, %v1942, %v1565
      %v1976 = vsel %vm1963, %v1943, %v1567
      %v1977 = vsel %vm1963, %v1944, %v1569
      %v1978 = vsel %vm1963, %v1945, %v1571
      %v1979 = vsel %vm1963, %v1946, %v1573
      %v1980 = vsel %vm1963, %v1947, %v1575
      %v1981 = vsel %vm1963, %v1948, %v1577
      %v1982 = vsel %vm1963, %v1949, %v1579
      %v1983 = vsel %vm1963, %v1950, %v1581
      %v1984 = vsel %vm1963, %v1951, %v1583
      %v1985 = vsel %vm1963, %v1952, %v1585
      %v1986 = vsel %vm1963, %v1953, %v1587
      %v1987 = vsel %vm1963, %v1954, %v1589
      %v1988 = vsel %vm1963, %v1955, %v1591
      %v1989 = vsel %vm1963, %v1956, %v1593
      %v1990 = vsel %vm1963, %v1957, %v1595
      %v1991 = vsel %vm1963, %v1958, %v1597
      %v1992 = vsel %vm1963, %v1959, %v1599
      %v1993 = vsel %vm1963, %v1960, %v1601
      %v1994 = vsel %vm1963, %v1961, %v1603
      %v1995 = vsel %vm1963, %v1962, %v1605
      %vm1996 = vcmask 261120
      %v1997 = vsel %vm1996, %v1964, %v1671
      %v1998 = vsel %vm1996, %v1965, %v1673
      %v1999 = vsel %vm1996, %v1966, %v1675
      %v2000 = vsel %vm1996, %v1967, %v1677
      %v2001 = vsel %vm1996, %v1968, %v1679
      %v2002 = vsel %vm1996, %v1969, %v1681
      %v2003 = vsel %vm1996, %v1970, %v1683
      %v2004 = vsel %vm1996, %v1971, %v1685
      %v2005 = vsel %vm1996, %v1972, %v1687
      %v2006 = vsel %vm1996, %v1973, %v1689
      %v2007 = vsel %vm1996, %v1974, %v1691
      %v2008 = vsel %vm1996, %v1975, %v1693
      %v2009 = vsel %vm1996, %v1976, %v1695
      %v2010 = vsel %vm1996, %v1977, %v1697
      %v2011 = vsel %vm1996, %v1978, %v1699
      %v2012 = vsel %vm1996, %v1979, %v1701
      %v2013 = vsel %vm1996, %v1980, %v1703
      %v2014 = vsel %vm1996, %v1981, %v1705
      %v2015 = vsel %vm1996, %v1982, %v1707
      %v2016 = vsel %vm1996, %v1983, %v1709
      %v2017 = vsel %vm1996, %v1984, %v1711
      %v2018 = vsel %vm1996, %v1985, %v1713
      %v2019 = vsel %vm1996, %v1986, %v1715
      %v2020 = vsel %vm1996, %v1987, %v1717
      %v2021 = vsel %vm1996, %v1988, %v1719
      %v2022 = vsel %vm1996, %v1989, %v1721
      %v2023 = vsel %vm1996, %v1990, %v1723
      %v2024 = vsel %vm1996, %v1991, %v1725
      %v2025 = vsel %vm1996, %v1992, %v1727
      %v2026 = vsel %vm1996, %v1993, %v1729
      %v2027 = vsel %vm1996, %v1994, %v1731
      %v2028 = vsel %vm1996, %v1995, %v1733
      %v2029 = vld [vmem:[%s3] sm:$0xff]
      %v2030 = vld [vmem:[%s3 + $0x8] sm:$0xff]
      %v2031 = vld [vmem:[%s3 + $0x10] sm:$0xff]
      %v2032 = vld [vmem:[%s3 + $0x18] sm:$0xff]
      %v2033 = vld [vmem:[%s3 + $0x20] sm:$0xf]
      %vm2034 = vcmask 293888
      %v2036 = vsel %vm2034, %v1997, 0
      %v2039 = vsel %vm2034, %v1998, 0
      %v2042 = vsel %vm2034, %v1999, 0
      %v2045 = vsel %vm2034, %v2000, 0
      %v2048 = vsel %vm2034, %v2001, 0
      %v2051 = vsel %vm2034, %v2002, 0
      %v2054 = vsel %vm2034, %v2003, 0
      %v2057 = vsel %vm2034, %v2004, 0
      %v2060 = vsel %vm2034, %v2005, 0
      %v2063 = vsel %vm2034, %v2006, 0
      %v2066 = vsel %vm2034, %v2007, 0
      %v2069 = vsel %vm2034, %v2008, 0
      %v2072 = vsel %vm2034, %v2009, 0
      %v2075 = vsel %vm2034, %v2010, 0
      %v2078 = vsel %vm2034, %v2011, 0
      %v2081 = vsel %vm2034, %v2012, 0
      %v2084 = vsel %vm2034, %v2013, 0
      %v2087 = vsel %vm2034, %v2014, 0
      %v2090 = vsel %vm2034, %v2015, 0
      %v2093 = vsel %vm2034, %v2016, 0
      %v2096 = vsel %vm2034, %v2017, 0
      %v2099 = vsel %vm2034, %v2018, 0
      %v2102 = vsel %vm2034, %v2019, 0
      %v2105 = vsel %vm2034, %v2020, 0
      %v2108 = vsel %vm2034, %v2021, 0
      %v2111 = vsel %vm2034, %v2022, 0
      %v2114 = vsel %vm2034, %v2023, 0
      %v2117 = vsel %vm2034, %v2024, 0
      %v2120 = vsel %vm2034, %v2025, 0
      %v2123 = vsel %vm2034, %v2026, 0
      %v2126 = vsel %vm2034, %v2027, 0
      %v2129 = vsel %vm2034, %v2028, 0
      %vm2131 = vcmask 1043456
      %v2133 = vsel %vm2131, %v2033, 0
      %2135 = vmatprep.subr.mxu0 0.0
      %2136 = vmatpush1.msra.mxu0 0.0
      %2137 = vmatprep.subr.mxu0 0.0
      %2138 = vmatpush1.msra.mxu0 0.0
      %2139 = vmatprep.subr.mxu0 0.0
      %2140 = vmatpush1.msra.mxu0 0.0
      %2141 = vmatprep.subr.mxu0 0.0
      %2142 = vmatpush1.msra.mxu0 0.0
      %2143 = vmatprep.subr.mxu0 0.0
      %2144 = vmatpush1.msra.mxu0 0.0
      %2145 = vmatprep.subr.mxu0 0.0
      %2146 = vmatpush1.msra.mxu0 0.0
      %2147 = vmatprep.subr.mxu0 0.0
      %2148 = vmatpush1.msra.mxu0 0.0
      %2149 = vmatprep.subr.mxu0 0.0
      %2150 = vmatpush1.msra.mxu0 0.0
      %2151 = vmatprep.subr.mxu0 0.0
      %2152 = vmatpush1.msra.mxu0 0.0
      %2153 = vmatprep.subr.mxu0 0.0
      %2154 = vmatpush1.msra.mxu0 0.0
      %2155 = vmatprep.subr.mxu0 0.0
      %2156 = vmatpush1.msra.mxu0 0.0
      %2157 = vmatprep.subr.mxu0 0.0
      %2158 = vmatpush1.msra.mxu0 %v2133
      %2159 = vmatprep.subr.mxu0 0.0
      %2160 = vmatpush1.msra.mxu0 %v2032
      %2161 = vmatprep.subr.mxu0 0.0
      %2162 = vmatpush1.msra.mxu0 %v2031
      %2163 = vmatprep.subr.mxu0 0.0
      %2164 = vmatpush1.msra.mxu0 %v2030
      %2165 = vmatprep.subr.mxu0 0.0
      %2166 = vmatpush1.msra.mxu0 %v2029
      %2167 = vmatprep.subr.mxu0 0.0
      %2168 = vmatpush2.msra.mxu0 0.0
      %2169 = vmatprep.subr.mxu0 0.0
      %2170 = vmatpush2.msra.mxu0 0.0
      %2171 = vmatprep.subr.mxu0 0.0
      %2172 = vmatpush2.msra.mxu0 0.0
      %2173 = vmatprep.subr.mxu0 0.0
      %2174 = vmatpush2.msra.mxu0 0.0
      %2175 = vmatprep.subr.mxu0 0.0
      %2176 = vmatpush2.msra.mxu0 0.0
      %2177 = vmatprep.subr.mxu0 0.0
      %2178 = vmatpush2.msra.mxu0 0.0
      %2179 = vmatprep.subr.mxu0 0.0
      %2180 = vmatpush2.msra.mxu0 0.0
      %2181 = vmatprep.subr.mxu0 0.0
      %2182 = vmatpush2.msra.mxu0 0.0
      %2183 = vmatprep.subr.mxu0 0.0
      %2184 = vmatpush2.msra.mxu0 0.0
      %2185 = vmatprep.subr.mxu0 0.0
      %2186 = vmatpush2.msra.mxu0 0.0
      %2187 = vmatprep.subr.mxu0 0.0
      %2188 = vmatpush2.msra.mxu0 0.0
      %2189 = vmatprep.subr.mxu0 0.0
      %2190 = vmatpush2.msra.mxu0 0.0
      %2191 = vmatprep.subr.mxu0 0.0
      %2192 = vmatpush2.msra.mxu0 0.0
      %2193 = vmatprep.subr.mxu0 0.0
      %2194 = vmatpush2.msra.mxu0 0.0
      %2195 = vmatprep.subr.mxu0 0.0
      %2196 = vmatpush2.msra.mxu0 0.0
      %2197 = vmatprep.subr.mxu0 0.0
      %2198 = vmatpush2.msra.mxu0 0.0
      %2199 = vmatprep.mubr.f32.mxu0 0.0
      %2200 = vmatmul.mubr.f32.gmra.mxu0 %v2036
      %v2201 = vpop.f32.mrf.mxu0
      %v2202 = vadd.f32 0.0, %v2201
      %v2203 = vpop.f32.mrf.mxu0
      %2204 = vmatprep.mubr.f32.mxu0 0.0
      %2205 = vmatmul.mubr.f32.gmra.mxu0 %v2039
      %v2206 = vpop.f32.mrf.mxu0
      %v2207 = vadd.f32 0.0, %v2206
      %v2208 = vpop.f32.mrf.mxu0
      %2209 = vmatprep.mubr.f32.mxu0 0.0
      %2210 = vmatmul.mubr.f32.gmra.mxu0 %v2042
      %v2211 = vpop.f32.mrf.mxu0
      %v2212 = vadd.f32 0.0, %v2211
      %v2213 = vpop.f32.mrf.mxu0
      %2214 = vmatprep.mubr.f32.mxu0 0.0
      %2215 = vmatmul.mubr.f32.gmra.mxu0 %v2045
      %v2216 = vpop.f32.mrf.mxu0
      %v2217 = vadd.f32 0.0, %v2216
      %v2218 = vpop.f32.mrf.mxu0
      %2219 = vmatprep.mubr.f32.mxu0 0.0
      %2220 = vmatmul.mubr.f32.gmra.mxu0 %v2048
      %v2221 = vpop.f32.mrf.mxu0
      %v2222 = vadd.f32 0.0, %v2221
      %v2223 = vpop.f32.mrf.mxu0
      %2224 = vmatprep.mubr.f32.mxu0 0.0
      %2225 = vmatmul.mubr.f32.gmra.mxu0 %v2051
      %v2226 = vpop.f32.mrf.mxu0
      %v2227 = vadd.f32 0.0, %v2226
      %v2228 = vpop.f32.mrf.mxu0
      %2229 = vmatprep.mubr.f32.mxu0 0.0
      %2230 = vmatmul.mubr.f32.gmra.mxu0 %v2054
      %v2231 = vpop.f32.mrf.mxu0
      %v2232 = vadd.f32 0.0, %v2231
      %v2233 = vpop.f32.mrf.mxu0
      %2234 = vmatprep.mubr.f32.mxu0 0.0
      %2235 = vmatmul.mubr.f32.gmra.mxu0 %v2057
      %v2236 = vpop.f32.mrf.mxu0
      %v2237 = vadd.f32 0.0, %v2236
      %v2238 = vpop.f32.mrf.mxu0
      %2239 = vmatprep.mubr.f32.mxu0 0.0
      %2240 = vmatmul.mubr.f32.gmra.mxu0 %v2060
      %v2241 = vpop.f32.mrf.mxu0
      %v2242 = vadd.f32 0.0, %v2241
      %v2243 = vpop.f32.mrf.mxu0
      %2244 = vmatprep.mubr.f32.mxu0 0.0
      %2245 = vmatmul.mubr.f32.gmra.mxu0 %v2063
      %v2246 = vpop.f32.mrf.mxu0
      %v2247 = vadd.f32 0.0, %v2246
      %v2248 = vpop.f32.mrf.mxu0
      %2249 = vmatprep.mubr.f32.mxu0 0.0
      %2250 = vmatmul.mubr.f32.gmra.mxu0 %v2066
      %v2251 = vpop.f32.mrf.mxu0
      %v2252 = vadd.f32 0.0, %v2251
      %v2253 = vpop.f32.mrf.mxu0
      %2254 = vmatprep.mubr.f32.mxu0 0.0
      %2255 = vmatmul.mubr.f32.gmra.mxu0 %v2069
      %v2256 = vpop.f32.mrf.mxu0
      %v2257 = vadd.f32 0.0, %v2256
      %v2258 = vpop.f32.mrf.mxu0
      %2259 = vmatprep.mubr.f32.mxu0 0.0
      %2260 = vmatmul.mubr.f32.gmra.mxu0 %v2072
      %v2261 = vpop.f32.mrf.mxu0
      %v2262 = vadd.f32 0.0, %v2261
      %v2263 = vpop.f32.mrf.mxu0
      %2264 = vmatprep.mubr.f32.mxu0 0.0
      %2265 = vmatmul.mubr.f32.gmra.mxu0 %v2075
      %v2266 = vpop.f32.mrf.mxu0
      %v2267 = vadd.f32 0.0, %v2266
      %v2268 = vpop.f32.mrf.mxu0
      %2269 = vmatprep.mubr.f32.mxu0 0.0
      %2270 = vmatmul.mubr.f32.gmra.mxu0 %v2078
      %v2271 = vpop.f32.mrf.mxu0
      %v2272 = vadd.f32 0.0, %v2271
      %v2273 = vpop.f32.mrf.mxu0
      %2274 = vmatprep.mubr.f32.mxu0 0.0
      %2275 = vmatmul.mubr.f32.gmra.mxu0 %v2081
      %v2276 = vpop.f32.mrf.mxu0
      %v2277 = vadd.f32 0.0, %v2276
      %v2278 = vpop.f32.mrf.mxu0
      %2279 = vmatprep.mubr.f32.mxu0 0.0
      %2280 = vmatmul.mubr.f32.gmra.mxu0 %v2084
      %v2281 = vpop.f32.mrf.mxu0
      %v2282 = vadd.f32 0.0, %v2281
      %v2283 = vpop.f32.mrf.mxu0
      %2284 = vmatprep.mubr.f32.mxu0 0.0
      %2285 = vmatmul.mubr.f32.gmra.mxu0 %v2087
      %v2286 = vpop.f32.mrf.mxu0
      %v2287 = vadd.f32 0.0, %v2286
      %v2288 = vpop.f32.mrf.mxu0
      %2289 = vmatprep.mubr.f32.mxu0 0.0
      %2290 = vmatmul.mubr.f32.gmra.mxu0 %v2090
      %v2291 = vpop.f32.mrf.mxu0
      %v2292 = vadd.f32 0.0, %v2291
      %v2293 = vpop.f32.mrf.mxu0
      %2294 = vmatprep.mubr.f32.mxu0 0.0
      %2295 = vmatmul.mubr.f32.gmra.mxu0 %v2093
      %v2296 = vpop.f32.mrf.mxu0
      %v2297 = vadd.f32 0.0, %v2296
      %v2298 = vpop.f32.mrf.mxu0
      %2299 = vmatprep.mubr.f32.mxu0 0.0
      %2300 = vmatmul.mubr.f32.gmra.mxu0 %v2096
      %v2301 = vpop.f32.mrf.mxu0
      %v2302 = vadd.f32 0.0, %v2301
      %v2303 = vpop.f32.mrf.mxu0
      %2304 = vmatprep.mubr.f32.mxu0 0.0
      %2305 = vmatmul.mubr.f32.gmra.mxu0 %v2099
      %v2306 = vpop.f32.mrf.mxu0
      %v2307 = vadd.f32 0.0, %v2306
      %v2308 = vpop.f32.mrf.mxu0
      %2309 = vmatprep.mubr.f32.mxu0 0.0
      %2310 = vmatmul.mubr.f32.gmra.mxu0 %v2102
      %v2311 = vpop.f32.mrf.mxu0
      %v2312 = vadd.f32 0.0, %v2311
      %v2313 = vpop.f32.mrf.mxu0
      %2314 = vmatprep.mubr.f32.mxu0 0.0
      %2315 = vmatmul.mubr.f32.gmra.mxu0 %v2105
      %v2316 = vpop.f32.mrf.mxu0
      %v2317 = vadd.f32 0.0, %v2316
      %v2318 = vpop.f32.mrf.mxu0
      %2319 = vmatprep.mubr.f32.mxu0 0.0
      %2320 = vmatmul.mubr.f32.gmra.mxu0 %v2108
      %v2321 = vpop.f32.mrf.mxu0
      %v2322 = vadd.f32 0.0, %v2321
      %v2323 = vpop.f32.mrf.mxu0
      %2324 = vmatprep.mubr.f32.mxu0 0.0
      %2325 = vmatmul.mubr.f32.gmra.mxu0 %v2111
      %v2326 = vpop.f32.mrf.mxu0
      %v2327 = vadd.f32 0.0, %v2326
      %v2328 = vpop.f32.mrf.mxu0
      %2329 = vmatprep.mubr.f32.mxu0 0.0
      %2330 = vmatmul.mubr.f32.gmra.mxu0 %v2114
      %v2331 = vpop.f32.mrf.mxu0
      %v2332 = vadd.f32 0.0, %v2331
      %v2333 = vpop.f32.mrf.mxu0
      %2334 = vmatprep.mubr.f32.mxu0 0.0
      %2335 = vmatmul.mubr.f32.gmra.mxu0 %v2117
      %v2336 = vpop.f32.mrf.mxu0
      %v2337 = vadd.f32 0.0, %v2336
      %v2338 = vpop.f32.mrf.mxu0
      %2339 = vmatprep.mubr.f32.mxu0 0.0
      %2340 = vmatmul.mubr.f32.gmra.mxu0 %v2120
      %v2341 = vpop.f32.mrf.mxu0
      %v2342 = vadd.f32 0.0, %v2341
      %v2343 = vpop.f32.mrf.mxu0
      %2344 = vmatprep.mubr.f32.mxu0 0.0
      %2345 = vmatmul.mubr.f32.gmra.mxu0 %v2123
      %v2346 = vpop.f32.mrf.mxu0
      %v2347 = vadd.f32 0.0, %v2346
      %v2348 = vpop.f32.mrf.mxu0
      %2349 = vmatprep.mubr.f32.mxu0 0.0
      %2350 = vmatmul.mubr.f32.gmra.mxu0 %v2126
      %v2351 = vpop.f32.mrf.mxu0
      %v2352 = vadd.f32 0.0, %v2351
      %v2353 = vpop.f32.mrf.mxu0
      %2354 = vmatprep.mubr.f32.mxu0 0.0
      %2355 = vmatmul.mubr.f32.gmra.mxu0 %v2129
      %v2356 = vpop.f32.mrf.mxu0
      %v2357 = vadd.f32 0.0, %v2356
      %v2358 = vpop.f32.mrf.mxu0
      %2359 = vdwg.mxu0
      %2360 = vst.msk [vmem:[%s231] sm:$0xff] %vm378, %v2202
      %2361 = vst.msk [vmem:[%s231 + $0x8] sm:$0xff] %vm378, %v2207
      %2362 = vst.msk [vmem:[%s231 + $0x10] sm:$0xff] %vm378, %v2212
      %2363 = vst.msk [vmem:[%s231 + $0x18] sm:$0xff] %vm378, %v2217
      %2364 = vst.msk [vmem:[%s231 + $0x20] sm:$0xff] %vm378, %v2222
      %2365 = vst.msk [vmem:[%s231 + $0x28] sm:$0xff] %vm378, %v2227
      %2366 = vst.msk [vmem:[%s231 + $0x30] sm:$0xff] %vm378, %v2232
      %2367 = vst.msk [vmem:[%s231 + $0x38] sm:$0xff] %vm378, %v2237
      %2368 = vst.msk [vmem:[%s231 + $0x40] sm:$0xff] %vm378, %v2242
      %2369 = vst.msk [vmem:[%s231 + $0x48] sm:$0xff] %vm378, %v2247
      %2370 = vst.msk [vmem:[%s231 + $0x50] sm:$0xff] %vm378, %v2252
      %2371 = vst.msk [vmem:[%s231 + $0x58] sm:$0xff] %vm378, %v2257
      %2372 = vst.msk [vmem:[%s231 + $0x60] sm:$0xff] %vm378, %v2262
      %2373 = vst.msk [vmem:[%s231 + $0x68] sm:$0xff] %vm378, %v2267
      %2374 = vst.msk [vmem:[%s231 + $0x70] sm:$0xff] %vm378, %v2272
      %2375 = vst.msk [vmem:[%s231 + $0x78] sm:$0xff] %vm378, %v2277
      %2376 = vst.msk [vmem:[%s231 + $0x80] sm:$0xff] %vm378, %v2282
      %2377 = vst.msk [vmem:[%s231 + $0x88] sm:$0xff] %vm378, %v2287
      %2378 = vst.msk [vmem:[%s231 + $0x90] sm:$0xff] %vm378, %v2292
      %2379 = vst.msk [vmem:[%s231 + $0x98] sm:$0xff] %vm378, %v2297
      %2380 = vst.msk [vmem:[%s231 + $0xa0] sm:$0xff] %vm378, %v2302
      %2381 = vst.msk [vmem:[%s231 + $0xa8] sm:$0xff] %vm378, %v2307
      %2382 = vst.msk [vmem:[%s231 + $0xb0] sm:$0xff] %vm378, %v2312
      %2383 = vst.msk [vmem:[%s231 + $0xb8] sm:$0xff] %vm378, %v2317
      %2384 = vst.msk [vmem:[%s231 + $0xc0] sm:$0xff] %vm378, %v2322
      %2385 = vst.msk [vmem:[%s231 + $0xc8] sm:$0xff] %vm378, %v2327
      %2386 = vst.msk [vmem:[%s231 + $0xd0] sm:$0xff] %vm378, %v2332
      %2387 = vst.msk [vmem:[%s231 + $0xd8] sm:$0xff] %vm378, %v2337
      %2388 = vst.msk [vmem:[%s231 + $0xe0] sm:$0xff] %vm378, %v2342
      %2389 = vst.msk [vmem:[%s231 + $0xe8] sm:$0xff] %vm378, %v2347
      %2390 = vst.msk [vmem:[%s231 + $0xf0] sm:$0xff] %vm378, %v2352
      %2391 = vst.msk [vmem:[%s231 + $0xf8] sm:$0xff] %vm378, %v2357
      %v2392 = vsel %vm378, %v2202, 0.0
      %v2393 = vsel %vm378, %v2207, 0.0
      %v2394 = vadd.f32 %v2392, %v2393
      %v2395 = vsel %vm378, %v2212, 0.0
      %v2396 = vadd.f32 %v2394, %v2395
      %v2397 = vsel %vm378, %v2217, 0.0
      %v2398 = vadd.f32 %v2396, %v2397
      %v2399 = vsel %vm378, %v2222, 0.0
      %v2400 = vadd.f32 %v2398, %v2399
      %v2401 = vsel %vm378, %v2227, 0.0
      %v2402 = vadd.f32 %v2400, %v2401
      %v2403 = vsel %vm378, %v2232, 0.0
      %v2404 = vadd.f32 %v2402, %v2403
      %v2405 = vsel %vm378, %v2237, 0.0
      %v2406 = vadd.f32 %v2404, %v2405
      %v2407 = vsel %vm378, %v2242, 0.0
      %v2408 = vadd.f32 %v2406, %v2407
      %v2409 = vsel %vm378, %v2247, 0.0
      %v2410 = vadd.f32 %v2408, %v2409
      %v2411 = vsel %vm378, %v2252, 0.0
      %v2412 = vadd.f32 %v2410, %v2411
      %v2413 = vsel %vm378, %v2257, 0.0
      %v2414 = vadd.f32 %v2412, %v2413
      %v2415 = vsel %vm378, %v2262, 0.0
      %v2416 = vadd.f32 %v2414, %v2415
      %v2417 = vsel %vm378, %v2267, 0.0
      %v2418 = vadd.f32 %v2416, %v2417
      %v2419 = vsel %vm378, %v2272, 0.0
      %v2420 = vadd.f32 %v2418, %v2419
      %v2421 = vsel %vm378, %v2277, 0.0
      %v2422 = vadd.f32 %v2420, %v2421
      %v2423 = vsel %vm378, %v2282, 0.0
      %v2424 = vadd.f32 %v2422, %v2423
      %v2425 = vsel %vm378, %v2287, 0.0
      %v2426 = vadd.f32 %v2424, %v2425
      %v2427 = vsel %vm378, %v2292, 0.0
      %v2428 = vadd.f32 %v2426, %v2427
      %v2429 = vsel %vm378, %v2297, 0.0
      %v2430 = vadd.f32 %v2428, %v2429
      %v2431 = vsel %vm378, %v2302, 0.0
      %v2432 = vadd.f32 %v2430, %v2431
      %v2433 = vsel %vm378, %v2307, 0.0
      %v2434 = vadd.f32 %v2432, %v2433
      %v2435 = vsel %vm378, %v2312, 0.0
      %v2436 = vadd.f32 %v2434, %v2435
      %v2437 = vsel %vm378, %v2317, 0.0
      %v2438 = vadd.f32 %v2436, %v2437
      %v2439 = vsel %vm378, %v2322, 0.0
      %v2440 = vadd.f32 %v2438, %v2439
      %v2441 = vsel %vm378, %v2327, 0.0
      %v2442 = vadd.f32 %v2440, %v2441
      %v2443 = vsel %vm378, %v2332, 0.0
      %v2444 = vadd.f32 %v2442, %v2443
      %v2445 = vsel %vm378, %v2337, 0.0
      %v2446 = vadd.f32 %v2444, %v2445
      %v2447 = vsel %vm378, %v2342, 0.0
      %v2448 = vadd.f32 %v2446, %v2447
      %v2449 = vsel %vm378, %v2347, 0.0
      %v2450 = vadd.f32 %v2448, %v2449
      %v2451 = vsel %vm378, %v2352, 0.0
      %v2452 = vadd.f32 %v2450, %v2451
      %v2453 = vsel %vm378, %v2357, 0.0
      %v2454 = vadd.f32 %v2452, %v2453
      %v2455 = vrot.slane %v2454, 4
      %v2456 = vadd.f32 %v2454, %v2455
      %v2457 = vrot.slane %v2456, 2
      %v2458 = vadd.f32 %v2456, %v2457
      %v2459 = vrot.slane %v2458, 1
      %v2460 = vadd.f32 %v2458, %v2459
      %v2461 = vmul.f32 %v2202, %v2202
      %v2462 = vmul.f32 %v2207, %v2207
      %v2463 = vmul.f32 %v2212, %v2212
      %v2464 = vmul.f32 %v2217, %v2217
      %v2465 = vmul.f32 %v2222, %v2222
      %v2466 = vmul.f32 %v2227, %v2227
      %v2467 = vmul.f32 %v2232, %v2232
      %v2468 = vmul.f32 %v2237, %v2237
      %v2469 = vmul.f32 %v2242, %v2242
      %v2470 = vmul.f32 %v2247, %v2247
      %v2471 = vmul.f32 %v2252, %v2252
      %v2472 = vmul.f32 %v2257, %v2257
      %v2473 = vmul.f32 %v2262, %v2262
      %v2474 = vmul.f32 %v2267, %v2267
      %v2475 = vmul.f32 %v2272, %v2272
      %v2476 = vmul.f32 %v2277, %v2277
      %v2477 = vmul.f32 %v2282, %v2282
      %v2478 = vmul.f32 %v2287, %v2287
      %v2479 = vmul.f32 %v2292, %v2292
      %v2480 = vmul.f32 %v2297, %v2297
      %v2481 = vmul.f32 %v2302, %v2302
      %v2482 = vmul.f32 %v2307, %v2307
      %v2483 = vmul.f32 %v2312, %v2312
      %v2484 = vmul.f32 %v2317, %v2317
      %v2485 = vmul.f32 %v2322, %v2322
      %v2486 = vmul.f32 %v2327, %v2327
      %v2487 = vmul.f32 %v2332, %v2332
      %v2488 = vmul.f32 %v2337, %v2337
      %v2489 = vmul.f32 %v2342, %v2342
      %v2490 = vmul.f32 %v2347, %v2347
      %v2491 = vmul.f32 %v2352, %v2352
      %v2492 = vmul.f32 %v2357, %v2357
      %v2493 = vsel %vm378, %v2461, 0.0
      %v2494 = vsel %vm378, %v2462, 0.0
      %v2495 = vadd.f32 %v2493, %v2494
      %v2496 = vsel %vm378, %v2463, 0.0
      %v2497 = vadd.f32 %v2495, %v2496
      %v2498 = vsel %vm378, %v2464, 0.0
      %v2499 = vadd.f32 %v2497, %v2498
      %v2500 = vsel %vm378, %v2465, 0.0
      %v2501 = vadd.f32 %v2499, %v2500
      %v2502 = vsel %vm378, %v2466, 0.0
      %v2503 = vadd.f32 %v2501, %v2502
      %v2504 = vsel %vm378, %v2467, 0.0
      %v2505 = vadd.f32 %v2503, %v2504
      %v2506 = vsel %vm378, %v2468, 0.0
      %v2507 = vadd.f32 %v2505, %v2506
      %v2508 = vsel %vm378, %v2469, 0.0
      %v2509 = vadd.f32 %v2507, %v2508
      %v2510 = vsel %vm378, %v2470, 0.0
      %v2511 = vadd.f32 %v2509, %v2510
      %v2512 = vsel %vm378, %v2471, 0.0
      %v2513 = vadd.f32 %v2511, %v2512
      %v2514 = vsel %vm378, %v2472, 0.0
      %v2515 = vadd.f32 %v2513, %v2514
      %v2516 = vsel %vm378, %v2473, 0.0
      %v2517 = vadd.f32 %v2515, %v2516
      %v2518 = vsel %vm378, %v2474, 0.0
      %v2519 = vadd.f32 %v2517, %v2518
      %v2520 = vsel %vm378, %v2475, 0.0
      %v2521 = vadd.f32 %v2519, %v2520
      %v2522 = vsel %vm378, %v2476, 0.0
      %v2523 = vadd.f32 %v2521, %v2522
      %v2524 = vsel %vm378, %v2477, 0.0
      %v2525 = vadd.f32 %v2523, %v2524
      %v2526 = vsel %vm378, %v2478, 0.0
      %v2527 = vadd.f32 %v2525, %v2526
      %v2528 = vsel %vm378, %v2479, 0.0
      %v2529 = vadd.f32 %v2527, %v2528
      %v2530 = vsel %vm378, %v2480, 0.0
      %v2531 = vadd.f32 %v2529, %v2530
      %v2532 = vsel %vm378, %v2481, 0.0
      %v2533 = vadd.f32 %v2531, %v2532
      %v2534 = vsel %vm378, %v2482, 0.0
      %v2535 = vadd.f32 %v2533, %v2534
      %v2536 = vsel %vm378, %v2483, 0.0
      %v2537 = vadd.f32 %v2535, %v2536
      %v2538 = vsel %vm378, %v2484, 0.0
      %v2539 = vadd.f32 %v2537, %v2538
      %v2540 = vsel %vm378, %v2485, 0.0
      %v2541 = vadd.f32 %v2539, %v2540
      %v2542 = vsel %vm378, %v2486, 0.0
      %v2543 = vadd.f32 %v2541, %v2542
      %v2544 = vsel %vm378, %v2487, 0.0
      %v2545 = vadd.f32 %v2543, %v2544
      %v2546 = vsel %vm378, %v2488, 0.0
      %v2547 = vadd.f32 %v2545, %v2546
      %v2548 = vsel %vm378, %v2489, 0.0
      %v2549 = vadd.f32 %v2547, %v2548
      %v2550 = vsel %vm378, %v2490, 0.0
      %v2551 = vadd.f32 %v2549, %v2550
      %v2552 = vsel %vm378, %v2491, 0.0
      %v2553 = vadd.f32 %v2551, %v2552
      %v2554 = vsel %vm378, %v2492, 0.0
      %v2555 = vadd.f32 %v2553, %v2554
      %v2556 = vrot.slane %v2555, 4
      %v2557 = vadd.f32 %v2555, %v2556
      %v2558 = vrot.slane %v2557, 2
      %v2559 = vadd.f32 %v2557, %v2558
      %v2560 = vrot.slane %v2559, 1
      %v2561 = vadd.f32 %v2559, %v2560
      %vm2562 = vcmask 1040384
      %v2563 = vsel %vm2562, %v2460, %v2561
      %2564 = vst.msk [vmem:[%s235] sm:$0x3] %vm381, %v2563
      %p2565 = scmp.lt.s32.totalorder %s17, 1
      %s2566 = scalar_select %p2565, %s17, 1
      %s2567 = smul.addr %s2566, 32
      %s2568 = smul.addr %s2567, 8
      %s2569 = scalar_lea.vmem %s4, %s2568
      %p2570 = scmp.lt.s32.totalorder %s17, 1
      %s2571 = scalar_select %p2570, %s17, 1
      %s2572 = smul.addr %s2571, 2
      %s2573 = scalar_lea.vmem %s5, %s2572
      // Predicated region
      $region37: #{basic_block.4} parent=35 // pred_check
        %p2574 = pneg %p124
      $region38: #{basic_block.4} parent=35 // pred_check_branch
        %2576 = sbr.rel (%p2574) target = $region40
      $region39: #{basic_block.4} parent=35 // pred_region
        _
      $region40: #{basic_block.4} parent=35 // pred_fallthru
        _
      // Predicated region
      $region41: #{basic_block.4} parent=35 // pred_check
        %p2577 = pneg %p150
      $region42: #{basic_block.4} parent=35 // pred_check_branch
        %2579 = sbr.rel (%p2577) target = $region44
      $region43: #{basic_block.4} parent=35 // pred_region
        _
      $region44: #{basic_block.4} parent=35 // pred_fallthru
        _
    $region36: #{basic_block.4} parent=5 // pred_fallthru
      _
    %p2580 = scmp.le.s32.totalorder 2, %s12
    // Predicated region
    $region45: #{basic_block.4} parent=5 // pred_check
      %p2581 = pneg %p2580
    $region46: #{basic_block.4} parent=5 // pred_check_branch
      %2583 = sbr.rel (%p2581) target = $region48
    $region47: #{basic_block.4} parent=5 // pred_region
      %s2584 = ssub.s32 %s12, 2
      // Predicated region
      $region49: #{basic_block.4} parent=47 // pred_check
        %p2585 = pneg %p130
      $region50: #{basic_block.4} parent=47 // pred_check_branch
        %2587 = sbr.rel (%p2585) target = $region52
      $region51: #{basic_block.4} parent=47 // pred_region
        %p2588 = scmp.lt.s32.totalorder %s18, 1
        %s2589 = scalar_select %p2588, %s18, 1
        %s2590 = smul.addr %s2589, 32
        %s2591 = smul.addr %s2590, 8
        %s2592 = scalar_lea.vmem %s4, %s2591
      $region52: #{basic_block.4} parent=47 // pred_fallthru
        _
      // Predicated region
      $region53: #{basic_block.4} parent=47 // pred_check
        %p2593 = pneg %p156
      $region54: #{basic_block.4} parent=47 // pred_check_branch
        %2595 = sbr.rel (%p2593) target = $region56
      $region55: #{basic_block.4} parent=47 // pred_region
        %p2596 = scmp.lt.s32.totalorder %s18, 1
        %s2597 = scalar_select %p2596, %s18, 1
        %s2598 = smul.addr %s2597, 2
        %s2599 = scalar_lea.vmem %s5, %s2598
      $region56: #{basic_block.4} parent=47 // pred_fallthru
        _
    $region48: #{basic_block.4} parent=5 // pred_fallthru
      _
  $region6: #{basic_block.4} parent=0 // loop_footer
    %s16 = sadd.s32 1, %s12
  $region7: #{basic_block.4} parent=0 // loop_footer_branch
    %11 = sbr.rel target = $region3
  $region8: #{basic_block.4} parent=0 // loop_exit
    _

</llo_original>
